<compile_context>
chip_gen: v7x
topology: tpu7x:2x2x1
jax: 0.10.0
libtpu: 0.0.40
codegen_flags: <defaults>
</compile_context>

<pallas_src>
import math
import jax
import jax.numpy as jnp
from jax.experimental import pallas as pl
from jax.experimental.pallas import tpu as pltpu

LN_EPS = 1e-5          # PyTorch TransformerEncoderLayer layer_norm_eps default
NEG_BIG = -1e30        # additive mask value (underflows to exactly 0 after exp)

_W_NAMES = ("wq", "wk", "wv", "bq", "bk", "bv", "wo", "bo",
            "ln1w", "ln1b", "w1", "b1", "w2", "b2", "ln2w", "ln2b")
_BF16_W = ("wq", "wk", "wv", "wo", "w1", "w2")   # matmul weights stored bf16


# --------------------------------------------------------------------------
# Shared in-kernel body: one post-norm encoder layer (nhead=1) on [B, S, D].
# Matmul weights are bf16 (pre-transposed); biases / LN params are f32.
# bias: [B, S, S] additive attention mask.  Returns [B, S, D] f32.
# --------------------------------------------------------------------------
def _encoder_body(x, bias, wq, wk, wv, bq, bk, bv, wo, bo,
                  ln1w, ln1b, w1, b1, w2, b2, ln2w, ln2b):
    B, S, D = x.shape
    scale = 1.0 / math.sqrt(D)            # compile-time constant, folded into q

    x2 = x.reshape(B * S, D)              # fuse batch into one MXU matmul (M=B*S)
    xb = x2.astype(jnp.bfloat16)

    q = jnp.dot(xb, wq, preferred_element_type=jnp.float32) + bq
    k = jnp.dot(xb, wk, preferred_element_type=jnp.float32) + bk
    v = jnp.dot(xb, wv, preferred_element_type=jnp.float32) + bv

    qb = (q * scale).astype(jnp.bfloat16).reshape(B, S, D)
    kb = k.astype(jnp.bfloat16).reshape(B, S, D)
    vb = v.astype(jnp.bfloat16).reshape(B, S, D)

    # --- single-head self-attention (batched over B) ---
    s = jnp.einsum('bqd,bkd->bqk', qb, kb,
                   preferred_element_type=jnp.float32) + bias          # [B,S,S]
    m = jnp.max(s, axis=-1, keepdims=True)
    p = jnp.exp(s - m)
    inv = pl.reciprocal(jnp.sum(p, axis=-1, keepdims=True), approx=True)
    attn = (p * inv).astype(jnp.bfloat16)
    ctx = jnp.einsum('bqk,bkd->bqd', attn, vb,
                     preferred_element_type=jnp.float32)                # [B,S,D]
    ctx = ctx.reshape(B * S, D).astype(jnp.bfloat16)
    attn_out = jnp.dot(ctx, wo, preferred_element_type=jnp.float32) + bo

    # --- residual + LayerNorm1 (post-norm, f32) ---
    h = x2 + attn_out
    mu = jnp.mean(h, axis=-1, keepdims=True)
    var = jnp.mean((h - mu) ** 2, axis=-1, keepdims=True)
    h = (h - mu) * jax.lax.rsqrt(var + LN_EPS) * ln1w + ln1b

    # --- feed-forward: linear -> ReLU -> linear (bf16 matmuls, f32 accum) ---
    hb = h.astype(jnp.bfloat16)
    ff = jnp.dot(hb, w1, preferred_element_type=jnp.float32) + b1
    ff = jnp.maximum(ff, 0.0).astype(jnp.bfloat16)
    ff = jnp.dot(ff, w2, preferred_element_type=jnp.float32) + b2

    # --- residual + LayerNorm2 ---
    h2 = h + ff
    mu2 = jnp.mean(h2, axis=-1, keepdims=True)
    var2 = jnp.mean((h2 - mu2) ** 2, axis=-1, keepdims=True)
    out = (h2 - mu2) * jax.lax.rsqrt(var2 + LN_EPS) * ln2w + ln2b
    return out.reshape(B, S, D)


# --------------------------------------------------------------------------
# Kernel 1: pid / title / desc encoders.  grid=(3,) over stacked weights;
# each grid step processes the FULL batch for one encoder.
# --------------------------------------------------------------------------
def _enc3_kernel(x_ref, srcmask_ref, padadd_ref, *rest):
    *w_refs, out_ref = rest
    x = x_ref[...]                                              # [B, S, D]
    # rebuild the additive attention bias in-kernel (no [B,S,S] HBM tensor)
    bias = srcmask_ref[...][None, :, :] + padadd_ref[...][:, None, :]
    weights = [r[...] for r in w_refs]
    out_ref[...] = _encoder_body(x, bias, *weights)


def run_parallel_encoders(x_stack, src_mask, pad_add, stacked):
    """x_stack: [3, B, S, D] f32; stacked: dict of [3, ...] weight stacks."""
    E, B, S, D = x_stack.shape
    w_args = [stacked[n] for n in _W_NAMES]

    in_specs = [
        pl.BlockSpec((None, B, S, D), lambda e: (e, 0, 0, 0)),   # x (leading dim squeezed)
        pl.BlockSpec((S, S), lambda e: (0, 0)),                  # shared src_mask
        pl.BlockSpec((B, S), lambda e: (0, 0)),                  # additive pad term
    ]
    for w in w_args:
        in_specs.append(pl.BlockSpec((None,) + w.shape[1:], lambda e: (e, 0, 0)))

    return pl.pallas_call(
        _enc3_kernel,
        out_shape=jax.ShapeDtypeStruct((E, B, S, D), jnp.float32),
        grid=(E,),
        in_specs=in_specs,
        out_specs=pl.BlockSpec((None, B, S, D), lambda e: (e, 0, 0, 0)),
        compiler_params=pltpu.CompilerParams(
            dimension_semantics=("parallel",)),   # 3 independent encoders -> megacore
    )(x_stack, src_mask, pad_add, *w_args)


# --------------------------------------------------------------------------
# Kernel 2: agg encoder (last token only) + lin_out, with the scores matmul
# tiled over the vocab axis N on the grid.  The [B, H] hidden is computed once
# (grid step 0) and cached in VMEM scratch; each grid step emits one lane-dense
# [B, tn] tile of  scores = hid @ emb^T  (dot_general on the untransposed
# embedding -- no host-side emb.T).
# --------------------------------------------------------------------------
def _agg_scores_kernel(x_ref, srcmask_ref, padadd_ref,
                       wq_ref, wk_ref, wv_ref, bq_ref, bk_ref, bv_ref,
                       wo_ref, bo_ref, ln1w_ref, ln1b_ref,
                       w1_ref, b1_ref, w2_ref, b2_ref, ln2w_ref, ln2b_ref,
                       linw_ref, linb_ref, emb_ref, out_ref, hid_ref):
    j = pl.program_id(0)

    @pl.when(j == 0)
    def _():
        x = x_ref[...]                                          # [B, S, D], D = 3H
        B, S, D = x.shape
        scale = 1.0 / math.sqrt(D)

        x2 = x.reshape(B * S, D)
        xb = x2.astype(jnp.bfloat16)
        x_last = x[:, S - 1, :]                                 # [B, D]
        xlb = x_last.astype(jnp.bfloat16)

        # k / v over all positions; q only for the last token -- the only row
        # of the agg encoder output consumed downstream (agg[:, -1]).
        k = (jnp.dot(xb, wk_ref[...], preferred_element_type=jnp.float32)
             + bk_ref[...]).reshape(B, S, D)
        v = (jnp.dot(xb, wv_ref[...], preferred_element_type=jnp.float32)
             + bv_ref[...]).reshape(B, S, D)
        q = (jnp.dot(xlb, wq_ref[...], preferred_element_type=jnp.float32)
             + bq_ref[...]) * scale                             # [B, D]

        # additive bias for the last query row: src_mask[-1, :] + key-pad term
        bias = srcmask_ref[pl.ds(S - 1, 1), :] + padadd_ref[...]   # [B, S]
        s = jnp.sum(q[:, None, :] * k, axis=-1) + bias              # [B, S]
        m = jnp.max(s, axis=-1, keepdims=True)
        p = jnp.exp(s - m)
        inv = pl.reciprocal(jnp.sum(p, axis=-1, keepdims=True), approx=True)
        attn = p * inv                                               # [B, S]
        ctx = jnp.sum(attn[:, :, None] * v, axis=1)                  # [B, D]
        attn_out = (jnp.dot(ctx.astype(jnp.bfloat16), wo_ref[...],
                            preferred_element_type=jnp.float32) + bo_ref[...])

        # residual + LayerNorm1 (post-norm, f32) -- last token only
        h = x_last + attn_out
        mu = jnp.mean(h, axis=-1, keepdims=True)
        var = jnp.mean((h - mu) ** 2, axis=-1, keepdims=True)
        h = (h - mu) * jax.lax.rsqrt(var + LN_EPS) * ln1w_ref[...] + ln1b_ref[...]

        # feed-forward
        ff = (jnp.dot(h.astype(jnp.bfloat16), w1_ref[...],
                      preferred_element_type=jnp.float32) + b1_ref[...])
        ff = jnp.maximum(ff, 0.0).astype(jnp.bfloat16)
        ff = (jnp.dot(ff, w2_ref[...], preferred_element_type=jnp.float32)
              + b2_ref[...])

        # residual + LayerNorm2
        h2 = h + ff
        mu2 = jnp.mean(h2, axis=-1, keepdims=True)
        var2 = jnp.mean((h2 - mu2) ** 2, axis=-1, keepdims=True)
        enc = ((h2 - mu2) * jax.lax.rsqrt(var2 + LN_EPS) * ln2w_ref[...]
               + ln2b_ref[...])                                  # [B, D]

        hid = (jnp.dot(enc.astype(jnp.bfloat16), linw_ref[...],
                       preferred_element_type=jnp.float32)
               + linb_ref[...])                                  # [B, H]
        hid_ref[...] = hid.astype(jnp.bfloat16)

    # scores tile: [B, tn] = hid @ emb_tile^T (contraction on last dims)
    out_ref[...] = jax.lax.dot_general(
        hid_ref[...], emb_ref[...],
        dimension_numbers=(((1,), (1,)), ((), ())),
        preferred_element_type=jnp.float32)


def _pick_tile_n(n):
    """Largest lane-dense vocab tile that divides N (falls back to full N)."""
    for t in (2048, 1024, 512, 256, 128):
        if n % t == 0:
            return t
    return n


def run_agg_and_scores(agg, src_mask, pad_add, agg_p, lin_w, lin_b, emb_bf16):
    B, S, _ = agg.shape
    N, H = emb_bf16.shape
    tn = _pick_tile_n(N)

    args = ([agg, src_mask, pad_add] + [agg_p[n] for n in _W_NAMES]
            + [lin_w, lin_b, emb_bf16])

    def full_spec(a):
        nd = a.ndim
        return pl.BlockSpec(a.shape, lambda j, nd=nd: (0,) * nd)

    in_specs = [full_spec(a) for a in args[:-1]]
    in_specs.append(pl.BlockSpec((tn, H), lambda j: (j, 0)))     # embedding tile

    return pl.pallas_call(
        _agg_scores_kernel,
        out_shape=jax.ShapeDtypeStruct((B, N), jnp.float32),
        grid=(N // tn,),
        in_specs=in_specs,
        out_specs=pl.BlockSpec((B, tn), lambda j: (0, j)),
        scratch_shapes=[pltpu.VMEM((B, H), jnp.bfloat16)],       # cached lin_out result
        compiler_params=pltpu.CompilerParams(
            dimension_semantics=("arbitrary",)),                 # scratch carried across N tiles
    )(*args)


# --------------------------------------------------------------------------
# Parameter initialization (deterministic, synthetic)
# --------------------------------------------------------------------------
def _init_encoder(key, d, stdv):
    ks = jax.random.split(key, 12)
    u = lambda k, shape: jax.random.uniform(k, shape, jnp.float32, -stdv, stdv)
    p = {
        "wq": u(ks[0], (d, d)), "wk": u(ks[1], (d, d)), "wv": u(ks[2], (d, d)),
        "bq": u(ks[3], (1, d)), "bk": u(ks[4], (1, d)), "bv": u(ks[5], (1, d)),
        "wo": u(ks[6], (d, d)), "bo": u(ks[7], (1, d)),
        "ln1w": jnp.ones((1, d), jnp.float32), "ln1b": jnp.zeros((1, d), jnp.float32),
        "w1": u(ks[8], (d, d)), "b1": u(ks[9], (1, d)),     # dim_feedforward == d
        "w2": u(ks[10], (d, d)), "b2": u(ks[11], (1, d)),
        "ln2w": jnp.ones((1, d), jnp.float32), "ln2b": jnp.zeros((1, d), jnp.float32),
    }
    for n in _BF16_W:                       # MXU-native, halves weight DMA traffic
        p[n] = p[n].astype(jnp.bfloat16)
    return p


def init_params(key, hidden_size, n_node):
    stdv = 1.0 / math.sqrt(hidden_size)
    ks = jax.random.split(key, 7)
    u = lambda k, shape: jax.random.uniform(k, shape, jnp.float32, -stdv, stdv)
    pid_p = _init_encoder(ks[1], hidden_size, stdv)
    title_p = _init_encoder(ks[2], hidden_size, stdv)
    desc_p = _init_encoder(ks[3], hidden_size, stdv)
    # stack the three H-sized encoders on a leading axis -> indexed by grid
    enc3 = {n: jnp.stack([pid_p[n], title_p[n], desc_p[n]], axis=0)
            for n in _W_NAMES}
    emb = u(ks[0], (n_node, hidden_size))
    return {
        "embedding": emb,                                  # f32 (gather / activations)
        "embedding_bf16": emb.astype(jnp.bfloat16),        # scores matmul operand
        "enc3": enc3,
        "agg_encoder": _init_encoder(ks[4], hidden_size * 3, stdv),
        "lin_out_w_t": u(ks[5], (hidden_size * 3, hidden_size)).astype(jnp.bfloat16),
        "lin_out_b": u(ks[6], (1, hidden_size)),
    }


# --------------------------------------------------------------------------
# Forward pass
# --------------------------------------------------------------------------
def multi_sequence_forward(params, pid, title, desc, src_mask, src_key_padding_mask):
    # TODO(synk): embedding lookup (gather) done with jnp.take outside Pallas.
    pid_e = jnp.take(params["embedding"], pid, axis=0)          # [B, S, H]
    B, S, H = pid_e.shape

    # [B, S] additive key-padding term; [S, S] additive src_mask passed as-is.
    pad_add = jnp.where(src_key_padding_mask, NEG_BIG, 0.0).astype(jnp.float32)
    src_mask = src_mask.astype(jnp.float32)

    x_stack = jnp.stack([pid_e, title, desc], axis=0)           # [3, B, S, H]
    enc_out = run_parallel_encoders(x_stack, src_mask, pad_add, params["enc3"])

    # concat(pid, title, desc) along features == transpose+reshape of [3,B,S,H]
    agg_in = jnp.transpose(enc_out, (1, 2, 0, 3)).reshape(B, S, 3 * H)

    scores = run_agg_and_scores(agg_in, src_mask, pad_add,
                                params["agg_encoder"],
                                params["lin_out_w_t"], params["lin_out_b"],
                                params["embedding_bf16"])       # [B, N]
    return scores


# --------------------------------------------------------------------------
if __name__ == "__main__":
    B, S, H, N_NODE = 2, 8, 32, 64

    key = jax.random.PRNGKey(0)
    k_params, k_pid, k_title, k_desc = jax.random.split(key, 4)

    params = init_params(k_params, H, N_NODE)

    pid = jax.random.randint(k_pid, (B, S), 0, N_NODE, dtype=jnp.int32)
    title = jax.random.normal(k_title, (B, S, H), jnp.float32)
    desc = jax.random.normal(k_desc, (B, S, H), jnp.float32)

    src_mask = jnp.zeros((S, S), jnp.float32)                   # additive attn mask
    src_key_padding_mask = jnp.zeros((B, S), bool).at[1, 0].set(True)  # True = pad

    fwd = jax.jit(multi_sequence_forward)
    scores = fwd(params, pid, title, desc, src_mask, src_key_padding_mask)
    scores = jax.block_until_ready(scores)
    assert scores.shape == (B, N_NODE) and scores.dtype == jnp.float32
    assert bool(jnp.all(jnp.isfinite(scores)))
    print("KERNEL_OK")
</pallas_src>

<mosaic_0001>
module attributes {stable_mosaic.version = 11 : i64} {
  func.func @_enc3_kernel(%arg0: i32, %arg1: memref<1x2x8x32xf32, #tpu.memory_space<vmem>>, %arg2: memref<8x8xf32, #tpu.memory_space<vmem>>, %arg3: memref<2x8xf32, #tpu.memory_space<vmem>>, %arg4: memref<1x32x32xbf16, #tpu.memory_space<vmem>>, %arg5: memref<1x32x32xbf16, #tpu.memory_space<vmem>>, %arg6: memref<1x32x32xbf16, #tpu.memory_space<vmem>>, %arg7: memref<1x1x32xf32, #tpu.memory_space<vmem>>, %arg8: memref<1x1x32xf32, #tpu.memory_space<vmem>>, %arg9: memref<1x1x32xf32, #tpu.memory_space<vmem>>, %arg10: memref<1x32x32xbf16, #tpu.memory_space<vmem>>, %arg11: memref<1x1x32xf32, #tpu.memory_space<vmem>>, %arg12: memref<1x1x32xf32, #tpu.memory_space<vmem>>, %arg13: memref<1x1x32xf32, #tpu.memory_space<vmem>>, %arg14: memref<1x32x32xbf16, #tpu.memory_space<vmem>>, %arg15: memref<1x1x32xf32, #tpu.memory_space<vmem>>, %arg16: memref<1x32x32xbf16, #tpu.memory_space<vmem>>, %arg17: memref<1x1x32xf32, #tpu.memory_space<vmem>>, %arg18: memref<1x1x32xf32, #tpu.memory_space<vmem>>, %arg19: memref<1x1x32xf32, #tpu.memory_space<vmem>>, %arg20: memref<1x2x8x32xf32, #tpu.memory_space<vmem>>) attributes {dimension_semantics = [#tpu.dimension_semantics<parallel>], iteration_bounds = array<i64: 3>, scalar_prefetch = 0 : i64, scratch_operands = 0 : i64, tpu.core_type = #tpu.core_type<tc>, window_params = [{transform_indices = @transform_0, window_bounds = array<i64: 1, 2, 8, 32>}, {pipeline_mode = #tpu.pipeline_mode<synchronous>, transform_indices = @transform_1, window_bounds = array<i64: 8, 8>}, {pipeline_mode = #tpu.pipeline_mode<synchronous>, transform_indices = @transform_2, window_bounds = array<i64: 2, 8>}, {transform_indices = @transform_3, window_bounds = array<i64: 1, 32, 32>}, {transform_indices = @transform_4, window_bounds = array<i64: 1, 32, 32>}, {transform_indices = @transform_5, window_bounds = array<i64: 1, 32, 32>}, {transform_indices = @transform_6, window_bounds = array<i64: 1, 1, 32>}, {transform_indices = @transform_7, window_bounds = array<i64: 1, 1, 32>}, {transform_indices = @transform_8, window_bounds = array<i64: 1, 1, 32>}, {transform_indices = @transform_9, window_bounds = array<i64: 1, 32, 32>}, {transform_indices = @transform_10, window_bounds = array<i64: 1, 1, 32>}, {transform_indices = @transform_11, window_bounds = array<i64: 1, 1, 32>}, {transform_indices = @transform_12, window_bounds = array<i64: 1, 1, 32>}, {transform_indices = @transform_13, window_bounds = array<i64: 1, 32, 32>}, {transform_indices = @transform_14, window_bounds = array<i64: 1, 1, 32>}, {transform_indices = @transform_15, window_bounds = array<i64: 1, 32, 32>}, {transform_indices = @transform_16, window_bounds = array<i64: 1, 1, 32>}, {transform_indices = @transform_17, window_bounds = array<i64: 1, 1, 32>}, {transform_indices = @transform_18, window_bounds = array<i64: 1, 1, 32>}, {transform_indices = @transform_19, window_bounds = array<i64: 1, 2, 8, 32>}]} {
    %c0 = arith.constant 0 : index
    %c0_0 = arith.constant 0 : index
    %c0_1 = arith.constant 0 : index
    %c0_2 = arith.constant 0 : index
    %0 = vector.load %arg1[%c0, %c0_0, %c0_1, %c0_2] : memref<1x2x8x32xf32, #tpu.memory_space<vmem>>, vector<1x2x8x32xf32>
    %1 = vector.shape_cast %0 : vector<1x2x8x32xf32> to vector<2x8x32xf32>
    %c0_3 = arith.constant 0 : index
    %c0_4 = arith.constant 0 : index
    %2 = vector.load %arg2[%c0_3, %c0_4] : memref<8x8xf32, #tpu.memory_space<vmem>>, vector<8x8xf32>
    %3 = vector.shape_cast %2 : vector<8x8xf32> to vector<1x8x8xf32>
    %c0_5 = arith.constant 0 : index
    %c0_6 = arith.constant 0 : index
    %4 = vector.load %arg3[%c0_5, %c0_6] : memref<2x8xf32, #tpu.memory_space<vmem>>, vector<2x8xf32>
    %5 = vector.shape_cast %4 : vector<2x8xf32> to vector<2x1x8xf32>
    %6 = vector.broadcast %3 : vector<1x8x8xf32> to vector<2x8x8xf32>
    %7 = vector.broadcast %5 : vector<2x1x8xf32> to vector<2x8x8xf32>
    %8 = arith.addf %6, %7 : vector<2x8x8xf32>
    %c0_7 = arith.constant 0 : index
    %c0_8 = arith.constant 0 : index
    %c0_9 = arith.constant 0 : index
    %9 = vector.load %arg4[%c0_7, %c0_8, %c0_9] : memref<1x32x32xbf16, #tpu.memory_space<vmem>>, vector<1x32x32xbf16>
    %10 = vector.shape_cast %9 : vector<1x32x32xbf16> to vector<32x32xbf16>
    %c0_10 = arith.constant 0 : index
    %c0_11 = arith.constant 0 : index
    %c0_12 = arith.constant 0 : index
    %11 = vector.load %arg5[%c0_10, %c0_11, %c0_12] : memref<1x32x32xbf16, #tpu.memory_space<vmem>>, vector<1x32x32xbf16>
    %12 = vector.shape_cast %11 : vector<1x32x32xbf16> to vector<32x32xbf16>
    %c0_13 = arith.constant 0 : index
    %c0_14 = arith.constant 0 : index
    %c0_15 = arith.constant 0 : index
    %13 = vector.load %arg6[%c0_13, %c0_14, %c0_15] : memref<1x32x32xbf16, #tpu.memory_space<vmem>>, vector<1x32x32xbf16>
    %14 = vector.shape_cast %13 : vector<1x32x32xbf16> to vector<32x32xbf16>
    %c0_16 = arith.constant 0 : index
    %c0_17 = arith.constant 0 : index
    %c0_18 = arith.constant 0 : index
    %15 = vector.load %arg7[%c0_16, %c0_17, %c0_18] : memref<1x1x32xf32, #tpu.memory_space<vmem>>, vector<1x1x32xf32>
    %16 = vector.shape_cast %15 : vector<1x1x32xf32> to vector<1x32xf32>
    %c0_19 = arith.constant 0 : index
    %c0_20 = arith.constant 0 : index
    %c0_21 = arith.constant 0 : index
    %17 = vector.load %arg8[%c0_19, %c0_20, %c0_21] : memref<1x1x32xf32, #tpu.memory_space<vmem>>, vector<1x1x32xf32>
    %18 = vector.shape_cast %17 : vector<1x1x32xf32> to vector<1x32xf32>
    %c0_22 = arith.constant 0 : index
    %c0_23 = arith.constant 0 : index
    %c0_24 = arith.constant 0 : index
    %19 = vector.load %arg9[%c0_22, %c0_23, %c0_24] : memref<1x1x32xf32, #tpu.memory_space<vmem>>, vector<1x1x32xf32>
    %20 = vector.shape_cast %19 : vector<1x1x32xf32> to vector<1x32xf32>
    %c0_25 = arith.constant 0 : index
    %c0_26 = arith.constant 0 : index
    %c0_27 = arith.constant 0 : index
    %21 = vector.load %arg10[%c0_25, %c0_26, %c0_27] : memref<1x32x32xbf16, #tpu.memory_space<vmem>>, vector<1x32x32xbf16>
    %22 = vector.shape_cast %21 : vector<1x32x32xbf16> to vector<32x32xbf16>
    %c0_28 = arith.constant 0 : index
    %c0_29 = arith.constant 0 : index
    %c0_30 = arith.constant 0 : index
    %23 = vector.load %arg11[%c0_28, %c0_29, %c0_30] : memref<1x1x32xf32, #tpu.memory_space<vmem>>, vector<1x1x32xf32>
    %24 = vector.shape_cast %23 : vector<1x1x32xf32> to vector<1x32xf32>
    %c0_31 = arith.constant 0 : index
    %c0_32 = arith.constant 0 : index
    %c0_33 = arith.constant 0 : index
    %25 = vector.load %arg12[%c0_31, %c0_32, %c0_33] : memref<1x1x32xf32, #tpu.memory_space<vmem>>, vector<1x1x32xf32>
    %26 = vector.shape_cast %25 : vector<1x1x32xf32> to vector<1x32xf32>
    %c0_34 = arith.constant 0 : index
    %c0_35 = arith.constant 0 : index
    %c0_36 = arith.constant 0 : index
    %27 = vector.load %arg13[%c0_34, %c0_35, %c0_36] : memref<1x1x32xf32, #tpu.memory_space<vmem>>, vector<1x1x32xf32>
    %28 = vector.shape_cast %27 : vector<1x1x32xf32> to vector<1x32xf32>
    %c0_37 = arith.constant 0 : index
    %c0_38 = arith.constant 0 : index
    %c0_39 = arith.constant 0 : index
    %29 = vector.load %arg14[%c0_37, %c0_38, %c0_39] : memref<1x32x32xbf16, #tpu.memory_space<vmem>>, vector<1x32x32xbf16>
    %30 = vector.shape_cast %29 : vector<1x32x32xbf16> to vector<32x32xbf16>
    %c0_40 = arith.constant 0 : index
    %c0_41 = arith.constant 0 : index
    %c0_42 = arith.constant 0 : index
    %31 = vector.load %arg15[%c0_40, %c0_41, %c0_42] : memref<1x1x32xf32, #tpu.memory_space<vmem>>, vector<1x1x32xf32>
    %32 = vector.shape_cast %31 : vector<1x1x32xf32> to vector<1x32xf32>
    %c0_43 = arith.constant 0 : index
    %c0_44 = arith.constant 0 : index
    %c0_45 = arith.constant 0 : index
    %33 = vector.load %arg16[%c0_43, %c0_44, %c0_45] : memref<1x32x32xbf16, #tpu.memory_space<vmem>>, vector<1x32x32xbf16>
    %34 = vector.shape_cast %33 : vector<1x32x32xbf16> to vector<32x32xbf16>
    %c0_46 = arith.constant 0 : index
    %c0_47 = arith.constant 0 : index
    %c0_48 = arith.constant 0 : index
    %35 = vector.load %arg17[%c0_46, %c0_47, %c0_48] : memref<1x1x32xf32, #tpu.memory_space<vmem>>, vector<1x1x32xf32>
    %36 = vector.shape_cast %35 : vector<1x1x32xf32> to vector<1x32xf32>
    %c0_49 = arith.constant 0 : index
    %c0_50 = arith.constant 0 : index
    %c0_51 = arith.constant 0 : index
    %37 = vector.load %arg18[%c0_49, %c0_50, %c0_51] : memref<1x1x32xf32, #tpu.memory_space<vmem>>, vector<1x1x32xf32>
    %38 = vector.shape_cast %37 : vector<1x1x32xf32> to vector<1x32xf32>
    %c0_52 = arith.constant 0 : index
    %c0_53 = arith.constant 0 : index
    %c0_54 = arith.constant 0 : index
    %39 = vector.load %arg19[%c0_52, %c0_53, %c0_54] : memref<1x1x32xf32, #tpu.memory_space<vmem>>, vector<1x1x32xf32>
    %40 = vector.shape_cast %39 : vector<1x1x32xf32> to vector<1x32xf32>
    %41 = vector.shape_cast %1 : vector<2x8x32xf32> to vector<16x32xf32>
    %42 = arith.truncf %41 : vector<16x32xf32> to vector<16x32xbf16>
    %cst = arith.constant dense<0.000000e+00> : vector<16x32xf32>
    %43 = tpu.matmul %42, %10, %cst {dimension_numbers = #tpu.dot_dimension_numbers<[1], [0], [0], [1], [0, 0, 1, 1], [], []>} : vector<16x32xbf16>, vector<32x32xbf16>, vector<16x32xf32> -> vector<16x32xf32>
    %44 = vector.broadcast %16 : vector<1x32xf32> to vector<16x32xf32>
    %45 = arith.addf %43, %44 : vector<16x32xf32>
    %cst_55 = arith.constant dense<0.000000e+00> : vector<16x32xf32>
    %46 = tpu.matmul %42, %12, %cst_55 {dimension_numbers = #tpu.dot_dimension_numbers<[1], [0], [0], [1], [0, 0, 1, 1], [], []>} : vector<16x32xbf16>, vector<32x32xbf16>, vector<16x32xf32> -> vector<16x32xf32>
    %47 = vector.broadcast %18 : vector<1x32xf32> to vector<16x32xf32>
    %48 = arith.addf %46, %47 : vector<16x32xf32>
    %cst_56 = arith.constant dense<0.000000e+00> : vector<16x32xf32>
    %49 = tpu.matmul %42, %14, %cst_56 {dimension_numbers = #tpu.dot_dimension_numbers<[1], [0], [0], [1], [0, 0, 1, 1], [], []>} : vector<16x32xbf16>, vector<32x32xbf16>, vector<16x32xf32> -> vector<16x32xf32>
    %50 = vector.broadcast %20 : vector<1x32xf32> to vector<16x32xf32>
    %51 = arith.addf %49, %50 : vector<16x32xf32>
    %cst_57 = arith.constant 0.176776692 : f32
    %52 = vector.broadcast %cst_57 : f32 to vector<16x32xf32>
    %53 = arith.mulf %45, %52 : vector<16x32xf32>
    %54 = arith.truncf %53 : vector<16x32xf32> to vector<16x32xbf16>
    %55 = vector.shape_cast %54 : vector<16x32xbf16> to vector<2x8x32xbf16>
    %56 = arith.truncf %48 : vector<16x32xf32> to vector<16x32xbf16>
    %57 = vector.shape_cast %56 : vector<16x32xbf16> to vector<2x8x32xbf16>
    %58 = arith.truncf %51 : vector<16x32xf32> to vector<16x32xbf16>
    %59 = vector.shape_cast %58 : vector<16x32xbf16> to vector<2x8x32xbf16>
    "tpu.trace_start"() <{level = 10 : i32, message = "bqd,bkd->bqk"}> : () -> ()
    %cst_58 = arith.constant dense<0.000000e+00> : vector<2x8x8xf32>
    %60 = tpu.matmul %55, %57, %cst_58 {dimension_numbers = #tpu.dot_dimension_numbers<[2], [2], [1], [1], [0, 0, 0, 1, 1, 1], [0], [0]>} : vector<2x8x32xbf16>, vector<2x8x32xbf16>, vector<2x8x8xf32> -> vector<2x8x8xf32>
    "tpu.trace_stop"() : () -> ()
    %61 = arith.addf %60, %8 : vector<2x8x8xf32>
    %cst_59 = arith.constant dense<0xFF800000> : vector<2x8xf32>
    %62 = vector.multi_reduction <maximumf>, %61, %cst_59 [2] : vector<2x8x8xf32> to vector<2x8xf32>
    %63 = vector.shape_cast %62 : vector<2x8xf32> to vector<2x8x1xf32>
    %64 = vector.broadcast %63 : vector<2x8x1xf32> to vector<2x8x8xf32>
    %65 = arith.subf %61, %64 : vector<2x8x8xf32>
    %66 = math.exp %65 : vector<2x8x8xf32>
    %cst_60 = arith.constant dense<0.000000e+00> : vector<2x8xf32>
    %67 = vector.multi_reduction <add>, %66, %cst_60 [2] : vector<2x8x8xf32> to vector<2x8xf32>
    %68 = vector.shape_cast %67 : vector<2x8xf32> to vector<2x8x1xf32>
    %69 = tpu.reciprocal %68 {approx = true} : vector<2x8x1xf32> -> vector<2x8x1xf32>
    %70 = vector.broadcast %69 : vector<2x8x1xf32> to vector<2x8x8xf32>
    %71 = arith.mulf %66, %70 : vector<2x8x8xf32>
    %72 = arith.truncf %71 : vector<2x8x8xf32> to vector<2x8x8xbf16>
    "tpu.trace_start"() <{level = 10 : i32, message = "bqk,bkd->bqd"}> : () -> ()
    %cst_61 = arith.constant dense<0.000000e+00> : vector<2x8x32xf32>
    %73 = tpu.matmul %72, %59, %cst_61 {dimension_numbers = #tpu.dot_dimension_numbers<[2], [1], [1], [2], [0, 0, 0, 1, 1, 2], [0], [0]>} : vector<2x8x8xbf16>, vector<2x8x32xbf16>, vector<2x8x32xf32> -> vector<2x8x32xf32>
    "tpu.trace_stop"() : () -> ()
    %74 = vector.shape_cast %73 : vector<2x8x32xf32> to vector<16x32xf32>
    %75 = arith.truncf %74 : vector<16x32xf32> to vector<16x32xbf16>
    %cst_62 = arith.constant dense<0.000000e+00> : vector<16x32xf32>
    %76 = tpu.matmul %75, %22, %cst_62 {dimension_numbers = #tpu.dot_dimension_numbers<[1], [0], [0], [1], [0, 0, 1, 1], [], []>} : vector<16x32xbf16>, vector<32x32xbf16>, vector<16x32xf32> -> vector<16x32xf32>
    %77 = vector.broadcast %24 : vector<1x32xf32> to vector<16x32xf32>
    %78 = arith.addf %76, %77 : vector<16x32xf32>
    %79 = arith.addf %41, %78 : vector<16x32xf32>
    %cst_63 = arith.constant dense<0.000000e+00> : vector<16xf32>
    %80 = vector.multi_reduction <add>, %79, %cst_63 [1] : vector<16x32xf32> to vector<16xf32>
    %81 = vector.shape_cast %80 : vector<16xf32> to vector<16x1xf32>
    %cst_64 = arith.constant 3.200000e+01 : f32
    %82 = vector.broadcast %cst_64 : f32 to vector<16x1xf32>
    %83 = arith.divf %81, %82 : vector<16x1xf32>
    %84 = vector.broadcast %83 : vector<16x1xf32> to vector<16x32xf32>
    %85 = arith.subf %79, %84 : vector<16x32xf32>
    %86 = arith.mulf %85, %85 : vector<16x32xf32>
    %cst_65 = arith.constant dense<0.000000e+00> : vector<16xf32>
    %87 = vector.multi_reduction <add>, %86, %cst_65 [1] : vector<16x32xf32> to vector<16xf32>
    %88 = vector.shape_cast %87 : vector<16xf32> to vector<16x1xf32>
    %cst_66 = arith.constant 3.200000e+01 : f32
    %89 = vector.broadcast %cst_66 : f32 to vector<16x1xf32>
    %90 = arith.divf %88, %89 : vector<16x1xf32>
    %91 = vector.broadcast %83 : vector<16x1xf32> to vector<16x32xf32>
    %92 = arith.subf %79, %91 : vector<16x32xf32>
    %cst_67 = arith.constant 9.99999974E-6 : f32
    %93 = vector.broadcast %cst_67 : f32 to vector<16x1xf32>
    %94 = arith.addf %90, %93 : vector<16x1xf32>
    %95 = math.rsqrt %94 : vector<16x1xf32>
    %96 = vector.broadcast %95 : vector<16x1xf32> to vector<16x32xf32>
    %97 = arith.mulf %92, %96 : vector<16x32xf32>
    %98 = vector.broadcast %26 : vector<1x32xf32> to vector<16x32xf32>
    %99 = arith.mulf %97, %98 : vector<16x32xf32>
    %100 = vector.broadcast %28 : vector<1x32xf32> to vector<16x32xf32>
    %101 = arith.addf %99, %100 : vector<16x32xf32>
    %102 = arith.truncf %101 : vector<16x32xf32> to vector<16x32xbf16>
    %cst_68 = arith.constant dense<0.000000e+00> : vector<16x32xf32>
    %103 = tpu.matmul %102, %30, %cst_68 {dimension_numbers = #tpu.dot_dimension_numbers<[1], [0], [0], [1], [0, 0, 1, 1], [], []>} : vector<16x32xbf16>, vector<32x32xbf16>, vector<16x32xf32> -> vector<16x32xf32>
    %104 = vector.broadcast %32 : vector<1x32xf32> to vector<16x32xf32>
    %105 = arith.addf %103, %104 : vector<16x32xf32>
    %cst_69 = arith.constant 0.000000e+00 : f32
    %106 = vector.broadcast %cst_69 : f32 to vector<16x32xf32>
    %107 = arith.maximumf %105, %106 : vector<16x32xf32>
    %108 = arith.truncf %107 : vector<16x32xf32> to vector<16x32xbf16>
    %cst_70 = arith.constant dense<0.000000e+00> : vector<16x32xf32>
    %109 = tpu.matmul %108, %34, %cst_70 {dimension_numbers = #tpu.dot_dimension_numbers<[1], [0], [0], [1], [0, 0, 1, 1], [], []>} : vector<16x32xbf16>, vector<32x32xbf16>, vector<16x32xf32> -> vector<16x32xf32>
    %110 = vector.broadcast %36 : vector<1x32xf32> to vector<16x32xf32>
    %111 = arith.addf %109, %110 : vector<16x32xf32>
    %112 = arith.addf %101, %111 : vector<16x32xf32>
    %cst_71 = arith.constant dense<0.000000e+00> : vector<16xf32>
    %113 = vector.multi_reduction <add>, %112, %cst_71 [1] : vector<16x32xf32> to vector<16xf32>
    %114 = vector.shape_cast %113 : vector<16xf32> to vector<16x1xf32>
    %cst_72 = arith.constant 3.200000e+01 : f32
    %115 = vector.broadcast %cst_72 : f32 to vector<16x1xf32>
    %116 = arith.divf %114, %115 : vector<16x1xf32>
    %117 = vector.broadcast %116 : vector<16x1xf32> to vector<16x32xf32>
    %118 = arith.subf %112, %117 : vector<16x32xf32>
    %119 = arith.mulf %118, %118 : vector<16x32xf32>
    %cst_73 = arith.constant dense<0.000000e+00> : vector<16xf32>
    %120 = vector.multi_reduction <add>, %119, %cst_73 [1] : vector<16x32xf32> to vector<16xf32>
    %121 = vector.shape_cast %120 : vector<16xf32> to vector<16x1xf32>
    %cst_74 = arith.constant 3.200000e+01 : f32
    %122 = vector.broadcast %cst_74 : f32 to vector<16x1xf32>
    %123 = arith.divf %121, %122 : vector<16x1xf32>
    %124 = vector.broadcast %116 : vector<16x1xf32> to vector<16x32xf32>
    %125 = arith.subf %112, %124 : vector<16x32xf32>
    %cst_75 = arith.constant 9.99999974E-6 : f32
    %126 = vector.broadcast %cst_75 : f32 to vector<16x1xf32>
    %127 = arith.addf %123, %126 : vector<16x1xf32>
    %128 = math.rsqrt %127 : vector<16x1xf32>
    %129 = vector.broadcast %128 : vector<16x1xf32> to vector<16x32xf32>
    %130 = arith.mulf %125, %129 : vector<16x32xf32>
    %131 = vector.broadcast %38 : vector<1x32xf32> to vector<16x32xf32>
    %132 = arith.mulf %130, %131 : vector<16x32xf32>
    %133 = vector.broadcast %40 : vector<1x32xf32> to vector<16x32xf32>
    %134 = arith.addf %132, %133 : vector<16x32xf32>
    %135 = vector.shape_cast %134 : vector<16x32xf32> to vector<2x8x32xf32>
    %c0_76 = arith.constant 0 : index
    %c0_77 = arith.constant 0 : index
    %c0_78 = arith.constant 0 : index
    %c0_79 = arith.constant 0 : index
    %136 = vector.load %arg20[%c0_76, %c0_77, %c0_78, %c0_79] : memref<1x2x8x32xf32, #tpu.memory_space<vmem>>, vector<1x2x8x32xf32>
    %137 = vector.shape_cast %136 : vector<1x2x8x32xf32> to vector<2x8x32xf32>
    %138 = vector.shape_cast %135 : vector<2x8x32xf32> to vector<1x2x8x32xf32>
    tpu.vector_store %arg20[%c0_76, %c0_77, %c0_78, %c0_79], %138 {strides = array<i32>} : memref<1x2x8x32xf32, #tpu.memory_space<vmem>>, vector<1x2x8x32xf32>,
    return
  }
  func.func @transform_0(%arg0: i32) -> (i32, i32, i32, i32) {
    %c0_i32 = arith.constant 0 : i32
    %c0_i32_0 = arith.constant 0 : i32
    %c0_i32_1 = arith.constant 0 : i32
    %c0_i32_2 = arith.constant 0 : i32
    return %arg0, %c0_i32, %c0_i32_0, %c0_i32_1 : i32, i32, i32, i32
  }
  func.func @transform_1(%arg0: i32) -> (i32, i32) {
    %c0_i32 = arith.constant 0 : i32
    %c0_i32_0 = arith.constant 0 : i32
    %c0_i32_1 = arith.constant 0 : i32
    return %c0_i32, %c0_i32_0 : i32, i32
  }
  func.func @transform_2(%arg0: i32) -> (i32, i32) {
    %c0_i32 = arith.constant 0 : i32
    %c0_i32_0 = arith.constant 0 : i32
    %c0_i32_1 = arith.constant 0 : i32
    return %c0_i32, %c0_i32_0 : i32, i32
  }
  func.func @transform_3(%arg0: i32) -> (i32, i32, i32) {
    %c0_i32 = arith.constant 0 : i32
    %c0_i32_0 = arith.constant 0 : i32
    %c0_i32_1 = arith.constant 0 : i32
    return %arg0, %c0_i32, %c0_i32_0 : i32, i32, i32
  }
  func.func @transform_4(%arg0: i32) -> (i32, i32, i32) {
    %c0_i32 = arith.constant 0 : i32
    %c0_i32_0 = arith.constant 0 : i32
    %c0_i32_1 = arith.constant 0 : i32
    return %arg0, %c0_i32, %c0_i32_0 : i32, i32, i32
  }
  func.func @transform_5(%arg0: i32) -> (i32, i32, i32) {
    %c0_i32 = arith.constant 0 : i32
    %c0_i32_0 = arith.constant 0 : i32
    %c0_i32_1 = arith.constant 0 : i32
    return %arg0, %c0_i32, %c0_i32_0 : i32, i32, i32
  }
  func.func @transform_6(%arg0: i32) -> (i32, i32, i32) {
    %c0_i32 = arith.constant 0 : i32
    %c0_i32_0 = arith.constant 0 : i32
    %c0_i32_1 = arith.constant 0 : i32
    return %arg0, %c0_i32, %c0_i32_0 : i32, i32, i32
  }
  func.func @transform_7(%arg0: i32) -> (i32, i32, i32) {
    %c0_i32 = arith.constant 0 : i32
    %c0_i32_0 = arith.constant 0 : i32
    %c0_i32_1 = arith.constant 0 : i32
    return %arg0, %c0_i32, %c0_i32_0 : i32, i32, i32
  }
  func.func @transform_8(%arg0: i32) -> (i32, i32, i32) {
    %c0_i32 = arith.constant 0 : i32
    %c0_i32_0 = arith.constant 0 : i32
    %c0_i32_1 = arith.constant 0 : i32
    return %arg0, %c0_i32, %c0_i32_0 : i32, i32, i32
  }
  func.func @transform_9(%arg0: i32) -> (i32, i32, i32) {
    %c0_i32 = arith.constant 0 : i32
    %c0_i32_0 = arith.constant 0 : i32
    %c0_i32_1 = arith.constant 0 : i32
    return %arg0, %c0_i32, %c0_i32_0 : i32, i32, i32
  }
  func.func @transform_10(%arg0: i32) -> (i32, i32, i32) {
    %c0_i32 = arith.constant 0 : i32
    %c0_i32_0 = arith.constant 0 : i32
    %c0_i32_1 = arith.constant 0 : i32
    return %arg0, %c0_i32, %c0_i32_0 : i32, i32, i32
  }
  func.func @transform_11(%arg0: i32) -> (i32, i32, i32) {
    %c0_i32 = arith.constant 0 : i32
    %c0_i32_0 = arith.constant 0 : i32
    %c0_i32_1 = arith.constant 0 : i32
    return %arg0, %c0_i32, %c0_i32_0 : i32, i32, i32
  }
  func.func @transform_12(%arg0: i32) -> (i32, i32, i32) {
    %c0_i32 = arith.constant 0 : i32
    %c0_i32_0 = arith.constant 0 : i32
    %c0_i32_1 = arith.constant 0 : i32
    return %arg0, %c0_i32, %c0_i32_0 : i32, i32, i32
  }
  func.func @transform_13(%arg0: i32) -> (i32, i32, i32) {
    %c0_i32 = arith.constant 0 : i32
    %c0_i32_0 = arith.constant 0 : i32
    %c0_i32_1 = arith.constant 0 : i32
    return %arg0, %c0_i32, %c0_i32_0 : i32, i32, i32
  }
  func.func @transform_14(%arg0: i32) -> (i32, i32, i32) {
    %c0_i32 = arith.constant 0 : i32
    %c0_i32_0 = arith.constant 0 : i32
    %c0_i32_1 = arith.constant 0 : i32
    return %arg0, %c0_i32, %c0_i32_0 : i32, i32, i32
  }
  func.func @transform_15(%arg0: i32) -> (i32, i32, i32) {
    %c0_i32 = arith.constant 0 : i32
    %c0_i32_0 = arith.constant 0 : i32
    %c0_i32_1 = arith.constant 0 : i32
    return %arg0, %c0_i32, %c0_i32_0 : i32, i32, i32
  }
  func.func @transform_16(%arg0: i32) -> (i32, i32, i32) {
    %c0_i32 = arith.constant 0 : i32
    %c0_i32_0 = arith.constant 0 : i32
    %c0_i32_1 = arith.constant 0 : i32
    return %arg0, %c0_i32, %c0_i32_0 : i32, i32, i32
  }
  func.func @transform_17(%arg0: i32) -> (i32, i32, i32) {
    %c0_i32 = arith.constant 0 : i32
    %c0_i32_0 = arith.constant 0 : i32
    %c0_i32_1 = arith.constant 0 : i32
    return %arg0, %c0_i32, %c0_i32_0 : i32, i32, i32
  }
  func.func @transform_18(%arg0: i32) -> (i32, i32, i32) {
    %c0_i32 = arith.constant 0 : i32
    %c0_i32_0 = arith.constant 0 : i32
    %c0_i32_1 = arith.constant 0 : i32
    return %arg0, %c0_i32, %c0_i32_0 : i32, i32, i32
  }
  func.func @transform_19(%arg0: i32) -> (i32, i32, i32, i32) {
    %c0_i32 = arith.constant 0 : i32
    %c0_i32_0 = arith.constant 0 : i32
    %c0_i32_1 = arith.constant 0 : i32
    %c0_i32_2 = arith.constant 0 : i32
    return %arg0, %c0_i32, %c0_i32_0, %c0_i32_1 : i32, i32, i32, i32
  }
}

module attributes {stable_mosaic.version = 11 : i64} {
  func.func @_agg_scores_kernel(%arg0: i32, %arg1: memref<2x8x96xf32, #tpu.memory_space<vmem>>, %arg2: memref<8x8xf32, #tpu.memory_space<vmem>>, %arg3: memref<2x8xf32, #tpu.memory_space<vmem>>, %arg4: memref<96x96xbf16, #tpu.memory_space<vmem>>, %arg5: memref<96x96xbf16, #tpu.memory_space<vmem>>, %arg6: memref<96x96xbf16, #tpu.memory_space<vmem>>, %arg7: memref<1x96xf32, #tpu.memory_space<vmem>>, %arg8: memref<1x96xf32, #tpu.memory_space<vmem>>, %arg9: memref<1x96xf32, #tpu.memory_space<vmem>>, %arg10: memref<96x96xbf16, #tpu.memory_space<vmem>>, %arg11: memref<1x96xf32, #tpu.memory_space<vmem>>, %arg12: memref<1x96xf32, #tpu.memory_space<vmem>>, %arg13: memref<1x96xf32, #tpu.memory_space<vmem>>, %arg14: memref<96x96xbf16, #tpu.memory_space<vmem>>, %arg15: memref<1x96xf32, #tpu.memory_space<vmem>>, %arg16: memref<96x96xbf16, #tpu.memory_space<vmem>>, %arg17: memref<1x96xf32, #tpu.memory_space<vmem>>, %arg18: memref<1x96xf32, #tpu.memory_space<vmem>>, %arg19: memref<1x96xf32, #tpu.memory_space<vmem>>, %arg20: memref<96x32xbf16, #tpu.memory_space<vmem>>, %arg21: memref<1x32xf32, #tpu.memory_space<vmem>>, %arg22: memref<64x32xbf16, #tpu.memory_space<vmem>>, %arg23: memref<2x64xf32, #tpu.memory_space<vmem>>, %arg24: memref<2x32xbf16, #tpu.memory_space<vmem>>) attributes {dimension_semantics = [#tpu.dimension_semantics<arbitrary>], iteration_bounds = array<i64: 1>, scalar_prefetch = 0 : i64, scratch_operands = 1 : i64, tpu.core_type = #tpu.core_type<tc>, window_params = [{pipeline_mode = #tpu.pipeline_mode<synchronous>, transform_indices = @transform_0, window_bounds = array<i64: 2, 8, 96>}, {pipeline_mode = #tpu.pipeline_mode<synchronous>, transform_indices = @transform_1, window_bounds = array<i64: 8, 8>}, {pipeline_mode = #tpu.pipeline_mode<synchronous>, transform_indices = @transform_2, window_bounds = array<i64: 2, 8>}, {pipeline_mode = #tpu.pipeline_mode<synchronous>, transform_indices = @transform_3, window_bounds = array<i64: 96, 96>}, {pipeline_mode = #tpu.pipeline_mode<synchronous>, transform_indices = @transform_4, window_bounds = array<i64: 96, 96>}, {pipeline_mode = #tpu.pipeline_mode<synchronous>, transform_indices = @transform_5, window_bounds = array<i64: 96, 96>}, {pipeline_mode = #tpu.pipeline_mode<synchronous>, transform_indices = @transform_6, window_bounds = array<i64: 1, 96>}, {pipeline_mode = #tpu.pipeline_mode<synchronous>, transform_indices = @transform_7, window_bounds = array<i64: 1, 96>}, {pipeline_mode = #tpu.pipeline_mode<synchronous>, transform_indices = @transform_8, window_bounds = array<i64: 1, 96>}, {pipeline_mode = #tpu.pipeline_mode<synchronous>, transform_indices = @transform_9, window_bounds = array<i64: 96, 96>}, {pipeline_mode = #tpu.pipeline_mode<synchronous>, transform_indices = @transform_10, window_bounds = array<i64: 1, 96>}, {pipeline_mode = #tpu.pipeline_mode<synchronous>, transform_indices = @transform_11, window_bounds = array<i64: 1, 96>}, {pipeline_mode = #tpu.pipeline_mode<synchronous>, transform_indices = @transform_12, window_bounds = array<i64: 1, 96>}, {pipeline_mode = #tpu.pipeline_mode<synchronous>, transform_indices = @transform_13, window_bounds = array<i64: 96, 96>}, {pipeline_mode = #tpu.pipeline_mode<synchronous>, transform_indices = @transform_14, window_bounds = array<i64: 1, 96>}, {pipeline_mode = #tpu.pipeline_mode<synchronous>, transform_indices = @transform_15, window_bounds = array<i64: 96, 96>}, {pipeline_mode = #tpu.pipeline_mode<synchronous>, transform_indices = @transform_16, window_bounds = array<i64: 1, 96>}, {pipeline_mode = #tpu.pipeline_mode<synchronous>, transform_indices = @transform_17, window_bounds = array<i64: 1, 96>}, {pipeline_mode = #tpu.pipeline_mode<synchronous>, transform_indices = @transform_18, window_bounds = array<i64: 1, 96>}, {pipeline_mode = #tpu.pipeline_mode<synchronous>, transform_indices = @transform_19, window_bounds = array<i64: 96, 32>}, {pipeline_mode = #tpu.pipeline_mode<synchronous>, transform_indices = @transform_20, window_bounds = array<i64: 1, 32>}, {transform_indices = @transform_21, window_bounds = array<i64: 64, 32>}, {transform_indices = @transform_22, window_bounds = array<i64: 2, 64>}]} {
    %c0_i32 = arith.constant 0 : i32
    %0 = arith.cmpi eq, %arg0, %c0_i32 : i32
    %1 = arith.extui %0 : i1 to i32
    %c0_i32_0 = arith.constant 0 : i32
    %2 = arith.cmpi ne, %1, %c0_i32_0 : i32
    scf.if %2 {
      %c0_6 = arith.constant 0 : index
      %c0_7 = arith.constant 0 : index
      %c0_8 = arith.constant 0 : index
      %7 = vector.load %arg1[%c0_6, %c0_7, %c0_8] : memref<2x8x96xf32, #tpu.memory_space<vmem>>, vector<2x8x96xf32>
      %8 = vector.shape_cast %7 : vector<2x8x96xf32> to vector<16x96xf32>
      %9 = arith.truncf %8 : vector<16x96xf32> to vector<16x96xbf16>
      %10 = vector.extract_strided_slice %7 {offsets = [0, 7, 0], sizes = [2, 1, 96], strides = [1, 1, 1]} : vector<2x8x96xf32> to vector<2x1x96xf32>
      %11 = vector.shape_cast %10 : vector<2x1x96xf32> to vector<2x96xf32>
      %12 = arith.truncf %11 : vector<2x96xf32> to vector<2x96xbf16>
      %c0_9 = arith.constant 0 : index
      %c0_10 = arith.constant 0 : index
      %13 = vector.load %arg5[%c0_9, %c0_10] : memref<96x96xbf16, #tpu.memory_space<vmem>>, vector<96x96xbf16>
      %cst_11 = arith.constant dense<0.000000e+00> : vector<16x96xf32>
      %14 = tpu.matmul %9, %13, %cst_11 {dimension_numbers = #tpu.dot_dimension_numbers<[1], [0], [0], [1], [0, 0, 1, 1], [], []>} : vector<16x96xbf16>, vector<96x96xbf16>, vector<16x96xf32> -> vector<16x96xf32>
      %c0_12 = arith.constant 0 : index
      %c0_13 = arith.constant 0 : index
      %15 = vector.load %arg8[%c0_12, %c0_13] : memref<1x96xf32, #tpu.memory_space<vmem>>, vector<1x96xf32>
      %16 = vector.broadcast %15 : vector<1x96xf32> to vector<16x96xf32>
      %17 = arith.addf %14, %16 : vector<16x96xf32>
      %18 = vector.shape_cast %17 : vector<16x96xf32> to vector<2x8x96xf32>
      %c0_14 = arith.constant 0 : index
      %c0_15 = arith.constant 0 : index
      %19 = vector.load %arg6[%c0_14, %c0_15] : memref<96x96xbf16, #tpu.memory_space<vmem>>, vector<96x96xbf16>
      %cst_16 = arith.constant dense<0.000000e+00> : vector<16x96xf32>
      %20 = tpu.matmul %9, %19, %cst_16 {dimension_numbers = #tpu.dot_dimension_numbers<[1], [0], [0], [1], [0, 0, 1, 1], [], []>} : vector<16x96xbf16>, vector<96x96xbf16>, vector<16x96xf32> -> vector<16x96xf32>
      %c0_17 = arith.constant 0 : index
      %c0_18 = arith.constant 0 : index
      %21 = vector.load %arg9[%c0_17, %c0_18] : memref<1x96xf32, #tpu.memory_space<vmem>>, vector<1x96xf32>
      %22 = vector.broadcast %21 : vector<1x96xf32> to vector<16x96xf32>
      %23 = arith.addf %20, %22 : vector<16x96xf32>
      %24 = vector.shape_cast %23 : vector<16x96xf32> to vector<2x8x96xf32>
      %c0_19 = arith.constant 0 : index
      %c0_20 = arith.constant 0 : index
      %25 = vector.load %arg4[%c0_19, %c0_20] : memref<96x96xbf16, #tpu.memory_space<vmem>>, vector<96x96xbf16>
      %cst_21 = arith.constant dense<0.000000e+00> : vector<2x96xf32>
      %26 = tpu.matmul %12, %25, %cst_21 {dimension_numbers = #tpu.dot_dimension_numbers<[1], [0], [0], [1], [0, 0, 1, 1], [], []>} : vector<2x96xbf16>, vector<96x96xbf16>, vector<2x96xf32> -> vector<2x96xf32>
      %c0_22 = arith.constant 0 : index
      %c0_23 = arith.constant 0 : index
      %27 = vector.load %arg7[%c0_22, %c0_23] : memref<1x96xf32, #tpu.memory_space<vmem>>, vector<1x96xf32>
      %28 = vector.broadcast %27 : vector<1x96xf32> to vector<2x96xf32>
      %29 = arith.addf %26, %28 : vector<2x96xf32>
      %cst_24 = arith.constant 0.102062076 : f32
      %30 = vector.broadcast %cst_24 : f32 to vector<2x96xf32>
      %31 = arith.mulf %29, %30 : vector<2x96xf32>
      %c7 = arith.constant 7 : index
      %c0_25 = arith.constant 0 : index
      %32 = vector.load %arg2[%c7, %c0_25] : memref<8x8xf32, #tpu.memory_space<vmem>>, vector<1x8xf32>
      %c0_26 = arith.constant 0 : index
      %c0_27 = arith.constant 0 : index
      %33 = vector.load %arg3[%c0_26, %c0_27] : memref<2x8xf32, #tpu.memory_space<vmem>>, vector<2x8xf32>
      %34 = vector.broadcast %32 : vector<1x8xf32> to vector<2x8xf32>
      %35 = arith.addf %34, %33 : vector<2x8xf32>
      %36 = vector.shape_cast %31 : vector<2x96xf32> to vector<2x1x96xf32>
      %37 = vector.broadcast %36 : vector<2x1x96xf32> to vector<2x8x96xf32>
      %38 = arith.mulf %37, %18 : vector<2x8x96xf32>
      %cst_28 = arith.constant dense<0.000000e+00> : vector<2x8xf32>
      %39 = vector.multi_reduction <add>, %38, %cst_28 [2] : vector<2x8x96xf32> to vector<2x8xf32>
      %40 = arith.addf %39, %35 : vector<2x8xf32>
      %cst_29 = arith.constant dense<0xFF800000> : vector<2xf32>
      %41 = vector.multi_reduction <maximumf>, %40, %cst_29 [1] : vector<2x8xf32> to vector<2xf32>
      %42 = vector.shape_cast %41 : vector<2xf32> to vector<2x1xf32>
      %43 = vector.broadcast %42 : vector<2x1xf32> to vector<2x8xf32>
      %44 = arith.subf %40, %43 : vector<2x8xf32>
      %45 = math.exp %44 : vector<2x8xf32>
      %cst_30 = arith.constant dense<0.000000e+00> : vector<2xf32>
      %46 = vector.multi_reduction <add>, %45, %cst_30 [1] : vector<2x8xf32> to vector<2xf32>
      %47 = vector.shape_cast %46 : vector<2xf32> to vector<2x1xf32>
      %48 = tpu.reciprocal %47 {approx = true} : vector<2x1xf32> -> vector<2x1xf32>
      %49 = vector.broadcast %48 : vector<2x1xf32> to vector<2x8xf32>
      %50 = arith.mulf %45, %49 : vector<2x8xf32>
      %51 = vector.shape_cast %50 : vector<2x8xf32> to vector<2x8x1xf32>
      %52 = vector.broadcast %51 : vector<2x8x1xf32> to vector<2x8x96xf32>
      %53 = arith.mulf %52, %24 : vector<2x8x96xf32>
      %cst_31 = arith.constant dense<0.000000e+00> : vector<2x96xf32>
      %54 = vector.multi_reduction <add>, %53, %cst_31 [1] : vector<2x8x96xf32> to vector<2x96xf32>
      %55 = arith.truncf %54 : vector<2x96xf32> to vector<2x96xbf16>
      %c0_32 = arith.constant 0 : index
      %c0_33 = arith.constant 0 : index
      %56 = vector.load %arg10[%c0_32, %c0_33] : memref<96x96xbf16, #tpu.memory_space<vmem>>, vector<96x96xbf16>
      %cst_34 = arith.constant dense<0.000000e+00> : vector<2x96xf32>
      %57 = tpu.matmul %55, %56, %cst_34 {dimension_numbers = #tpu.dot_dimension_numbers<[1], [0], [0], [1], [0, 0, 1, 1], [], []>} : vector<2x96xbf16>, vector<96x96xbf16>, vector<2x96xf32> -> vector<2x96xf32>
      %c0_35 = arith.constant 0 : index
      %c0_36 = arith.constant 0 : index
      %58 = vector.load %arg11[%c0_35, %c0_36] : memref<1x96xf32, #tpu.memory_space<vmem>>, vector<1x96xf32>
      %59 = vector.broadcast %58 : vector<1x96xf32> to vector<2x96xf32>
      %60 = arith.addf %57, %59 : vector<2x96xf32>
      %61 = arith.addf %11, %60 : vector<2x96xf32>
      %cst_37 = arith.constant dense<0.000000e+00> : vector<2xf32>
      %62 = vector.multi_reduction <add>, %61, %cst_37 [1] : vector<2x96xf32> to vector<2xf32>
      %63 = vector.shape_cast %62 : vector<2xf32> to vector<2x1xf32>
      %cst_38 = arith.constant 9.600000e+01 : f32
      %64 = vector.broadcast %cst_38 : f32 to vector<2x1xf32>
      %65 = arith.divf %63, %64 : vector<2x1xf32>
      %66 = vector.broadcast %65 : vector<2x1xf32> to vector<2x96xf32>
      %67 = arith.subf %61, %66 : vector<2x96xf32>
      %68 = arith.mulf %67, %67 : vector<2x96xf32>
      %cst_39 = arith.constant dense<0.000000e+00> : vector<2xf32>
      %69 = vector.multi_reduction <add>, %68, %cst_39 [1] : vector<2x96xf32> to vector<2xf32>
      %70 = vector.shape_cast %69 : vector<2xf32> to vector<2x1xf32>
      %cst_40 = arith.constant 9.600000e+01 : f32
      %71 = vector.broadcast %cst_40 : f32 to vector<2x1xf32>
      %72 = arith.divf %70, %71 : vector<2x1xf32>
      %73 = vector.broadcast %65 : vector<2x1xf32> to vector<2x96xf32>
      %74 = arith.subf %61, %73 : vector<2x96xf32>
      %cst_41 = arith.constant 9.99999974E-6 : f32
      %75 = vector.broadcast %cst_41 : f32 to vector<2x1xf32>
      %76 = arith.addf %72, %75 : vector<2x1xf32>
      %77 = math.rsqrt %76 : vector<2x1xf32>
      %78 = vector.broadcast %77 : vector<2x1xf32> to vector<2x96xf32>
      %79 = arith.mulf %74, %78 : vector<2x96xf32>
      %c0_42 = arith.constant 0 : index
      %c0_43 = arith.constant 0 : index
      %80 = vector.load %arg12[%c0_42, %c0_43] : memref<1x96xf32, #tpu.memory_space<vmem>>, vector<1x96xf32>
      %81 = vector.broadcast %80 : vector<1x96xf32> to vector<2x96xf32>
      %82 = arith.mulf %79, %81 : vector<2x96xf32>
      %c0_44 = arith.constant 0 : index
      %c0_45 = arith.constant 0 : index
      %83 = vector.load %arg13[%c0_44, %c0_45] : memref<1x96xf32, #tpu.memory_space<vmem>>, vector<1x96xf32>
      %84 = vector.broadcast %83 : vector<1x96xf32> to vector<2x96xf32>
      %85 = arith.addf %82, %84 : vector<2x96xf32>
      %86 = arith.truncf %85 : vector<2x96xf32> to vector<2x96xbf16>
      %c0_46 = arith.constant 0 : index
      %c0_47 = arith.constant 0 : index
      %87 = vector.load %arg14[%c0_46, %c0_47] : memref<96x96xbf16, #tpu.memory_space<vmem>>, vector<96x96xbf16>
      %cst_48 = arith.constant dense<0.000000e+00> : vector<2x96xf32>
      %88 = tpu.matmul %86, %87, %cst_48 {dimension_numbers = #tpu.dot_dimension_numbers<[1], [0], [0], [1], [0, 0, 1, 1], [], []>} : vector<2x96xbf16>, vector<96x96xbf16>, vector<2x96xf32> -> vector<2x96xf32>
      %c0_49 = arith.constant 0 : index
      %c0_50 = arith.constant 0 : index
      %89 = vector.load %arg15[%c0_49, %c0_50] : memref<1x96xf32, #tpu.memory_space<vmem>>, vector<1x96xf32>
      %90 = vector.broadcast %89 : vector<1x96xf32> to vector<2x96xf32>
      %91 = arith.addf %88, %90 : vector<2x96xf32>
      %cst_51 = arith.constant 0.000000e+00 : f32
      %92 = vector.broadcast %cst_51 : f32 to vector<2x96xf32>
      %93 = arith.maximumf %91, %92 : vector<2x96xf32>
      %94 = arith.truncf %93 : vector<2x96xf32> to vector<2x96xbf16>
      %c0_52 = arith.constant 0 : index
      %c0_53 = arith.constant 0 : index
      %95 = vector.load %arg16[%c0_52, %c0_53] : memref<96x96xbf16, #tpu.memory_space<vmem>>, vector<96x96xbf16>
      %cst_54 = arith.constant dense<0.000000e+00> : vector<2x96xf32>
      %96 = tpu.matmul %94, %95, %cst_54 {dimension_numbers = #tpu.dot_dimension_numbers<[1], [0], [0], [1], [0, 0, 1, 1], [], []>} : vector<2x96xbf16>, vector<96x96xbf16>, vector<2x96xf32> -> vector<2x96xf32>
      %c0_55 = arith.constant 0 : index
      %c0_56 = arith.constant 0 : index
      %97 = vector.load %arg17[%c0_55, %c0_56] : memref<1x96xf32, #tpu.memory_space<vmem>>, vector<1x96xf32>
      %98 = vector.broadcast %97 : vector<1x96xf32> to vector<2x96xf32>
      %99 = arith.addf %96, %98 : vector<2x96xf32>
      %100 = arith.addf %85, %99 : vector<2x96xf32>
      %cst_57 = arith.constant dense<0.000000e+00> : vector<2xf32>
      %101 = vector.multi_reduction <add>, %100, %cst_57 [1] : vector<2x96xf32> to vector<2xf32>
      %102 = vector.shape_cast %101 : vector<2xf32> to vector<2x1xf32>
      %cst_58 = arith.constant 9.600000e+01 : f32
      %103 = vector.broadcast %cst_58 : f32 to vector<2x1xf32>
      %104 = arith.divf %102, %103 : vector<2x1xf32>
      %105 = vector.broadcast %104 : vector<2x1xf32> to vector<2x96xf32>
      %106 = arith.subf %100, %105 : vector<2x96xf32>
      %107 = arith.mulf %106, %106 : vector<2x96xf32>
      %cst_59 = arith.constant dense<0.000000e+00> : vector<2xf32>
      %108 = vector.multi_reduction <add>, %107, %cst_59 [1] : vector<2x96xf32> to vector<2xf32>
      %109 = vector.shape_cast %108 : vector<2xf32> to vector<2x1xf32>
      %cst_60 = arith.constant 9.600000e+01 : f32
      %110 = vector.broadcast %cst_60 : f32 to vector<2x1xf32>
      %111 = arith.divf %109, %110 : vector<2x1xf32>
      %112 = vector.broadcast %104 : vector<2x1xf32> to vector<2x96xf32>
      %113 = arith.subf %100, %112 : vector<2x96xf32>
      %cst_61 = arith.constant 9.99999974E-6 : f32
      %114 = vector.broadcast %cst_61 : f32 to vector<2x1xf32>
      %115 = arith.addf %111, %114 : vector<2x1xf32>
      %116 = math.rsqrt %115 : vector<2x1xf32>
      %117 = vector.broadcast %116 : vector<2x1xf32> to vector<2x96xf32>
      %118 = arith.mulf %113, %117 : vector<2x96xf32>
      %c0_62 = arith.constant 0 : index
      %c0_63 = arith.constant 0 : index
      %119 = vector.load %arg18[%c0_62, %c0_63] : memref<1x96xf32, #tpu.memory_space<vmem>>, vector<1x96xf32>
      %120 = vector.broadcast %119 : vector<1x96xf32> to vector<2x96xf32>
      %121 = arith.mulf %118, %120 : vector<2x96xf32>
      %c0_64 = arith.constant 0 : index
      %c0_65 = arith.constant 0 : index
      %122 = vector.load %arg19[%c0_64, %c0_65] : memref<1x96xf32, #tpu.memory_space<vmem>>, vector<1x96xf32>
      %123 = vector.broadcast %122 : vector<1x96xf32> to vector<2x96xf32>
      %124 = arith.addf %121, %123 : vector<2x96xf32>
      %125 = arith.truncf %124 : vector<2x96xf32> to vector<2x96xbf16>
      %c0_66 = arith.constant 0 : index
      %c0_67 = arith.constant 0 : index
      %126 = vector.load %arg20[%c0_66, %c0_67] : memref<96x32xbf16, #tpu.memory_space<vmem>>, vector<96x32xbf16>
      %cst_68 = arith.constant dense<0.000000e+00> : vector<2x32xf32>
      %127 = tpu.matmul %125, %126, %cst_68 {dimension_numbers = #tpu.dot_dimension_numbers<[1], [0], [0], [1], [0, 0, 1, 1], [], []>} : vector<2x96xbf16>, vector<96x32xbf16>, vector<2x32xf32> -> vector<2x32xf32>
      %c0_69 = arith.constant 0 : index
      %c0_70 = arith.constant 0 : index
      %128 = vector.load %arg21[%c0_69, %c0_70] : memref<1x32xf32, #tpu.memory_space<vmem>>, vector<1x32xf32>
      %129 = vector.broadcast %128 : vector<1x32xf32> to vector<2x32xf32>
      %130 = arith.addf %127, %129 : vector<2x32xf32>
      %131 = arith.truncf %130 : vector<2x32xf32> to vector<2x32xbf16>
      %c0_71 = arith.constant 0 : index
      %c0_72 = arith.constant 0 : index
      %132 = vector.load %arg24[%c0_71, %c0_72] : memref<2x32xbf16, #tpu.memory_space<vmem>>, vector<2x32xbf16>
      tpu.vector_store %arg24[%c0_71, %c0_72], %131 {strides = array<i32>} : memref<2x32xbf16, #tpu.memory_space<vmem>>, vector<2x32xbf16>,
    } else {
    }
    %c0 = arith.constant 0 : index
    %c0_1 = arith.constant 0 : index
    %3 = vector.load %arg24[%c0, %c0_1] : memref<2x32xbf16, #tpu.memory_space<vmem>>, vector<2x32xbf16>
    %c0_2 = arith.constant 0 : index
    %c0_3 = arith.constant 0 : index
    %4 = vector.load %arg22[%c0_2, %c0_3] : memref<64x32xbf16, #tpu.memory_space<vmem>>, vector<64x32xbf16>
    %cst = arith.constant dense<0.000000e+00> : vector<2x64xf32>
    %5 = tpu.matmul %3, %4, %cst {dimension_numbers = #tpu.dot_dimension_numbers<[1], [1], [0], [0], [0, 0, 1, 0], [], []>} : vector<2x32xbf16>, vector<64x32xbf16>, vector<2x64xf32> -> vector<2x64xf32>
    %c0_4 = arith.constant 0 : index
    %c0_5 = arith.constant 0 : index
    %6 = vector.load %arg23[%c0_4, %c0_5] : memref<2x64xf32, #tpu.memory_space<vmem>>, vector<2x64xf32>
    tpu.vector_store %arg23[%c0_4, %c0_5], %5 {strides = array<i32>} : memref<2x64xf32, #tpu.memory_space<vmem>>, vector<2x64xf32>,
    return
  }
  func.func @transform_0(%arg0: i32) -> (i32, i32, i32) {
    %c0_i32 = arith.constant 0 : i32
    %c0_i32_0 = arith.constant 0 : i32
    %c0_i32_1 = arith.constant 0 : i32
    %c0_i32_2 = arith.constant 0 : i32
    return %c0_i32, %c0_i32_0, %c0_i32_1 : i32, i32, i32
  }
  func.func @transform_1(%arg0: i32) -> (i32, i32) {
    %c0_i32 = arith.constant 0 : i32
    %c0_i32_0 = arith.constant 0 : i32
    %c0_i32_1 = arith.constant 0 : i32
    return %c0_i32, %c0_i32_0 : i32, i32
  }
  func.func @transform_2(%arg0: i32) -> (i32, i32) {
    %c0_i32 = arith.constant 0 : i32
    %c0_i32_0 = arith.constant 0 : i32
    %c0_i32_1 = arith.constant 0 : i32
    return %c0_i32, %c0_i32_0 : i32, i32
  }
  func.func @transform_3(%arg0: i32) -> (i32, i32) {
    %c0_i32 = arith.constant 0 : i32
    %c0_i32_0 = arith.constant 0 : i32
    %c0_i32_1 = arith.constant 0 : i32
    return %c0_i32, %c0_i32_0 : i32, i32
  }
  func.func @transform_4(%arg0: i32) -> (i32, i32) {
    %c0_i32 = arith.constant 0 : i32
    %c0_i32_0 = arith.constant 0 : i32
    %c0_i32_1 = arith.constant 0 : i32
    return %c0_i32, %c0_i32_0 : i32, i32
  }
  func.func @transform_5(%arg0: i32) -> (i32, i32) {
    %c0_i32 = arith.constant 0 : i32
    %c0_i32_0 = arith.constant 0 : i32
    %c0_i32_1 = arith.constant 0 : i32
    return %c0_i32, %c0_i32_0 : i32, i32
  }
  func.func @transform_6(%arg0: i32) -> (i32, i32) {
    %c0_i32 = arith.constant 0 : i32
    %c0_i32_0 = arith.constant 0 : i32
    %c0_i32_1 = arith.constant 0 : i32
    return %c0_i32, %c0_i32_0 : i32, i32
  }
  func.func @transform_7(%arg0: i32) -> (i32, i32) {
    %c0_i32 = arith.constant 0 : i32
    %c0_i32_0 = arith.constant 0 : i32
    %c0_i32_1 = arith.constant 0 : i32
    return %c0_i32, %c0_i32_0 : i32, i32
  }
  func.func @transform_8(%arg0: i32) -> (i32, i32) {
    %c0_i32 = arith.constant 0 : i32
    %c0_i32_0 = arith.constant 0 : i32
    %c0_i32_1 = arith.constant 0 : i32
    return %c0_i32, %c0_i32_0 : i32, i32
  }
  func.func @transform_9(%arg0: i32) -> (i32, i32) {
    %c0_i32 = arith.constant 0 : i32
    %c0_i32_0 = arith.constant 0 : i32
    %c0_i32_1 = arith.constant 0 : i32
    return %c0_i32, %c0_i32_0 : i32, i32
  }
  func.func @transform_10(%arg0: i32) -> (i32, i32) {
    %c0_i32 = arith.constant 0 : i32
    %c0_i32_0 = arith.constant 0 : i32
    %c0_i32_1 = arith.constant 0 : i32
    return %c0_i32, %c0_i32_0 : i32, i32
  }
  func.func @transform_11(%arg0: i32) -> (i32, i32) {
    %c0_i32 = arith.constant 0 : i32
    %c0_i32_0 = arith.constant 0 : i32
    %c0_i32_1 = arith.constant 0 : i32
    return %c0_i32, %c0_i32_0 : i32, i32
  }
  func.func @transform_12(%arg0: i32) -> (i32, i32) {
    %c0_i32 = arith.constant 0 : i32
    %c0_i32_0 = arith.constant 0 : i32
    %c0_i32_1 = arith.constant 0 : i32
    return %c0_i32, %c0_i32_0 : i32, i32
  }
  func.func @transform_13(%arg0: i32) -> (i32, i32) {
    %c0_i32 = arith.constant 0 : i32
    %c0_i32_0 = arith.constant 0 : i32
    %c0_i32_1 = arith.constant 0 : i32
    return %c0_i32, %c0_i32_0 : i32, i32
  }
  func.func @transform_14(%arg0: i32) -> (i32, i32) {
    %c0_i32 = arith.constant 0 : i32
    %c0_i32_0 = arith.constant 0 : i32
    %c0_i32_1 = arith.constant 0 : i32
    return %c0_i32, %c0_i32_0 : i32, i32
  }
  func.func @transform_15(%arg0: i32) -> (i32, i32) {
    %c0_i32 = arith.constant 0 : i32
    %c0_i32_0 = arith.constant 0 : i32
    %c0_i32_1 = arith.constant 0 : i32
    return %c0_i32, %c0_i32_0 : i32, i32
  }
  func.func @transform_16(%arg0: i32) -> (i32, i32) {
    %c0_i32 = arith.constant 0 : i32
    %c0_i32_0 = arith.constant 0 : i32
    %c0_i32_1 = arith.constant 0 : i32
    return %c0_i32, %c0_i32_0 : i32, i32
  }
  func.func @transform_17(%arg0: i32) -> (i32, i32) {
    %c0_i32 = arith.constant 0 : i32
    %c0_i32_0 = arith.constant 0 : i32
    %c0_i32_1 = arith.constant 0 : i32
    return %c0_i32, %c0_i32_0 : i32, i32
  }
  func.func @transform_18(%arg0: i32) -> (i32, i32) {
    %c0_i32 = arith.constant 0 : i32
    %c0_i32_0 = arith.constant 0 : i32
    %c0_i32_1 = arith.constant 0 : i32
    return %c0_i32, %c0_i32_0 : i32, i32
  }
  func.func @transform_19(%arg0: i32) -> (i32, i32) {
    %c0_i32 = arith.constant 0 : i32
    %c0_i32_0 = arith.constant 0 : i32
    %c0_i32_1 = arith.constant 0 : i32
    return %c0_i32, %c0_i32_0 : i32, i32
  }
  func.func @transform_20(%arg0: i32) -> (i32, i32) {
    %c0_i32 = arith.constant 0 : i32
    %c0_i32_0 = arith.constant 0 : i32
    %c0_i32_1 = arith.constant 0 : i32
    return %c0_i32, %c0_i32_0 : i32, i32
  }
  func.func @transform_21(%arg0: i32) -> (i32, i32) {
    %c0_i32 = arith.constant 0 : i32
    %c0_i32_0 = arith.constant 0 : i32
    return %arg0, %c0_i32 : i32, i32
  }
  func.func @transform_22(%arg0: i32) -> (i32, i32) {
    %c0_i32 = arith.constant 0 : i32
    %c0_i32_0 = arith.constant 0 : i32
    return %c0_i32, %arg0 : i32, i32
  }
}

</mosaic_0001>

<llo_original>
// kernel: multi_sequence_forward.2
$region0: #{multi_sequence_forward.2}
  #allocation0 [shape = 'u32[]', space=smem, size = 0x4, offset = 0x4, fixed_abs, tag = 'smem constant byte address 0x4 - core index']
  #allocation1 [shape = 'u32[144,128]{1,0:T(1,128)}', space=vmem, size = 0x12000, scoped, tag = 'internal scratch']
  %s0 = inlined_call_operand.vmem [shape: f32[3,2,8,32], index: 0, kind: input, shape index: {}]
  %s1 = inlined_call_operand.vmem [shape: f32[8,8], index: 1, kind: input, shape index: {}]
  %s2 = inlined_call_operand.vmem [shape: f32[2,8], index: 2, kind: input, shape index: {}]
  %s3 = inlined_call_operand.vmem [shape: bf16[3,32,32], index: 3, kind: input, shape index: {}]
  %s4 = inlined_call_operand.vmem [shape: bf16[3,32,32], index: 4, kind: input, shape index: {}]
  %s5 = inlined_call_operand.vmem [shape: bf16[3,32,32], index: 5, kind: input, shape index: {}]
  %s6 = inlined_call_operand.vmem [shape: f32[3,1,32], index: 6, kind: input, shape index: {}]
  %s7 = inlined_call_operand.vmem [shape: f32[3,1,32], index: 7, kind: input, shape index: {}]
  %s8 = inlined_call_operand.vmem [shape: f32[3,1,32], index: 8, kind: input, shape index: {}]
  %s9 = inlined_call_operand.vmem [shape: bf16[3,32,32], index: 9, kind: input, shape index: {}]
  %s10 = inlined_call_operand.vmem [shape: f32[3,1,32], index: 10, kind: input, shape index: {}]
  %s11 = inlined_call_operand.vmem [shape: f32[3,1,32], index: 11, kind: input, shape index: {}]
  %s12 = inlined_call_operand.vmem [shape: f32[3,1,32], index: 12, kind: input, shape index: {}]
  %s13 = inlined_call_operand.vmem [shape: bf16[3,32,32], index: 13, kind: input, shape index: {}]
  %s14 = inlined_call_operand.vmem [shape: f32[3,1,32], index: 14, kind: input, shape index: {}]
  %s15 = inlined_call_operand.vmem [shape: bf16[3,32,32], index: 15, kind: input, shape index: {}]
  %s16 = inlined_call_operand.vmem [shape: f32[3,1,32], index: 16, kind: input, shape index: {}]
  %s17 = inlined_call_operand.vmem [shape: f32[3,1,32], index: 17, kind: input, shape index: {}]
  %s18 = inlined_call_operand.vmem [shape: f32[3,1,32], index: 18, kind: input, shape index: {}]
  %s19 = inlined_call_operand.vmem [shape: f32[3,2,8,32], index: 19, kind: output, shape index: {}]
  %s20 = sld [smem:[#allocation0]]
  $region109: #{multi_sequence_forward.2} parent=0
    _
  %s22 = ssub.s32 1, %s20
  %s23 = scalar_select 0, %s22, %s20
  loop: start=0, step=1, limit=5
  $region2: #{multi_sequence_forward.2} parent=0 // loop_pre_header
    _
  $region3: #{multi_sequence_forward.2} parent=0 // loop_header
    %s25 = sphi 0, %s29
    %p26 = scmp.ge.s32.totalorder %s25, 5
    %s35 = sphi 0, %s37
    %s38 = sphi 0, %s35
    %s39 = sphi 0, %s38
    %s55 = sphi 0, %s39
    %s59 = sphi 0, %s59
    %s61 = sphi 0, %s59
    %s62 = sphi 0, %s61
    %s76 = sphi 0, %s62
    %s80 = sphi 0, %s80
    %s82 = sphi 0, %s80
    %s83 = sphi 0, %s82
    %s97 = sphi 0, %s83
    %s103 = sphi 0, %s105
    %s106 = sphi 0, %s103
    %s107 = sphi 0, %s106
    %s123 = sphi 0, %s107
    %s129 = sphi 0, %s131
    %s132 = sphi 0, %s129
    %s133 = sphi 0, %s132
    %s149 = sphi 0, %s133
    %s155 = sphi 0, %s157
    %s158 = sphi 0, %s155
    %s159 = sphi 0, %s158
    %s175 = sphi 0, %s159
    %s181 = sphi 0, %s183
    %s184 = sphi 0, %s181
    %s185 = sphi 0, %s184
    %s201 = sphi 0, %s185
    %s207 = sphi 0, %s209
    %s210 = sphi 0, %s207
    %s211 = sphi 0, %s210
    %s227 = sphi 0, %s211
    %s233 = sphi 0, %s235
    %s236 = sphi 0, %s233
    %s237 = sphi 0, %s236
    %s253 = sphi 0, %s237
    %s259 = sphi 0, %s261
    %s262 = sphi 0, %s259
    %s263 = sphi 0, %s262
    %s279 = sphi 0, %s263
    %s285 = sphi 0, %s287
    %s288 = sphi 0, %s285
    %s289 = sphi 0, %s288
    %s305 = sphi 0, %s289
    %s311 = sphi 0, %s313
    %s314 = sphi 0, %s311
    %s315 = sphi 0, %s314
    %s331 = sphi 0, %s315
    %s337 = sphi 0, %s339
    %s340 = sphi 0, %s337
    %s341 = sphi 0, %s340
    %s357 = sphi 0, %s341
    %s363 = sphi 0, %s365
    %s366 = sphi 0, %s363
    %s367 = sphi 0, %s366
    %s383 = sphi 0, %s367
    %s389 = sphi 0, %s391
    %s392 = sphi 0, %s389
    %s393 = sphi 0, %s392
    %s409 = sphi 0, %s393
    %s415 = sphi 0, %s417
    %s418 = sphi 0, %s415
    %s419 = sphi 0, %s418
    %s435 = sphi 0, %s419
    %s441 = sphi 0, %s443
    %s444 = sphi 0, %s441
    %s445 = sphi 0, %s444
    %s461 = sphi 0, %s445
    %s467 = sphi 0, %s469
    %s470 = sphi 0, %s467
    %s471 = sphi 0, %s470
    %s487 = sphi 0, %s471
    %s493 = sphi 0, %s495
    %s496 = sphi 0, %s493
    %s497 = sphi 0, %s496
    %s513 = sphi 0, %s497
    %s519 = sphi 0, %s521
    %s522 = sphi 0, %s519
    %s523 = sphi 0, %s522
    %s539 = sphi 0, %s523
  $region4: #{multi_sequence_forward.2} parent=0 // loop_header_branch
    %28 = sbr.rel (%p26) target = $region8
  $region5: #{multi_sequence_forward.2} parent=0 // loop_body
    %s30 = ssub.s32 %s25, 1
    %s31 = ssub.s32 %s25, 2
    %s32 = sadd.s32 %s25, 1
    %s33 = ssub.s32 %s25, %s32
    %p34 = scmp.eq.s32.totalorder %s33, 0
    %s36 = sadd.s32 %s35, 1
    %s37 = scalar_select %p34, %s35, %s36
    %p40 = pneg %p34
    %p41 = scmp.eq.s32.totalorder %s25, 2
    %p42 = por %p40, %p41
    %p43 = scmp.ne.s32.totalorder %s35, %s38
    %p44 = scmp.eq.s32.totalorder %s25, 0
    %p45 = por %p43, %p44
    %p46 = scmp.ne.s32.totalorder %s35, %s38
    %p47 = scmp.eq.s32.totalorder %s30, 2
    %p48 = por %p46, %p47
    %p49 = scmp.ne.s32.totalorder %s38, %s39
    %p50 = scmp.eq.s32.totalorder %s30, 0
    %p51 = por %p49, %p50
    %p52 = scmp.ne.s32.totalorder %s38, %s39
    %p53 = scmp.eq.s32.totalorder %s31, 2
    %p54 = por %p52, %p53
    %p56 = scmp.ne.s32.totalorder %s39, %s55
    %p57 = scmp.eq.s32.totalorder %s31, 0
    %p58 = por %p56, %p57
    %s60 = sadd.s32 %s59, 1
    %p63 = scmp.eq.s32.totalorder %s25, 2
    %p64 = scmp.ne.s32.totalorder %s59, %s61
    %p65 = scmp.eq.s32.totalorder %s25, 0
    %p66 = por %p64, %p65
    %p67 = scmp.ne.s32.totalorder %s59, %s61
    %p68 = scmp.eq.s32.totalorder %s30, 2
    %p69 = por %p67, %p68
    %p70 = scmp.ne.s32.totalorder %s61, %s62
    %p71 = scmp.eq.s32.totalorder %s30, 0
    %p72 = por %p70, %p71
    %p73 = scmp.ne.s32.totalorder %s61, %s62
    %p74 = scmp.eq.s32.totalorder %s31, 2
    %p75 = por %p73, %p74
    %p77 = scmp.ne.s32.totalorder %s62, %s76
    %p78 = scmp.eq.s32.totalorder %s31, 0
    %p79 = por %p77, %p78
    %s81 = sadd.s32 %s80, 1
    %p84 = scmp.eq.s32.totalorder %s25, 2
    %p85 = scmp.ne.s32.totalorder %s80, %s82
    %p86 = scmp.eq.s32.totalorder %s25, 0
    %p87 = por %p85, %p86
    %p88 = scmp.ne.s32.totalorder %s80, %s82
    %p89 = scmp.eq.s32.totalorder %s30, 2
    %p90 = por %p88, %p89
    %p91 = scmp.ne.s32.totalorder %s82, %s83
    %p92 = scmp.eq.s32.totalorder %s30, 0
    %p93 = por %p91, %p92
    %p94 = scmp.ne.s32.totalorder %s82, %s83
    %p95 = scmp.eq.s32.totalorder %s31, 2
    %p96 = por %p94, %p95
    %p98 = scmp.ne.s32.totalorder %s83, %s97
    %p99 = scmp.eq.s32.totalorder %s31, 0
    %p100 = por %p98, %p99
    %s101 = ssub.s32 %s25, %s32
    %p102 = scmp.eq.s32.totalorder %s101, 0
    %s104 = sadd.s32 %s103, 1
    %s105 = scalar_select %p102, %s103, %s104
    %p108 = pneg %p102
    %p109 = scmp.eq.s32.totalorder %s25, 2
    %p110 = por %p108, %p109
    %p111 = scmp.ne.s32.totalorder %s103, %s106
    %p112 = scmp.eq.s32.totalorder %s25, 0
    %p113 = por %p111, %p112
    %p114 = scmp.ne.s32.totalorder %s103, %s106
    %p115 = scmp.eq.s32.totalorder %s30, 2
    %p116 = por %p114, %p115
    %p117 = scmp.ne.s32.totalorder %s106, %s107
    %p118 = scmp.eq.s32.totalorder %s30, 0
    %p119 = por %p117, %p118
    %p120 = scmp.ne.s32.totalorder %s106, %s107
    %p121 = scmp.eq.s32.totalorder %s31, 2
    %p122 = por %p120, %p121
    %p124 = scmp.ne.s32.totalorder %s107, %s123
    %p125 = scmp.eq.s32.totalorder %s31, 0
    %p126 = por %p124, %p125
    %s127 = ssub.s32 %s25, %s32
    %p128 = scmp.eq.s32.totalorder %s127, 0
    %s130 = sadd.s32 %s129, 1
    %s131 = scalar_select %p128, %s129, %s130
    %p134 = pneg %p128
    %p135 = scmp.eq.s32.totalorder %s25, 2
    %p136 = por %p134, %p135
    %p137 = scmp.ne.s32.totalorder %s129, %s132
    %p138 = scmp.eq.s32.totalorder %s25, 0
    %p139 = por %p137, %p138
    %p140 = scmp.ne.s32.totalorder %s129, %s132
    %p141 = scmp.eq.s32.totalorder %s30, 2
    %p142 = por %p140, %p141
    %p143 = scmp.ne.s32.totalorder %s132, %s133
    %p144 = scmp.eq.s32.totalorder %s30, 0
    %p145 = por %p143, %p144
    %p146 = scmp.ne.s32.totalorder %s132, %s133
    %p147 = scmp.eq.s32.totalorder %s31, 2
    %p148 = por %p146, %p147
    %p150 = scmp.ne.s32.totalorder %s133, %s149
    %p151 = scmp.eq.s32.totalorder %s31, 0
    %p152 = por %p150, %p151
    %s153 = ssub.s32 %s25, %s32
    %p154 = scmp.eq.s32.totalorder %s153, 0
    %s156 = sadd.s32 %s155, 1
    %s157 = scalar_select %p154, %s155, %s156
    %p160 = pneg %p154
    %p161 = scmp.eq.s32.totalorder %s25, 2
    %p162 = por %p160, %p161
    %p163 = scmp.ne.s32.totalorder %s155, %s158
    %p164 = scmp.eq.s32.totalorder %s25, 0
    %p165 = por %p163, %p164
    %p166 = scmp.ne.s32.totalorder %s155, %s158
    %p167 = scmp.eq.s32.totalorder %s30, 2
    %p168 = por %p166, %p167
    %p169 = scmp.ne.s32.totalorder %s158, %s159
    %p170 = scmp.eq.s32.totalorder %s30, 0
    %p171 = por %p169, %p170
    %p172 = scmp.ne.s32.totalorder %s158, %s159
    %p173 = scmp.eq.s32.totalorder %s31, 2
    %p174 = por %p172, %p173
    %p176 = scmp.ne.s32.totalorder %s159, %s175
    %p177 = scmp.eq.s32.totalorder %s31, 0
    %p178 = por %p176, %p177
    %s179 = ssub.s32 %s25, %s32
    %p180 = scmp.eq.s32.totalorder %s179, 0
    %s182 = sadd.s32 %s181, 1
    %s183 = scalar_select %p180, %s181, %s182
    %p186 = pneg %p180
    %p187 = scmp.eq.s32.totalorder %s25, 2
    %p188 = por %p186, %p187
    %p189 = scmp.ne.s32.totalorder %s181, %s184
    %p190 = scmp.eq.s32.totalorder %s25, 0
    %p191 = por %p189, %p190
    %p192 = scmp.ne.s32.totalorder %s181, %s184
    %p193 = scmp.eq.s32.totalorder %s30, 2
    %p194 = por %p192, %p193
    %p195 = scmp.ne.s32.totalorder %s184, %s185
    %p196 = scmp.eq.s32.totalorder %s30, 0
    %p197 = por %p195, %p196
    %p198 = scmp.ne.s32.totalorder %s184, %s185
    %p199 = scmp.eq.s32.totalorder %s31, 2
    %p200 = por %p198, %p199
    %p202 = scmp.ne.s32.totalorder %s185, %s201
    %p203 = scmp.eq.s32.totalorder %s31, 0
    %p204 = por %p202, %p203
    %s205 = ssub.s32 %s25, %s32
    %p206 = scmp.eq.s32.totalorder %s205, 0
    %s208 = sadd.s32 %s207, 1
    %s209 = scalar_select %p206, %s207, %s208
    %p212 = pneg %p206
    %p213 = scmp.eq.s32.totalorder %s25, 2
    %p214 = por %p212, %p213
    %p215 = scmp.ne.s32.totalorder %s207, %s210
    %p216 = scmp.eq.s32.totalorder %s25, 0
    %p217 = por %p215, %p216
    %p218 = scmp.ne.s32.totalorder %s207, %s210
    %p219 = scmp.eq.s32.totalorder %s30, 2
    %p220 = por %p218, %p219
    %p221 = scmp.ne.s32.totalorder %s210, %s211
    %p222 = scmp.eq.s32.totalorder %s30, 0
    %p223 = por %p221, %p222
    %p224 = scmp.ne.s32.totalorder %s210, %s211
    %p225 = scmp.eq.s32.totalorder %s31, 2
    %p226 = por %p224, %p225
    %p228 = scmp.ne.s32.totalorder %s211, %s227
    %p229 = scmp.eq.s32.totalorder %s31, 0
    %p230 = por %p228, %p229
    %s231 = ssub.s32 %s25, %s32
    %p232 = scmp.eq.s32.totalorder %s231, 0
    %s234 = sadd.s32 %s233, 1
    %s235 = scalar_select %p232, %s233, %s234
    %p238 = pneg %p232
    %p239 = scmp.eq.s32.totalorder %s25, 2
    %p240 = por %p238, %p239
    %p241 = scmp.ne.s32.totalorder %s233, %s236
    %p242 = scmp.eq.s32.totalorder %s25, 0
    %p243 = por %p241, %p242
    %p244 = scmp.ne.s32.totalorder %s233, %s236
    %p245 = scmp.eq.s32.totalorder %s30, 2
    %p246 = por %p244, %p245
    %p247 = scmp.ne.s32.totalorder %s236, %s237
    %p248 = scmp.eq.s32.totalorder %s30, 0
    %p249 = por %p247, %p248
    %p250 = scmp.ne.s32.totalorder %s236, %s237
    %p251 = scmp.eq.s32.totalorder %s31, 2
    %p252 = por %p250, %p251
    %p254 = scmp.ne.s32.totalorder %s237, %s253
    %p255 = scmp.eq.s32.totalorder %s31, 0
    %p256 = por %p254, %p255
    %s257 = ssub.s32 %s25, %s32
    %p258 = scmp.eq.s32.totalorder %s257, 0
    %s260 = sadd.s32 %s259, 1
    %s261 = scalar_select %p258, %s259, %s260
    %p264 = pneg %p258
    %p265 = scmp.eq.s32.totalorder %s25, 2
    %p266 = por %p264, %p265
    %p267 = scmp.ne.s32.totalorder %s259, %s262
    %p268 = scmp.eq.s32.totalorder %s25, 0
    %p269 = por %p267, %p268
    %p270 = scmp.ne.s32.totalorder %s259, %s262
    %p271 = scmp.eq.s32.totalorder %s30, 2
    %p272 = por %p270, %p271
    %p273 = scmp.ne.s32.totalorder %s262, %s263
    %p274 = scmp.eq.s32.totalorder %s30, 0
    %p275 = por %p273, %p274
    %p276 = scmp.ne.s32.totalorder %s262, %s263
    %p277 = scmp.eq.s32.totalorder %s31, 2
    %p278 = por %p276, %p277
    %p280 = scmp.ne.s32.totalorder %s263, %s279
    %p281 = scmp.eq.s32.totalorder %s31, 0
    %p282 = por %p280, %p281
    %s283 = ssub.s32 %s25, %s32
    %p284 = scmp.eq.s32.totalorder %s283, 0
    %s286 = sadd.s32 %s285, 1
    %s287 = scalar_select %p284, %s285, %s286
    %p290 = pneg %p284
    %p291 = scmp.eq.s32.totalorder %s25, 2
    %p292 = por %p290, %p291
    %p293 = scmp.ne.s32.totalorder %s285, %s288
    %p294 = scmp.eq.s32.totalorder %s25, 0
    %p295 = por %p293, %p294
    %p296 = scmp.ne.s32.totalorder %s285, %s288
    %p297 = scmp.eq.s32.totalorder %s30, 2
    %p298 = por %p296, %p297
    %p299 = scmp.ne.s32.totalorder %s288, %s289
    %p300 = scmp.eq.s32.totalorder %s30, 0
    %p301 = por %p299, %p300
    %p302 = scmp.ne.s32.totalorder %s288, %s289
    %p303 = scmp.eq.s32.totalorder %s31, 2
    %p304 = por %p302, %p303
    %p306 = scmp.ne.s32.totalorder %s289, %s305
    %p307 = scmp.eq.s32.totalorder %s31, 0
    %p308 = por %p306, %p307
    %s309 = ssub.s32 %s25, %s32
    %p310 = scmp.eq.s32.totalorder %s309, 0
    %s312 = sadd.s32 %s311, 1
    %s313 = scalar_select %p310, %s311, %s312
    %p316 = pneg %p310
    %p317 = scmp.eq.s32.totalorder %s25, 2
    %p318 = por %p316, %p317
    %p319 = scmp.ne.s32.totalorder %s311, %s314
    %p320 = scmp.eq.s32.totalorder %s25, 0
    %p321 = por %p319, %p320
    %p322 = scmp.ne.s32.totalorder %s311, %s314
    %p323 = scmp.eq.s32.totalorder %s30, 2
    %p324 = por %p322, %p323
    %p325 = scmp.ne.s32.totalorder %s314, %s315
    %p326 = scmp.eq.s32.totalorder %s30, 0
    %p327 = por %p325, %p326
    %p328 = scmp.ne.s32.totalorder %s314, %s315
    %p329 = scmp.eq.s32.totalorder %s31, 2
    %p330 = por %p328, %p329
    %p332 = scmp.ne.s32.totalorder %s315, %s331
    %p333 = scmp.eq.s32.totalorder %s31, 0
    %p334 = por %p332, %p333
    %s335 = ssub.s32 %s25, %s32
    %p336 = scmp.eq.s32.totalorder %s335, 0
    %s338 = sadd.s32 %s337, 1
    %s339 = scalar_select %p336, %s337, %s338
    %p342 = pneg %p336
    %p343 = scmp.eq.s32.totalorder %s25, 2
    %p344 = por %p342, %p343
    %p345 = scmp.ne.s32.totalorder %s337, %s340
    %p346 = scmp.eq.s32.totalorder %s25, 0
    %p347 = por %p345, %p346
    %p348 = scmp.ne.s32.totalorder %s337, %s340
    %p349 = scmp.eq.s32.totalorder %s30, 2
    %p350 = por %p348, %p349
    %p351 = scmp.ne.s32.totalorder %s340, %s341
    %p352 = scmp.eq.s32.totalorder %s30, 0
    %p353 = por %p351, %p352
    %p354 = scmp.ne.s32.totalorder %s340, %s341
    %p355 = scmp.eq.s32.totalorder %s31, 2
    %p356 = por %p354, %p355
    %p358 = scmp.ne.s32.totalorder %s341, %s357
    %p359 = scmp.eq.s32.totalorder %s31, 0
    %p360 = por %p358, %p359
    %s361 = ssub.s32 %s25, %s32
    %p362 = scmp.eq.s32.totalorder %s361, 0
    %s364 = sadd.s32 %s363, 1
    %s365 = scalar_select %p362, %s363, %s364
    %p368 = pneg %p362
    %p369 = scmp.eq.s32.totalorder %s25, 2
    %p370 = por %p368, %p369
    %p371 = scmp.ne.s32.totalorder %s363, %s366
    %p372 = scmp.eq.s32.totalorder %s25, 0
    %p373 = por %p371, %p372
    %p374 = scmp.ne.s32.totalorder %s363, %s366
    %p375 = scmp.eq.s32.totalorder %s30, 2
    %p376 = por %p374, %p375
    %p377 = scmp.ne.s32.totalorder %s366, %s367
    %p378 = scmp.eq.s32.totalorder %s30, 0
    %p379 = por %p377, %p378
    %p380 = scmp.ne.s32.totalorder %s366, %s367
    %p381 = scmp.eq.s32.totalorder %s31, 2
    %p382 = por %p380, %p381
    %p384 = scmp.ne.s32.totalorder %s367, %s383
    %p385 = scmp.eq.s32.totalorder %s31, 0
    %p386 = por %p384, %p385
    %s387 = ssub.s32 %s25, %s32
    %p388 = scmp.eq.s32.totalorder %s387, 0
    %s390 = sadd.s32 %s389, 1
    %s391 = scalar_select %p388, %s389, %s390
    %p394 = pneg %p388
    %p395 = scmp.eq.s32.totalorder %s25, 2
    %p396 = por %p394, %p395
    %p397 = scmp.ne.s32.totalorder %s389, %s392
    %p398 = scmp.eq.s32.totalorder %s25, 0
    %p399 = por %p397, %p398
    %p400 = scmp.ne.s32.totalorder %s389, %s392
    %p401 = scmp.eq.s32.totalorder %s30, 2
    %p402 = por %p400, %p401
    %p403 = scmp.ne.s32.totalorder %s392, %s393
    %p404 = scmp.eq.s32.totalorder %s30, 0
    %p405 = por %p403, %p404
    %p406 = scmp.ne.s32.totalorder %s392, %s393
    %p407 = scmp.eq.s32.totalorder %s31, 2
    %p408 = por %p406, %p407
    %p410 = scmp.ne.s32.totalorder %s393, %s409
    %p411 = scmp.eq.s32.totalorder %s31, 0
    %p412 = por %p410, %p411
    %s413 = ssub.s32 %s25, %s32
    %p414 = scmp.eq.s32.totalorder %s413, 0
    %s416 = sadd.s32 %s415, 1
    %s417 = scalar_select %p414, %s415, %s416
    %p420 = pneg %p414
    %p421 = scmp.eq.s32.totalorder %s25, 2
    %p422 = por %p420, %p421
    %p423 = scmp.ne.s32.totalorder %s415, %s418
    %p424 = scmp.eq.s32.totalorder %s25, 0
    %p425 = por %p423, %p424
    %p426 = scmp.ne.s32.totalorder %s415, %s418
    %p427 = scmp.eq.s32.totalorder %s30, 2
    %p428 = por %p426, %p427
    %p429 = scmp.ne.s32.totalorder %s418, %s419
    %p430 = scmp.eq.s32.totalorder %s30, 0
    %p431 = por %p429, %p430
    %p432 = scmp.ne.s32.totalorder %s418, %s419
    %p433 = scmp.eq.s32.totalorder %s31, 2
    %p434 = por %p432, %p433
    %p436 = scmp.ne.s32.totalorder %s419, %s435
    %p437 = scmp.eq.s32.totalorder %s31, 0
    %p438 = por %p436, %p437
    %s439 = ssub.s32 %s25, %s32
    %p440 = scmp.eq.s32.totalorder %s439, 0
    %s442 = sadd.s32 %s441, 1
    %s443 = scalar_select %p440, %s441, %s442
    %p446 = pneg %p440
    %p447 = scmp.eq.s32.totalorder %s25, 2
    %p448 = por %p446, %p447
    %p449 = scmp.ne.s32.totalorder %s441, %s444
    %p450 = scmp.eq.s32.totalorder %s25, 0
    %p451 = por %p449, %p450
    %p452 = scmp.ne.s32.totalorder %s441, %s444
    %p453 = scmp.eq.s32.totalorder %s30, 2
    %p454 = por %p452, %p453
    %p455 = scmp.ne.s32.totalorder %s444, %s445
    %p456 = scmp.eq.s32.totalorder %s30, 0
    %p457 = por %p455, %p456
    %p458 = scmp.ne.s32.totalorder %s444, %s445
    %p459 = scmp.eq.s32.totalorder %s31, 2
    %p460 = por %p458, %p459
    %p462 = scmp.ne.s32.totalorder %s445, %s461
    %p463 = scmp.eq.s32.totalorder %s31, 0
    %p464 = por %p462, %p463
    %s465 = ssub.s32 %s25, %s32
    %p466 = scmp.eq.s32.totalorder %s465, 0
    %s468 = sadd.s32 %s467, 1
    %s469 = scalar_select %p466, %s467, %s468
    %p472 = pneg %p466
    %p473 = scmp.eq.s32.totalorder %s25, 2
    %p474 = por %p472, %p473
    %p475 = scmp.ne.s32.totalorder %s467, %s470
    %p476 = scmp.eq.s32.totalorder %s25, 0
    %p477 = por %p475, %p476
    %p478 = scmp.ne.s32.totalorder %s467, %s470
    %p479 = scmp.eq.s32.totalorder %s30, 2
    %p480 = por %p478, %p479
    %p481 = scmp.ne.s32.totalorder %s470, %s471
    %p482 = scmp.eq.s32.totalorder %s30, 0
    %p483 = por %p481, %p482
    %p484 = scmp.ne.s32.totalorder %s470, %s471
    %p485 = scmp.eq.s32.totalorder %s31, 2
    %p486 = por %p484, %p485
    %p488 = scmp.ne.s32.totalorder %s471, %s487
    %p489 = scmp.eq.s32.totalorder %s31, 0
    %p490 = por %p488, %p489
    %s491 = ssub.s32 %s25, %s32
    %p492 = scmp.eq.s32.totalorder %s491, 0
    %s494 = sadd.s32 %s493, 1
    %s495 = scalar_select %p492, %s493, %s494
    %p498 = pneg %p492
    %p499 = scmp.eq.s32.totalorder %s25, 2
    %p500 = por %p498, %p499
    %p501 = scmp.ne.s32.totalorder %s493, %s496
    %p502 = scmp.eq.s32.totalorder %s25, 0
    %p503 = por %p501, %p502
    %p504 = scmp.ne.s32.totalorder %s493, %s496
    %p505 = scmp.eq.s32.totalorder %s30, 2
    %p506 = por %p504, %p505
    %p507 = scmp.ne.s32.totalorder %s496, %s497
    %p508 = scmp.eq.s32.totalorder %s30, 0
    %p509 = por %p507, %p508
    %p510 = scmp.ne.s32.totalorder %s496, %s497
    %p511 = scmp.eq.s32.totalorder %s31, 2
    %p512 = por %p510, %p511
    %p514 = scmp.ne.s32.totalorder %s497, %s513
    %p515 = scmp.eq.s32.totalorder %s31, 0
    %p516 = por %p514, %p515
    %s517 = ssub.s32 %s25, %s32
    %p518 = scmp.eq.s32.totalorder %s517, 0
    %s520 = sadd.s32 %s519, 1
    %s521 = scalar_select %p518, %s519, %s520
    %p524 = pneg %p518
    %p525 = scmp.eq.s32.totalorder %s25, 2
    %p526 = por %p524, %p525
    %p527 = scmp.ne.s32.totalorder %s519, %s522
    %p528 = scmp.eq.s32.totalorder %s25, 0
    %p529 = por %p527, %p528
    %p530 = scmp.ne.s32.totalorder %s519, %s522
    %p531 = scmp.eq.s32.totalorder %s30, 2
    %p532 = por %p530, %p531
    %p533 = scmp.ne.s32.totalorder %s522, %s523
    %p534 = scmp.eq.s32.totalorder %s30, 0
    %p535 = por %p533, %p534
    %p536 = scmp.ne.s32.totalorder %s522, %s523
    %p537 = scmp.eq.s32.totalorder %s31, 2
    %p538 = por %p536, %p537
    %p540 = scmp.ne.s32.totalorder %s523, %s539
    %p541 = scmp.eq.s32.totalorder %s31, 0
    %p542 = por %p540, %p541
    %p543 = scmp.le.s32.totalorder 1, %s25
    %p544 = scmp.lt.s32.totalorder %s25, 4
    %p545 = pnand %p543, %p544
    %p546 = pneg %p545
    // Predicated region
    $region9: #{multi_sequence_forward.2} parent=5 // pred_check
      _
    $region10: #{multi_sequence_forward.2} parent=5 // pred_check_branch
      %548 = sbr.rel (%p545) target = $region12
    $region11: #{multi_sequence_forward.2} parent=5 // pred_region
      %s549 = ssub.s32 %s25, 1
      // Predicated region
      $region13: #{multi_sequence_forward.2} parent=11 // pred_check
        %p550 = pneg %p72
      $region14: #{multi_sequence_forward.2} parent=11 // pred_check_branch
        %552 = sbr.rel (%p550) target = $region16
      $region15: #{multi_sequence_forward.2} parent=11 // pred_region
        _
      $region16: #{multi_sequence_forward.2} parent=11 // pred_fallthru
        _
      // Predicated region
      $region17: #{multi_sequence_forward.2} parent=11 // pred_check
        %p553 = pneg %p93
      $region18: #{multi_sequence_forward.2} parent=11 // pred_check_branch
        %555 = sbr.rel (%p553) target = $region20
      $region19: #{multi_sequence_forward.2} parent=11 // pred_region
        _
      $region20: #{multi_sequence_forward.2} parent=11 // pred_fallthru
        _
    $region12: #{multi_sequence_forward.2} parent=5 // pred_fallthru
      _
    %p556 = scmp.lt.s32.totalorder %s25, 3
    // Predicated region
    $region21: #{multi_sequence_forward.2} parent=5 // pred_check
      %p557 = pneg %p556
    $region22: #{multi_sequence_forward.2} parent=5 // pred_check_branch
      %559 = sbr.rel (%p557) target = $region24
    $region23: #{multi_sequence_forward.2} parent=5 // pred_region
      // Predicated region
      $region25: #{multi_sequence_forward.2} parent=23 // pred_check
        %p560 = pneg %p45
      $region26: #{multi_sequence_forward.2} parent=23 // pred_check_branch
        %562 = sbr.rel (%p560) target = $region28
      $region27: #{multi_sequence_forward.2} parent=23 // pred_region
        %p563 = scmp.lt.s32.totalorder %s25, 2
        %s564 = scalar_select %p563, %s25, 2
        %s565 = smul.addr %s564, 2
        %s566 = smul.addr %s565, 8
        %s567 = scalar_lea.vmem %s0, %s566
      $region28: #{multi_sequence_forward.2} parent=23 // pred_fallthru
        _
      // Predicated region
      $region29: #{multi_sequence_forward.2} parent=23 // pred_check
        %p568 = pneg %p113
      $region30: #{multi_sequence_forward.2} parent=23 // pred_check_branch
        %570 = sbr.rel (%p568) target = $region32
      $region31: #{multi_sequence_forward.2} parent=23 // pred_region
        %p571 = scmp.lt.s32.totalorder %s25, 2
        %s572 = scalar_select %p571, %s25, 2
        %s573 = smul.addr %s572, 4
        %s574 = smul.addr %s573, 4
        %s575 = scalar_lea.vmem %s3, %s574
      $region32: #{multi_sequence_forward.2} parent=23 // pred_fallthru
        _
      // Predicated region
      $region33: #{multi_sequence_forward.2} parent=23 // pred_check
        %p576 = pneg %p139
      $region34: #{multi_sequence_forward.2} parent=23 // pred_check_branch
        %578 = sbr.rel (%p576) target = $region36
      $region35: #{multi_sequence_forward.2} parent=23 // pred_region
        %p579 = scmp.lt.s32.totalorder %s25, 2
        %s580 = scalar_select %p579, %s25, 2
        %s581 = smul.addr %s580, 4
        %s582 = smul.addr %s581, 4
        %s583 = scalar_lea.vmem %s4, %s582
      $region36: #{multi_sequence_forward.2} parent=23 // pred_fallthru
        _
      // Predicated region
      $region37: #{multi_sequence_forward.2} parent=23 // pred_check
        %p584 = pneg %p165
      $region38: #{multi_sequence_forward.2} parent=23 // pred_check_branch
        %586 = sbr.rel (%p584) target = $region40
      $region39: #{multi_sequence_forward.2} parent=23 // pred_region
        %p587 = scmp.lt.s32.totalorder %s25, 2
        %s588 = scalar_select %p587, %s25, 2
        %s589 = smul.addr %s588, 4
        %s590 = smul.addr %s589, 4
        %s591 = scalar_lea.vmem %s5, %s590
      $region40: #{multi_sequence_forward.2} parent=23 // pred_fallthru
        _
      // Predicated region
      $region41: #{multi_sequence_forward.2} parent=23 // pred_check
        %p592 = pneg %p191
      $region42: #{multi_sequence_forward.2} parent=23 // pred_check_branch
        %594 = sbr.rel (%p592) target = $region44
      $region43: #{multi_sequence_forward.2} parent=23 // pred_region
        %p595 = scmp.lt.s32.totalorder %s25, 2
        %s596 = scalar_select %p595, %s25, 2
        %s597 = scalar_lea.vmem %s6, %s596
      $region44: #{multi_sequence_forward.2} parent=23 // pred_fallthru
        _
      // Predicated region
      $region45: #{multi_sequence_forward.2} parent=23 // pred_check
        %p598 = pneg %p217
      $region46: #{multi_sequence_forward.2} parent=23 // pred_check_branch
        %600 = sbr.rel (%p598) target = $region48
      $region47: #{multi_sequence_forward.2} parent=23 // pred_region
        %p601 = scmp.lt.s32.totalorder %s25, 2
        %s602 = scalar_select %p601, %s25, 2
        %s603 = scalar_lea.vmem %s7, %s602
      $region48: #{multi_sequence_forward.2} parent=23 // pred_fallthru
        _
      // Predicated region
      $region49: #{multi_sequence_forward.2} parent=23 // pred_check
        %p604 = pneg %p243
      $region50: #{multi_sequence_forward.2} parent=23 // pred_check_branch
        %606 = sbr.rel (%p604) target = $region52
      $region51: #{multi_sequence_forward.2} parent=23 // pred_region
        %p607 = scmp.lt.s32.totalorder %s25, 2
        %s608 = scalar_select %p607, %s25, 2
        %s609 = scalar_lea.vmem %s8, %s608
      $region52: #{multi_sequence_forward.2} parent=23 // pred_fallthru
        _
      // Predicated region
      $region53: #{multi_sequence_forward.2} parent=23 // pred_check
        %p610 = pneg %p269
      $region54: #{multi_sequence_forward.2} parent=23 // pred_check_branch
        %612 = sbr.rel (%p610) target = $region56
      $region55: #{multi_sequence_forward.2} parent=23 // pred_region
        %p613 = scmp.lt.s32.totalorder %s25, 2
        %s614 = scalar_select %p613, %s25, 2
        %s615 = smul.addr %s614, 4
        %s616 = smul.addr %s615, 4
        %s617 = scalar_lea.vmem %s9, %s616
      $region56: #{multi_sequence_forward.2} parent=23 // pred_fallthru
        _
      // Predicated region
      $region57: #{multi_sequence_forward.2} parent=23 // pred_check
        %p618 = pneg %p295
      $region58: #{multi_sequence_forward.2} parent=23 // pred_check_branch
        %620 = sbr.rel (%p618) target = $region60
      $region59: #{multi_sequence_forward.2} parent=23 // pred_region
        %p621 = scmp.lt.s32.totalorder %s25, 2
        %s622 = scalar_select %p621, %s25, 2
        %s623 = scalar_lea.vmem %s10, %s622
      $region60: #{multi_sequence_forward.2} parent=23 // pred_fallthru
        _
      // Predicated region
      $region61: #{multi_sequence_forward.2} parent=23 // pred_check
        %p624 = pneg %p321
      $region62: #{multi_sequence_forward.2} parent=23 // pred_check_branch
        %626 = sbr.rel (%p624) target = $region64
      $region63: #{multi_sequence_forward.2} parent=23 // pred_region
        %p627 = scmp.lt.s32.totalorder %s25, 2
        %s628 = scalar_select %p627, %s25, 2
        %s629 = scalar_lea.vmem %s11, %s628
      $region64: #{multi_sequence_forward.2} parent=23 // pred_fallthru
        _
      // Predicated region
      $region65: #{multi_sequence_forward.2} parent=23 // pred_check
        %p630 = pneg %p347
      $region66: #{multi_sequence_forward.2} parent=23 // pred_check_branch
        %632 = sbr.rel (%p630) target = $region68
      $region67: #{multi_sequence_forward.2} parent=23 // pred_region
        %p633 = scmp.lt.s32.totalorder %s25, 2
        %s634 = scalar_select %p633, %s25, 2
        %s635 = scalar_lea.vmem %s12, %s634
      $region68: #{multi_sequence_forward.2} parent=23 // pred_fallthru
        _
      // Predicated region
      $region69: #{multi_sequence_forward.2} parent=23 // pred_check
        %p636 = pneg %p373
      $region70: #{multi_sequence_forward.2} parent=23 // pred_check_branch
        %638 = sbr.rel (%p636) target = $region72
      $region71: #{multi_sequence_forward.2} parent=23 // pred_region
        %p639 = scmp.lt.s32.totalorder %s25, 2
        %s640 = scalar_select %p639, %s25, 2
        %s641 = smul.addr %s640, 4
        %s642 = smul.addr %s641, 4
        %s643 = scalar_lea.vmem %s13, %s642
      $region72: #{multi_sequence_forward.2} parent=23 // pred_fallthru
        _
      // Predicated region
      $region73: #{multi_sequence_forward.2} parent=23 // pred_check
        %p644 = pneg %p399
      $region74: #{multi_sequence_forward.2} parent=23 // pred_check_branch
        %646 = sbr.rel (%p644) target = $region76
      $region75: #{multi_sequence_forward.2} parent=23 // pred_region
        %p647 = scmp.lt.s32.totalorder %s25, 2
        %s648 = scalar_select %p647, %s25, 2
        %s649 = scalar_lea.vmem %s14, %s648
      $region76: #{multi_sequence_forward.2} parent=23 // pred_fallthru
        _
      // Predicated region
      $region77: #{multi_sequence_forward.2} parent=23 // pred_check
        %p650 = pneg %p425
      $region78: #{multi_sequence_forward.2} parent=23 // pred_check_branch
        %652 = sbr.rel (%p650) target = $region80
      $region79: #{multi_sequence_forward.2} parent=23 // pred_region
        %p653 = scmp.lt.s32.totalorder %s25, 2
        %s654 = scalar_select %p653, %s25, 2
        %s655 = smul.addr %s654, 4
        %s656 = smul.addr %s655, 4
        %s657 = scalar_lea.vmem %s15, %s656
      $region80: #{multi_sequence_forward.2} parent=23 // pred_fallthru
        _
      // Predicated region
      $region81: #{multi_sequence_forward.2} parent=23 // pred_check
        %p658 = pneg %p451
      $region82: #{multi_sequence_forward.2} parent=23 // pred_check_branch
        %660 = sbr.rel (%p658) target = $region84
      $region83: #{multi_sequence_forward.2} parent=23 // pred_region
        %p661 = scmp.lt.s32.totalorder %s25, 2
        %s662 = scalar_select %p661, %s25, 2
        %s663 = scalar_lea.vmem %s16, %s662
      $region84: #{multi_sequence_forward.2} parent=23 // pred_fallthru
        _
      // Predicated region
      $region85: #{multi_sequence_forward.2} parent=23 // pred_check
        %p664 = pneg %p477
      $region86: #{multi_sequence_forward.2} parent=23 // pred_check_branch
        %666 = sbr.rel (%p664) target = $region88
      $region87: #{multi_sequence_forward.2} parent=23 // pred_region
        %p667 = scmp.lt.s32.totalorder %s25, 2
        %s668 = scalar_select %p667, %s25, 2
        %s669 = scalar_lea.vmem %s17, %s668
      $region88: #{multi_sequence_forward.2} parent=23 // pred_fallthru
        _
      // Predicated region
      $region89: #{multi_sequence_forward.2} parent=23 // pred_check
        %p670 = pneg %p503
      $region90: #{multi_sequence_forward.2} parent=23 // pred_check_branch
        %672 = sbr.rel (%p670) target = $region92
      $region91: #{multi_sequence_forward.2} parent=23 // pred_region
        %p673 = scmp.lt.s32.totalorder %s25, 2
        %s674 = scalar_select %p673, %s25, 2
        %s675 = scalar_lea.vmem %s18, %s674
      $region92: #{multi_sequence_forward.2} parent=23 // pred_fallthru
        _
    $region24: #{multi_sequence_forward.2} parent=5 // pred_fallthru
      _
    %p676 = scmp.le.s32.totalorder 1, %s25
    %p677 = scmp.lt.s32.totalorder %s25, 4
    %p678 = pnand %p676, %p677
    %p679 = pneg %p678
    // Predicated region
    $region93: #{multi_sequence_forward.2} parent=5 // pred_check
      _
    $region94: #{multi_sequence_forward.2} parent=5 // pred_check_branch
      %681 = sbr.rel (%p678) target = $region96
    $region95: #{multi_sequence_forward.2} parent=5 // pred_region
      %s682 = ssub.s32 %s25, 1
      %p683 = scmp.lt.s32.totalorder %s30, 2
      %s684 = scalar_select %p683, %s30, 2
      %s685 = smul.addr %s684, 2
      %s686 = smul.addr %s685, 8
      %s687 = scalar_lea.vmem %s0, %s686
      %p688 = pneg %p51
      %p689 = pneg %p48
      %p690 = pneg %p72
      %p691 = pneg %p69
      %p692 = pneg %p93
      %p693 = pneg %p90
      %p694 = scmp.lt.s32.totalorder %s30, 2
      %s695 = scalar_select %p694, %s30, 2
      %s696 = smul.addr %s695, 4
      %s697 = smul.addr %s696, 4
      %s698 = scalar_lea.vmem %s3, %s697
      %p699 = pneg %p119
      %p700 = pneg %p116
      %p701 = scmp.lt.s32.totalorder %s30, 2
      %s702 = scalar_select %p701, %s30, 2
      %s703 = smul.addr %s702, 4
      %s704 = smul.addr %s703, 4
      %s705 = scalar_lea.vmem %s4, %s704
      %p706 = pneg %p145
      %p707 = pneg %p142
      %p708 = scmp.lt.s32.totalorder %s30, 2
      %s709 = scalar_select %p708, %s30, 2
      %s710 = smul.addr %s709, 4
      %s711 = smul.addr %s710, 4
      %s712 = scalar_lea.vmem %s5, %s711
      %p713 = pneg %p171
      %p714 = pneg %p168
      %p715 = scmp.lt.s32.totalorder %s30, 2
      %s716 = scalar_select %p715, %s30, 2
      %s717 = scalar_lea.vmem %s6, %s716
      %p718 = pneg %p197
      %p719 = pneg %p194
      %p720 = scmp.lt.s32.totalorder %s30, 2
      %s721 = scalar_select %p720, %s30, 2
      %s722 = scalar_lea.vmem %s7, %s721
      %p723 = pneg %p223
      %p724 = pneg %p220
      %p725 = scmp.lt.s32.totalorder %s30, 2
      %s726 = scalar_select %p725, %s30, 2
      %s727 = scalar_lea.vmem %s8, %s726
      %p728 = pneg %p249
      %p729 = pneg %p246
      %p730 = scmp.lt.s32.totalorder %s30, 2
      %s731 = scalar_select %p730, %s30, 2
      %s732 = smul.addr %s731, 4
      %s733 = smul.addr %s732, 4
      %s734 = scalar_lea.vmem %s9, %s733
      %p735 = pneg %p275
      %p736 = pneg %p272
      %p737 = scmp.lt.s32.totalorder %s30, 2
      %s738 = scalar_select %p737, %s30, 2
      %s739 = scalar_lea.vmem %s10, %s738
      %p740 = pneg %p301
      %p741 = pneg %p298
      %p742 = scmp.lt.s32.totalorder %s30, 2
      %s743 = scalar_select %p742, %s30, 2
      %s744 = scalar_lea.vmem %s11, %s743
      %p745 = pneg %p327
      %p746 = pneg %p324
      %p747 = scmp.lt.s32.totalorder %s30, 2
      %s748 = scalar_select %p747, %s30, 2
      %s749 = scalar_lea.vmem %s12, %s748
      %p750 = pneg %p353
      %p751 = pneg %p350
      %p752 = scmp.lt.s32.totalorder %s30, 2
      %s753 = scalar_select %p752, %s30, 2
      %s754 = smul.addr %s753, 4
      %s755 = smul.addr %s754, 4
      %s756 = scalar_lea.vmem %s13, %s755
      %p757 = pneg %p379
      %p758 = pneg %p376
      %p759 = scmp.lt.s32.totalorder %s30, 2
      %s760 = scalar_select %p759, %s30, 2
      %s761 = scalar_lea.vmem %s14, %s760
      %p762 = pneg %p405
      %p763 = pneg %p402
      %p764 = scmp.lt.s32.totalorder %s30, 2
      %s765 = scalar_select %p764, %s30, 2
      %s766 = smul.addr %s765, 4
      %s767 = smul.addr %s766, 4
      %s768 = scalar_lea.vmem %s15, %s767
      %p769 = pneg %p431
      %p770 = pneg %p428
      %p771 = scmp.lt.s32.totalorder %s30, 2
      %s772 = scalar_select %p771, %s30, 2
      %s773 = scalar_lea.vmem %s16, %s772
      %p774 = pneg %p457
      %p775 = pneg %p454
      %p776 = scmp.lt.s32.totalorder %s30, 2
      %s777 = scalar_select %p776, %s30, 2
      %s778 = scalar_lea.vmem %s17, %s777
      %p779 = pneg %p483
      %p780 = pneg %p480
      %p781 = scmp.lt.s32.totalorder %s30, 2
      %s782 = scalar_select %p781, %s30, 2
      %s783 = scalar_lea.vmem %s18, %s782
      %p784 = pneg %p509
      %p785 = pneg %p506
      %p786 = pneg %p535
      %p787 = pneg %p532
      %p788 = scmp.lt.s32.totalorder %s30, 2
      %s789 = scalar_select %p788, %s30, 2
      %s790 = smul.addr %s789, 2
      %s791 = smul.addr %s790, 8
      %s792 = scalar_lea.vmem %s19, %s791
      %p793 = scmp.lt.s32.totalorder %s30, 2
      %s794 = scalar_select %p793, %s30, 2
      %s795 = smul.addr %s794, 2
      %s796 = smul.addr %s795, 8
      %s797 = scalar_lea.vmem %s0, %s796
      %p798 = scmp.lt.s32.totalorder %s30, 2
      %s799 = scalar_select %p798, %s30, 2
      %s800 = smul.addr %s799, 4
      %s801 = smul.addr %s800, 4
      %s802 = scalar_lea.vmem %s3, %s801
      %p803 = scmp.lt.s32.totalorder %s30, 2
      %s804 = scalar_select %p803, %s30, 2
      %s805 = smul.addr %s804, 4
      %s806 = smul.addr %s805, 4
      %s807 = scalar_lea.vmem %s4, %s806
      %p808 = scmp.lt.s32.totalorder %s30, 2
      %s809 = scalar_select %p808, %s30, 2
      %s810 = smul.addr %s809, 4
      %s811 = smul.addr %s810, 4
      %s812 = scalar_lea.vmem %s5, %s811
      %p813 = scmp.lt.s32.totalorder %s30, 2
      %s814 = scalar_select %p813, %s30, 2
      %s815 = scalar_lea.vmem %s6, %s814
      %p816 = scmp.lt.s32.totalorder %s30, 2
      %s817 = scalar_select %p816, %s30, 2
      %s818 = scalar_lea.vmem %s7, %s817
      %p819 = scmp.lt.s32.totalorder %s30, 2
      %s820 = scalar_select %p819, %s30, 2
      %s821 = scalar_lea.vmem %s8, %s820
      %p822 = scmp.lt.s32.totalorder %s30, 2
      %s823 = scalar_select %p822, %s30, 2
      %s824 = smul.addr %s823, 4
      %s825 = smul.addr %s824, 4
      %s826 = scalar_lea.vmem %s9, %s825
      %p827 = scmp.lt.s32.totalorder %s30, 2
      %s828 = scalar_select %p827, %s30, 2
      %s829 = scalar_lea.vmem %s10, %s828
      %p830 = scmp.lt.s32.totalorder %s30, 2
      %s831 = scalar_select %p830, %s30, 2
      %s832 = scalar_lea.vmem %s11, %s831
      %p833 = scmp.lt.s32.totalorder %s30, 2
      %s834 = scalar_select %p833, %s30, 2
      %s835 = scalar_lea.vmem %s12, %s834
      %p836 = scmp.lt.s32.totalorder %s30, 2
      %s837 = scalar_select %p836, %s30, 2
      %s838 = smul.addr %s837, 4
      %s839 = smul.addr %s838, 4
      %s840 = scalar_lea.vmem %s13, %s839
      %p841 = scmp.lt.s32.totalorder %s30, 2
      %s842 = scalar_select %p841, %s30, 2
      %s843 = scalar_lea.vmem %s14, %s842
      %p844 = scmp.lt.s32.totalorder %s30, 2
      %s845 = scalar_select %p844, %s30, 2
      %s846 = smul.addr %s845, 4
      %s847 = smul.addr %s846, 4
      %s848 = scalar_lea.vmem %s15, %s847
      %p849 = scmp.lt.s32.totalorder %s30, 2
      %s850 = scalar_select %p849, %s30, 2
      %s851 = scalar_lea.vmem %s16, %s850
      %p852 = scmp.lt.s32.totalorder %s30, 2
      %s853 = scalar_select %p852, %s30, 2
      %s854 = scalar_lea.vmem %s17, %s853
      %p855 = scmp.lt.s32.totalorder %s30, 2
      %s856 = scalar_select %p855, %s30, 2
      %s857 = scalar_lea.vmem %s18, %s856
      %p858 = scmp.lt.s32.totalorder %s30, 2
      %s859 = scalar_select %p858, %s30, 2
      %s860 = smul.addr %s859, 2
      %s861 = smul.addr %s860, 8
      %s862 = scalar_lea.vmem %s19, %s861
      %v864 = vld [vmem:[%s797] sm:$0xff]
      %v865 = vld [vmem:[%s797 + $0x8] sm:$0xff]
      %v866 = vld [vmem:[%s1] sm:$0xff]
      %v867 = vld [vmem:[%s2] sm:$0x3]
      %v870 = vunpack.c.l.s4 1966171168
      %v871 = vunpack.c.0.s8 %v870
      %v872 = vlaneseq
      %v873 = vshrl.u32 %v872, 7
      %v874 = vsub.s32 %v871, %v873
      %v875 = vrot.slane %v867, %v874
      %v876 = vcombine.high %v875, %v875
      %v878 = vunpack.c.l.s4 1966171168
      %v879 = vunpack.c.0.s8 %v878
      %v880 = vlaneseq
      %v881 = vshrl.u32 %v880, 7
      %v882 = vsub.s32 %v879, %v881
      %v883 = vrot.slane %v875, %v882
      %v885 = vunpack.c.l.s4 1966171168
      %v886 = vunpack.c.0.s8 %v885
      %v887 = vlaneseq
      %v888 = vshrl.u32 %v887, 7
      %v889 = vsub.s32 %v886, %v888
      %v890 = vrot.slane %v876, %v889
      %v891 = vlaneseq
      %v892 = vshrl.u32 %v891, 7
      %v893 = vsub.s32 0, %v892
      %v894 = vrot.slane %v883, %v893
      %v895 = vlaneseq
      %v896 = vshrl.u32 %v895, 7
      %v897 = vsub.s32 0, %v896
      %v898 = vrot.slane %v890, %v897
      %v901 = vadd.f32 %v866, %v894
      %v902 = vadd.f32 %v866, %v898
      %v903 = vld [vmem:[%s802] sm:$0xf]
      %v904 = vld [vmem:[%s802 + $0x4] sm:$0xf]
      %v905 = vld [vmem:[%s802 + $0x8] sm:$0xf]
      %v906 = vld [vmem:[%s802 + $0xc] sm:$0xf]
      %v907 = vld [vmem:[%s807] sm:$0xf]
      %v908 = vld [vmem:[%s807 + $0x4] sm:$0xf]
      %v909 = vld [vmem:[%s807 + $0x8] sm:$0xf]
      %v910 = vld [vmem:[%s807 + $0xc] sm:$0xf]
      %v911 = vld [vmem:[%s812] sm:$0xf]
      %v912 = vld [vmem:[%s812 + $0x4] sm:$0xf]
      %v913 = vld [vmem:[%s812 + $0x8] sm:$0xf]
      %v914 = vld [vmem:[%s812 + $0xc] sm:$0xf]
      %v915 = vld [vmem:[%s815] sm:$0x1]
      %v916 = vld [vmem:[%s818] sm:$0x1]
      %v917 = vld [vmem:[%s821] sm:$0x1]
      %v918 = vld [vmem:[%s826] sm:$0xf]
      %v919 = vld [vmem:[%s826 + $0x4] sm:$0xf]
      %v920 = vld [vmem:[%s826 + $0x8] sm:$0xf]
      %v921 = vld [vmem:[%s826 + $0xc] sm:$0xf]
      %v922 = vld [vmem:[%s829] sm:$0x1]
      %v923 = vld [vmem:[%s832] sm:$0x1]
      %v924 = vld [vmem:[%s835] sm:$0x1]
      %v925 = vld [vmem:[%s840] sm:$0xf]
      %v926 = vld [vmem:[%s840 + $0x4] sm:$0xf]
      %v927 = vld [vmem:[%s840 + $0x8] sm:$0xf]
      %v928 = vld [vmem:[%s840 + $0xc] sm:$0xf]
      %v929 = vld [vmem:[%s843] sm:$0x1]
      %v930 = vld [vmem:[%s848] sm:$0xf]
      %v931 = vld [vmem:[%s848 + $0x4] sm:$0xf]
      %v932 = vld [vmem:[%s848 + $0x8] sm:$0xf]
      %v933 = vld [vmem:[%s848 + $0xc] sm:$0xf]
      %v934 = vld [vmem:[%s851] sm:$0x1]
      %v935 = vld [vmem:[%s854] sm:$0x1]
      %v936 = vld [vmem:[%s857] sm:$0x1]
      %v937 = vpack.c.bf16 %v865, %v864
      %v939 = vlaneseq
      %v940 = vshrl.u32 %v939, 7
      %v941 = vsub.s32 0, %v940
      %v942 = vrot.slane %v915, %v941
      %v948 = vunpack.c.l.b16 %v903
      %v949 = vunpack.c.l.b16 %v904
      %v950 = vunpack.c.l.b16 %v905
      %v951 = vunpack.c.l.b16 %v906
      %v952 = vpack.c.b16 %v949, %v948
      %v953 = vpack.c.b16 %v951, %v950
      %vm956 = vcmask 261120
      %v958 = vsel %vm956, %v937, 0
      %960 = vmatprep.subr.bf16.mxu0 0
      %961 = vmatpush1.bf16.msra.mxu0 %v952
      %962 = vmatprep.subr.bf16.mxu0 0
      %963 = vmatpush1.bf16.msra.mxu0 %v953
      %964 = vmatprep.subr.bf16.mxu0 0
      %965 = vmatpush1.bf16.msra.mxu0 0
      %966 = vmatprep.subr.bf16.mxu0 0
      %967 = vmatpush1.bf16.msra.mxu0 0
      %968 = vmatprep.subr.bf16.mxu0 0
      %969 = vmatpush1.bf16.msra.mxu0 0
      %970 = vmatprep.subr.bf16.mxu0 0
      %971 = vmatpush1.bf16.msra.mxu0 0
      %972 = vmatprep.subr.bf16.mxu0 0
      %973 = vmatpush1.bf16.msra.mxu0 0
      %974 = vmatprep.subr.bf16.mxu0 0
      %975 = vmatpush1.bf16.msra.mxu0 0
      %976 = vmatprep.subr.bf16.mxu0 0
      %977 = vmatpush1.bf16.msra.mxu0 0
      %978 = vmatprep.subr.bf16.mxu0 0
      %979 = vmatpush1.bf16.msra.mxu0 0
      %980 = vmatprep.subr.bf16.mxu0 0
      %981 = vmatpush1.bf16.msra.mxu0 0
      %982 = vmatprep.subr.bf16.mxu0 0
      %983 = vmatpush1.bf16.msra.mxu0 0
      %984 = vmatprep.subr.bf16.mxu0 0
      %985 = vmatpush1.bf16.msra.mxu0 0
      %986 = vmatprep.subr.bf16.mxu0 0
      %987 = vmatpush1.bf16.msra.mxu0 0
      %988 = vmatprep.subr.bf16.mxu0 0
      %989 = vmatpush1.bf16.msra.mxu0 0
      %990 = vmatprep.subr.bf16.mxu0 0
      %991 = vmatpush1.bf16.msra.mxu0 0
      %992 = vmatprep.mubr.bf16.mxu0 0
      %993 = vmatmul.mubr.bf16.gmra.mrb[0].mxu0 %v958
      %v994 = vpop.f32.mrb[0].mxu0
      %v995 = vadd.f32 %v942, %v994
      %v996 = vpop.f32.mrb[0].mxu0
      %v997 = vpop.f32.mrb[0].mxu0
      %v998 = vadd.f32 %v942, %v997
      %v999 = vpop.f32.mrb[0].mxu0
      %1000 = vdwg.mxu0
      %v1002 = vlaneseq
      %v1003 = vshrl.u32 %v1002, 7
      %v1004 = vsub.s32 0, %v1003
      %v1005 = vrot.slane %v916, %v1004
      %v1011 = vunpack.c.l.b16 %v907
      %v1012 = vunpack.c.l.b16 %v908
      %v1013 = vunpack.c.l.b16 %v909
      %v1014 = vunpack.c.l.b16 %v910
      %v1015 = vpack.c.b16 %v1012, %v1011
      %v1016 = vpack.c.b16 %v1014, %v1013
      %1019 = vmatprep.subr.bf16.mxu0 0
      %1020 = vmatpush1.bf16.msra.mxu0 %v1015
      %1021 = vmatprep.subr.bf16.mxu0 0
      %1022 = vmatpush1.bf16.msra.mxu0 %v1016
      %1023 = vmatprep.subr.bf16.mxu0 0
      %1024 = vmatpush1.bf16.msra.mxu0 0
      %1025 = vmatprep.subr.bf16.mxu0 0
      %1026 = vmatpush1.bf16.msra.mxu0 0
      %1027 = vmatprep.subr.bf16.mxu0 0
      %1028 = vmatpush1.bf16.msra.mxu0 0
      %1029 = vmatprep.subr.bf16.mxu0 0
      %1030 = vmatpush1.bf16.msra.mxu0 0
      %1031 = vmatprep.subr.bf16.mxu0 0
      %1032 = vmatpush1.bf16.msra.mxu0 0
      %1033 = vmatprep.subr.bf16.mxu0 0
      %1034 = vmatpush1.bf16.msra.mxu0 0
      %1035 = vmatprep.subr.bf16.mxu0 0
      %1036 = vmatpush1.bf16.msra.mxu0 0
      %1037 = vmatprep.subr.bf16.mxu0 0
      %1038 = vmatpush1.bf16.msra.mxu0 0
      %1039 = vmatprep.subr.bf16.mxu0 0
      %1040 = vmatpush1.bf16.msra.mxu0 0
      %1041 = vmatprep.subr.bf16.mxu0 0
      %1042 = vmatpush1.bf16.msra.mxu0 0
      %1043 = vmatprep.subr.bf16.mxu0 0
      %1044 = vmatpush1.bf16.msra.mxu0 0
      %1045 = vmatprep.subr.bf16.mxu0 0
      %1046 = vmatpush1.bf16.msra.mxu0 0
      %1047 = vmatprep.subr.bf16.mxu0 0
      %1048 = vmatpush1.bf16.msra.mxu0 0
      %1049 = vmatprep.subr.bf16.mxu0 0
      %1050 = vmatpush1.bf16.msra.mxu0 0
      %1051 = vmatprep.mubr.bf16.mxu0 0
      %1052 = vmatmul.mubr.bf16.gmra.mrb[0].mxu0 %v958
      %v1053 = vpop.f32.mrb[0].mxu0
      %v1054 = vadd.f32 %v1005, %v1053
      %v1055 = vpop.f32.mrb[0].mxu0
      %v1056 = vpop.f32.mrb[0].mxu0
      %v1057 = vadd.f32 %v1005, %v1056
      %v1058 = vpop.f32.mrb[0].mxu0
      %1059 = vdwg.mxu0
      %v1061 = vlaneseq
      %v1062 = vshrl.u32 %v1061, 7
      %v1063 = vsub.s32 0, %v1062
      %v1064 = vrot.slane %v917, %v1063
      %v1070 = vunpack.c.l.b16 %v911
      %v1071 = vunpack.c.l.b16 %v912
      %v1072 = vunpack.c.l.b16 %v913
      %v1073 = vunpack.c.l.b16 %v914
      %v1074 = vpack.c.b16 %v1071, %v1070
      %v1075 = vpack.c.b16 %v1073, %v1072
      %1078 = vmatprep.subr.bf16.mxu0 0
      %1079 = vmatpush1.bf16.msra.mxu0 %v1074
      %1080 = vmatprep.subr.bf16.mxu0 0
      %1081 = vmatpush1.bf16.msra.mxu0 %v1075
      %1082 = vmatprep.subr.bf16.mxu0 0
      %1083 = vmatpush1.bf16.msra.mxu0 0
      %1084 = vmatprep.subr.bf16.mxu0 0
      %1085 = vmatpush1.bf16.msra.mxu0 0
      %1086 = vmatprep.subr.bf16.mxu0 0
      %1087 = vmatpush1.bf16.msra.mxu0 0
      %1088 = vmatprep.subr.bf16.mxu0 0
      %1089 = vmatpush1.bf16.msra.mxu0 0
      %1090 = vmatprep.subr.bf16.mxu0 0
      %1091 = vmatpush1.bf16.msra.mxu0 0
      %1092 = vmatprep.subr.bf16.mxu0 0
      %1093 = vmatpush1.bf16.msra.mxu0 0
      %1094 = vmatprep.subr.bf16.mxu0 0
      %1095 = vmatpush1.bf16.msra.mxu0 0
      %1096 = vmatprep.subr.bf16.mxu0 0
      %1097 = vmatpush1.bf16.msra.mxu0 0
      %1098 = vmatprep.subr.bf16.mxu0 0
      %1099 = vmatpush1.bf16.msra.mxu0 0
      %1100 = vmatprep.subr.bf16.mxu0 0
      %1101 = vmatpush1.bf16.msra.mxu0 0
      %1102 = vmatprep.subr.bf16.mxu0 0
      %1103 = vmatpush1.bf16.msra.mxu0 0
      %1104 = vmatprep.subr.bf16.mxu0 0
      %1105 = vmatpush1.bf16.msra.mxu0 0
      %1106 = vmatprep.subr.bf16.mxu0 0
      %1107 = vmatpush1.bf16.msra.mxu0 0
      %1108 = vmatprep.subr.bf16.mxu0 0
      %1109 = vmatpush1.bf16.msra.mxu0 0
      %1110 = vmatprep.mubr.bf16.mxu0 0
      %1111 = vmatmul.mubr.bf16.gmra.mrb[0].mxu0 %v958
      %v1112 = vpop.f32.mrb[0].mxu0
      %v1113 = vadd.f32 %v1064, %v1112
      %v1114 = vpop.f32.mrb[0].mxu0
      %v1115 = vpop.f32.mrb[0].mxu0
      %v1116 = vadd.f32 %v1064, %v1115
      %v1117 = vpop.f32.mrb[0].mxu0
      %1118 = vdwg.mxu0
      %v1119 = vmul.f32 %v995, 0.17677669
      %v1120 = vmul.f32 %v998, 0.17677669
      %v1121 = vpack.c.bf16 %v1120, %v1119
      %v1123 = vunpack.c.l.b16 %v1121
      %v1124 = vunpack.c.h.b16 %v1121
      %v1125 = vpack.c.b16 %v1123, %v1123
      %v1126 = vpack.c.b16 %v1124, %v1124
      %v1127 = vpack.c.bf16 %v1057, %v1054
      %v1129 = vunpack.c.l.b16 %v1127
      %v1130 = vunpack.c.h.b16 %v1127
      %v1131 = vpack.c.b16 %v1129, %v1129
      %v1132 = vpack.c.b16 %v1130, %v1130
      %v1133 = vpack.c.bf16 %v1116, %v1113
      %v1135 = vunpack.c.l.b16 %v1133
      %v1136 = vunpack.c.h.b16 %v1133
      %v1137 = vpack.c.b16 %v1135, %v1135
      %v1138 = vpack.c.b16 %v1136, %v1136
      %v1140 = vsel %vm956, %v1125, 0
      %v1143 = vsel %vm956, %v1131, 0
      %1145 = vmatprep.subr.bf16.mxu0 0
      %1146 = vmatpush1.bf16.xpose.msra.mxu0 %v1143
      %1147 = vmatprep.subr.bf16.mxu0 0
      %1148 = vmatpush1.bf16.xpose.msra.mxu0 0
      %1149 = vmatprep.subr.bf16.mxu0 0
      %1150 = vmatpush1.bf16.xpose.msra.mxu0 0
      %1151 = vmatprep.subr.bf16.mxu0 0
      %1152 = vmatpush1.bf16.xpose.msra.mxu0 0
      %1153 = vmatprep.subr.bf16.mxu0 0
      %1154 = vmatpush1.bf16.xpose.msra.mxu0 0
      %1155 = vmatprep.subr.bf16.mxu0 0
      %1156 = vmatpush1.bf16.xpose.msra.mxu0 0
      %1157 = vmatprep.subr.bf16.mxu0 0
      %1158 = vmatpush1.bf16.xpose.msra.mxu0 0
      %1159 = vmatprep.subr.bf16.mxu0 0
      %1160 = vmatpush1.bf16.xpose.msra.mxu0 0
      %1161 = vmatprep.subr.bf16.mxu0 0
      %1162 = vmatpush1.bf16.xpose.msra.mxu0 0
      %1163 = vmatprep.subr.bf16.mxu0 0
      %1164 = vmatpush1.bf16.xpose.msra.mxu0 0
      %1165 = vmatprep.subr.bf16.mxu0 0
      %1166 = vmatpush1.bf16.xpose.msra.mxu0 0
      %1167 = vmatprep.subr.bf16.mxu0 0
      %1168 = vmatpush1.bf16.xpose.msra.mxu0 0
      %1169 = vmatprep.subr.bf16.mxu0 0
      %1170 = vmatpush1.bf16.xpose.msra.mxu0 0
      %1171 = vmatprep.subr.bf16.mxu0 0
      %1172 = vmatpush1.bf16.xpose.msra.mxu0 0
      %1173 = vmatprep.subr.bf16.mxu0 0
      %1174 = vmatpush1.bf16.xpose.msra.mxu0 0
      %1175 = vmatprep.subr.bf16.mxu0 0
      %1176 = vmatpush1.bf16.xpose.msra.mxu0 0
      %1177 = vmatprep.mubr.bf16.mxu0 0
      %1178 = vmatmul.mubr.bf16.gmra.mrb[0].mxu0 %v1140
      %v1179 = vpop.f32.mrb[0].mxu0
      %v1180 = vadd.f32 %v901, %v1179
      %v1181 = vpop.f32.mrb[0].mxu0
      %v1182 = vpop.f32.mrb[0].mxu0
      %v1183 = vpop.f32.mrb[0].mxu0
      %1184 = vdwg.mxu0
      %v1186 = vsel %vm956, %v1126, 0
      %v1189 = vsel %vm956, %v1132, 0
      %1191 = vmatprep.subr.bf16.mxu0 0
      %1192 = vmatpush1.bf16.xpose.msra.mxu0 %v1189
      %1193 = vmatprep.subr.bf16.mxu0 0
      %1194 = vmatpush1.bf16.xpose.msra.mxu0 0
      %1195 = vmatprep.subr.bf16.mxu0 0
      %1196 = vmatpush1.bf16.xpose.msra.mxu0 0
      %1197 = vmatprep.subr.bf16.mxu0 0
      %1198 = vmatpush1.bf16.xpose.msra.mxu0 0
      %1199 = vmatprep.subr.bf16.mxu0 0
      %1200 = vmatpush1.bf16.xpose.msra.mxu0 0
      %1201 = vmatprep.subr.bf16.mxu0 0
      %1202 = vmatpush1.bf16.xpose.msra.mxu0 0
      %1203 = vmatprep.subr.bf16.mxu0 0
      %1204 = vmatpush1.bf16.xpose.msra.mxu0 0
      %1205 = vmatprep.subr.bf16.mxu0 0
      %1206 = vmatpush1.bf16.xpose.msra.mxu0 0
      %1207 = vmatprep.subr.bf16.mxu0 0
      %1208 = vmatpush1.bf16.xpose.msra.mxu0 0
      %1209 = vmatprep.subr.bf16.mxu0 0
      %1210 = vmatpush1.bf16.xpose.msra.mxu0 0
      %1211 = vmatprep.subr.bf16.mxu0 0
      %1212 = vmatpush1.bf16.xpose.msra.mxu0 0
      %1213 = vmatprep.subr.bf16.mxu0 0
      %1214 = vmatpush1.bf16.xpose.msra.mxu0 0
      %1215 = vmatprep.subr.bf16.mxu0 0
      %1216 = vmatpush1.bf16.xpose.msra.mxu0 0
      %1217 = vmatprep.subr.bf16.mxu0 0
      %1218 = vmatpush1.bf16.xpose.msra.mxu0 0
      %1219 = vmatprep.subr.bf16.mxu0 0
      %1220 = vmatpush1.bf16.xpose.msra.mxu0 0
      %1221 = vmatprep.subr.bf16.mxu0 0
      %1222 = vmatpush1.bf16.xpose.msra.mxu0 0
      %1223 = vmatprep.mubr.bf16.mxu0 0
      %1224 = vmatmul.mubr.bf16.gmra.mrb[0].mxu0 %v1186
      %v1225 = vpop.f32.mrb[0].mxu0
      %v1226 = vadd.f32 %v902, %v1225
      %v1227 = vpop.f32.mrb[0].mxu0
      %v1228 = vpop.f32.mrb[0].mxu0
      %v1229 = vpop.f32.mrb[0].mxu0
      %1230 = vdwg.mxu0
      %vm1231 = vcmask 64512
      %v1232 = vsel %vm1231, %v1180, -inf
      %1233 = vmax.xlane.f32.xlu0 %v1232
      %v1234 = vpop.xlane.xlu0 %1233
      %v1235 = vsel %vm1231, %v1226, -inf
      %1236 = vmax.xlane.f32.xlu0 %v1235
      %v1237 = vpop.xlane.xlu0 %1236
      %v1238 = vsub.f32 %v1180, %v1234
      %v1239 = vsub.f32 %v1226, %v1237
      %v1240 = vmul.f32 %v1238, 1.442695
      %v1241 = vpow.pop %v1240
      %v1242 = vmul.f32 %v1239, 1.442695
      %v1243 = vpow.pop %v1242
      %v1244 = vsel %vm1231, %v1241, 0.0
      %1245 = vadd.xlane.f32.xlu0 %v1244
      %v1246 = vpop.xlane.xlu0 %1245
      %v1247 = vsel %vm1231, %v1243, 0.0
      %1248 = vadd.xlane.f32.xlu0 %v1247
      %v1249 = vpop.xlane.xlu0 %1248
      %v1250 = vrcp.pop %v1246
      %v1251 = vrcp.pop %v1249
      %v1252 = vmul.f32 %v1241, %v1250
      %v1253 = vmul.f32 %v1243, %v1251
      %v1254 = vpack.c.bf16 %v1252, %v1252
      %v1255 = vpack.c.bf16 %v1253, %v1253
      %v1257 = vsel %vm1231, %v1254, 0
      %vm1259 = vcmask 1043456
      %v1261 = vsel %vm1259, %v1137, 0
      %1263 = vmatprep.subr.bf16.mxu0 0
      %1264 = vmatpush1.bf16.msra.mxu0 %v1261
      %1265 = vmatprep.subr.bf16.mxu0 0
      %1266 = vmatpush1.bf16.msra.mxu0 0
      %1267 = vmatprep.subr.bf16.mxu0 0
      %1268 = vmatpush1.bf16.msra.mxu0 0
      %1269 = vmatprep.subr.bf16.mxu0 0
      %1270 = vmatpush1.bf16.msra.mxu0 0
      %1271 = vmatprep.subr.bf16.mxu0 0
      %1272 = vmatpush1.bf16.msra.mxu0 0
      %1273 = vmatprep.subr.bf16.mxu0 0
      %1274 = vmatpush1.bf16.msra.mxu0 0
      %1275 = vmatprep.subr.bf16.mxu0 0
      %1276 = vmatpush1.bf16.msra.mxu0 0
      %1277 = vmatprep.subr.bf16.mxu0 0
      %1278 = vmatpush1.bf16.msra.mxu0 0
      %1279 = vmatprep.subr.bf16.mxu0 0
      %1280 = vmatpush1.bf16.msra.mxu0 0
      %1281 = vmatprep.subr.bf16.mxu0 0
      %1282 = vmatpush1.bf16.msra.mxu0 0
      %1283 = vmatprep.subr.bf16.mxu0 0
      %1284 = vmatpush1.bf16.msra.mxu0 0
      %1285 = vmatprep.subr.bf16.mxu0 0
      %1286 = vmatpush1.bf16.msra.mxu0 0
      %1287 = vmatprep.subr.bf16.mxu0 0
      %1288 = vmatpush1.bf16.msra.mxu0 0
      %1289 = vmatprep.subr.bf16.mxu0 0
      %1290 = vmatpush1.bf16.msra.mxu0 0
      %1291 = vmatprep.subr.bf16.mxu0 0
      %1292 = vmatpush1.bf16.msra.mxu0 0
      %1293 = vmatprep.subr.bf16.mxu0 0
      %1294 = vmatpush1.bf16.msra.mxu0 0
      %1295 = vmatprep.mubr.bf16.mxu0 0
      %1296 = vmatmul.mubr.bf16.gmra.mrb[0].mxu0 %v1257
      %v1297 = vpop.f32.mrb[0].mxu0
      %v1298 = vadd.f32 0.0, %v1297
      %v1299 = vpop.f32.mrb[0].mxu0
      %v1300 = vpop.f32.mrb[0].mxu0
      %v1301 = vpop.f32.mrb[0].mxu0
      %1302 = vdwg.mxu0
      %v1304 = vsel %vm1231, %v1255, 0
      %v1307 = vsel %vm1259, %v1138, 0
      %1309 = vmatprep.subr.bf16.mxu0 0
      %1310 = vmatpush1.bf16.msra.mxu0 %v1307
      %1311 = vmatprep.subr.bf16.mxu0 0
      %1312 = vmatpush1.bf16.msra.mxu0 0
      %1313 = vmatprep.subr.bf16.mxu0 0
      %1314 = vmatpush1.bf16.msra.mxu0 0
      %1315 = vmatprep.subr.bf16.mxu0 0
      %1316 = vmatpush1.bf16.msra.mxu0 0
      %1317 = vmatprep.subr.bf16.mxu0 0
      %1318 = vmatpush1.bf16.msra.mxu0 0
      %1319 = vmatprep.subr.bf16.mxu0 0
      %1320 = vmatpush1.bf16.msra.mxu0 0
      %1321 = vmatprep.subr.bf16.mxu0 0
      %1322 = vmatpush1.bf16.msra.mxu0 0
      %1323 = vmatprep.subr.bf16.mxu0 0
      %1324 = vmatpush1.bf16.msra.mxu0 0
      %1325 = vmatprep.subr.bf16.mxu0 0
      %1326 = vmatpush1.bf16.msra.mxu0 0
      %1327 = vmatprep.subr.bf16.mxu0 0
      %1328 = vmatpush1.bf16.msra.mxu0 0
      %1329 = vmatprep.subr.bf16.mxu0 0
      %1330 = vmatpush1.bf16.msra.mxu0 0
      %1331 = vmatprep.subr.bf16.mxu0 0
      %1332 = vmatpush1.bf16.msra.mxu0 0
      %1333 = vmatprep.subr.bf16.mxu0 0
      %1334 = vmatpush1.bf16.msra.mxu0 0
      %1335 = vmatprep.subr.bf16.mxu0 0
      %1336 = vmatpush1.bf16.msra.mxu0 0
      %1337 = vmatprep.subr.bf16.mxu0 0
      %1338 = vmatpush1.bf16.msra.mxu0 0
      %1339 = vmatprep.subr.bf16.mxu0 0
      %1340 = vmatpush1.bf16.msra.mxu0 0
      %1341 = vmatprep.mubr.bf16.mxu0 0
      %1342 = vmatmul.mubr.bf16.gmra.mrb[0].mxu0 %v1304
      %v1343 = vpop.f32.mrb[0].mxu0
      %v1344 = vadd.f32 0.0, %v1343
      %v1345 = vpop.f32.mrb[0].mxu0
      %v1346 = vpop.f32.mrb[0].mxu0
      %v1347 = vpop.f32.mrb[0].mxu0
      %1348 = vdwg.mxu0
      %v1349 = vpack.c.bf16 %v1344, %v1298
      %v1351 = vlaneseq
      %v1352 = vshrl.u32 %v1351, 7
      %v1353 = vsub.s32 0, %v1352
      %v1354 = vrot.slane %v922, %v1353
      %v1360 = vunpack.c.l.b16 %v918
      %v1361 = vunpack.c.l.b16 %v919
      %v1362 = vunpack.c.l.b16 %v920
      %v1363 = vunpack.c.l.b16 %v921
      %v1364 = vpack.c.b16 %v1361, %v1360
      %v1365 = vpack.c.b16 %v1363, %v1362
      %v1369 = vsel %vm956, %v1349, 0
      %1371 = vmatprep.subr.bf16.mxu0 0
      %1372 = vmatpush1.bf16.msra.mxu0 %v1364
      %1373 = vmatprep.subr.bf16.mxu0 0
      %1374 = vmatpush1.bf16.msra.mxu0 %v1365
      %1375 = vmatprep.subr.bf16.mxu0 0
      %1376 = vmatpush1.bf16.msra.mxu0 0
      %1377 = vmatprep.subr.bf16.mxu0 0
      %1378 = vmatpush1.bf16.msra.mxu0 0
      %1379 = vmatprep.subr.bf16.mxu0 0
      %1380 = vmatpush1.bf16.msra.mxu0 0
      %1381 = vmatprep.subr.bf16.mxu0 0
      %1382 = vmatpush1.bf16.msra.mxu0 0
      %1383 = vmatprep.subr.bf16.mxu0 0
      %1384 = vmatpush1.bf16.msra.mxu0 0
      %1385 = vmatprep.subr.bf16.mxu0 0
      %1386 = vmatpush1.bf16.msra.mxu0 0
      %1387 = vmatprep.subr.bf16.mxu0 0
      %1388 = vmatpush1.bf16.msra.mxu0 0
      %1389 = vmatprep.subr.bf16.mxu0 0
      %1390 = vmatpush1.bf16.msra.mxu0 0
      %1391 = vmatprep.subr.bf16.mxu0 0
      %1392 = vmatpush1.bf16.msra.mxu0 0
      %1393 = vmatprep.subr.bf16.mxu0 0
      %1394 = vmatpush1.bf16.msra.mxu0 0
      %1395 = vmatprep.subr.bf16.mxu0 0
      %1396 = vmatpush1.bf16.msra.mxu0 0
      %1397 = vmatprep.subr.bf16.mxu0 0
      %1398 = vmatpush1.bf16.msra.mxu0 0
      %1399 = vmatprep.subr.bf16.mxu0 0
      %1400 = vmatpush1.bf16.msra.mxu0 0
      %1401 = vmatprep.subr.bf16.mxu0 0
      %1402 = vmatpush1.bf16.msra.mxu0 0
      %1403 = vmatprep.mubr.bf16.mxu0 0
      %1404 = vmatmul.mubr.bf16.gmra.mrb[0].mxu0 %v1369
      %v1405 = vpop.f32.mrb[0].mxu0
      %v1406 = vadd.f32 %v1354, %v1405
      %v1407 = vpop.f32.mrb[0].mxu0
      %v1408 = vpop.f32.mrb[0].mxu0
      %v1409 = vadd.f32 %v1354, %v1408
      %v1410 = vpop.f32.mrb[0].mxu0
      %1411 = vdwg.mxu0
      %v1412 = vadd.f32 %v864, %v1406
      %v1413 = vadd.f32 %v865, %v1409
      %v1414 = vsel %vm956, %v1412, 0.0
      %1415 = vadd.xlane.f32.xlu0 %v1414
      %v1416 = vpop.xlane.xlu0 %1415
      %v1417 = vsel %vm956, %v1413, 0.0
      %1418 = vadd.xlane.f32.xlu0 %v1417
      %v1419 = vpop.xlane.xlu0 %1418
      %v1420 = vrcp.pop 32.0
      %v1421 = vmul.f32 %v1416, %v1420
      %v1422 = vmul.f32 %v1419, %v1420
      %v1423 = vsub.f32 %v1412, %v1421
      %v1424 = vsub.f32 %v1413, %v1422
      %v1425 = vmul.f32 %v1423, %v1423
      %v1426 = vmul.f32 %v1424, %v1424
      %v1427 = vsel %vm956, %v1425, 0.0
      %1428 = vadd.xlane.f32.xlu0 %v1427
      %v1429 = vpop.xlane.xlu0 %1428
      %v1430 = vsel %vm956, %v1426, 0.0
      %1431 = vadd.xlane.f32.xlu0 %v1430
      %v1432 = vpop.xlane.xlu0 %1431
      %v1433 = vmul.f32 %v1429, %v1420
      %v1434 = vmul.f32 %v1432, %v1420
      %v1435 = vadd.f32 %v1433, 1e-05
      %v1436 = vadd.f32 %v1434, 1e-05
      %v1437 = vrsqrt.pop %v1435
      %v1438 = vrsqrt.pop %v1436
      %v1439 = vmul.f32 %v1423, %v1437
      %v1440 = vmul.f32 %v1424, %v1438
      %v1442 = vlaneseq
      %v1443 = vshrl.u32 %v1442, 7
      %v1444 = vsub.s32 0, %v1443
      %v1445 = vrot.slane %v923, %v1444
      %v1447 = vmul.f32 %v1439, %v1445
      %v1448 = vmul.f32 %v1440, %v1445
      %v1450 = vlaneseq
      %v1451 = vshrl.u32 %v1450, 7
      %v1452 = vsub.s32 0, %v1451
      %v1453 = vrot.slane %v924, %v1452
      %v1455 = vadd.f32 %v1447, %v1453
      %v1456 = vadd.f32 %v1448, %v1453
      %v1457 = vpack.c.bf16 %v1456, %v1455
      %v1459 = vlaneseq
      %v1460 = vshrl.u32 %v1459, 7
      %v1461 = vsub.s32 0, %v1460
      %v1462 = vrot.slane %v929, %v1461
      %v1468 = vunpack.c.l.b16 %v925
      %v1469 = vunpack.c.l.b16 %v926
      %v1470 = vunpack.c.l.b16 %v927
      %v1471 = vunpack.c.l.b16 %v928
      %v1472 = vpack.c.b16 %v1469, %v1468
      %v1473 = vpack.c.b16 %v1471, %v1470
      %v1477 = vsel %vm956, %v1457, 0
      %1479 = vmatprep.subr.bf16.mxu0 0
      %1480 = vmatpush1.bf16.msra.mxu0 %v1472
      %1481 = vmatprep.subr.bf16.mxu0 0
      %1482 = vmatpush1.bf16.msra.mxu0 %v1473
      %1483 = vmatprep.subr.bf16.mxu0 0
      %1484 = vmatpush1.bf16.msra.mxu0 0
      %1485 = vmatprep.subr.bf16.mxu0 0
      %1486 = vmatpush1.bf16.msra.mxu0 0
      %1487 = vmatprep.subr.bf16.mxu0 0
      %1488 = vmatpush1.bf16.msra.mxu0 0
      %1489 = vmatprep.subr.bf16.mxu0 0
      %1490 = vmatpush1.bf16.msra.mxu0 0
      %1491 = vmatprep.subr.bf16.mxu0 0
      %1492 = vmatpush1.bf16.msra.mxu0 0
      %1493 = vmatprep.subr.bf16.mxu0 0
      %1494 = vmatpush1.bf16.msra.mxu0 0
      %1495 = vmatprep.subr.bf16.mxu0 0
      %1496 = vmatpush1.bf16.msra.mxu0 0
      %1497 = vmatprep.subr.bf16.mxu0 0
      %1498 = vmatpush1.bf16.msra.mxu0 0
      %1499 = vmatprep.subr.bf16.mxu0 0
      %1500 = vmatpush1.bf16.msra.mxu0 0
      %1501 = vmatprep.subr.bf16.mxu0 0
      %1502 = vmatpush1.bf16.msra.mxu0 0
      %1503 = vmatprep.subr.bf16.mxu0 0
      %1504 = vmatpush1.bf16.msra.mxu0 0
      %1505 = vmatprep.subr.bf16.mxu0 0
      %1506 = vmatpush1.bf16.msra.mxu0 0
      %1507 = vmatprep.subr.bf16.mxu0 0
      %1508 = vmatpush1.bf16.msra.mxu0 0
      %1509 = vmatprep.subr.bf16.mxu0 0
      %1510 = vmatpush1.bf16.msra.mxu0 0
      %1511 = vmatprep.mubr.bf16.mxu0 0
      %1512 = vmatmul.mubr.bf16.gmra.mrb[0].mxu0 %v1477
      %v1513 = vpop.f32.mrb[0].mxu0
      %v1514 = vadd.f32 %v1462, %v1513
      %v1515 = vpop.f32.mrb[0].mxu0
      %v1516 = vpop.f32.mrb[0].mxu0
      %v1517 = vadd.f32 %v1462, %v1516
      %v1518 = vpop.f32.mrb[0].mxu0
      %1519 = vdwg.mxu0
      %v1520 = vmax.f32 %v1514, 0.0
      %v1521 = vmax.f32 %v1517, 0.0
      %v1522 = vpack.c.bf16 %v1521, %v1520
      %v1524 = vlaneseq
      %v1525 = vshrl.u32 %v1524, 7
      %v1526 = vsub.s32 0, %v1525
      %v1527 = vrot.slane %v934, %v1526
      %v1533 = vunpack.c.l.b16 %v930
      %v1534 = vunpack.c.l.b16 %v931
      %v1535 = vunpack.c.l.b16 %v932
      %v1536 = vunpack.c.l.b16 %v933
      %v1537 = vpack.c.b16 %v1534, %v1533
      %v1538 = vpack.c.b16 %v1536, %v1535
      %v1542 = vsel %vm956, %v1522, 0
      %1544 = vmatprep.subr.bf16.mxu0 0
      %1545 = vmatpush1.bf16.msra.mxu0 %v1537
      %1546 = vmatprep.subr.bf16.mxu0 0
      %1547 = vmatpush1.bf16.msra.mxu0 %v1538
      %1548 = vmatprep.subr.bf16.mxu0 0
      %1549 = vmatpush1.bf16.msra.mxu0 0
      %1550 = vmatprep.subr.bf16.mxu0 0
      %1551 = vmatpush1.bf16.msra.mxu0 0
      %1552 = vmatprep.subr.bf16.mxu0 0
      %1553 = vmatpush1.bf16.msra.mxu0 0
      %1554 = vmatprep.subr.bf16.mxu0 0
      %1555 = vmatpush1.bf16.msra.mxu0 0
      %1556 = vmatprep.subr.bf16.mxu0 0
      %1557 = vmatpush1.bf16.msra.mxu0 0
      %1558 = vmatprep.subr.bf16.mxu0 0
      %1559 = vmatpush1.bf16.msra.mxu0 0
      %1560 = vmatprep.subr.bf16.mxu0 0
      %1561 = vmatpush1.bf16.msra.mxu0 0
      %1562 = vmatprep.subr.bf16.mxu0 0
      %1563 = vmatpush1.bf16.msra.mxu0 0
      %1564 = vmatprep.subr.bf16.mxu0 0
      %1565 = vmatpush1.bf16.msra.mxu0 0
      %1566 = vmatprep.subr.bf16.mxu0 0
      %1567 = vmatpush1.bf16.msra.mxu0 0
      %1568 = vmatprep.subr.bf16.mxu0 0
      %1569 = vmatpush1.bf16.msra.mxu0 0
      %1570 = vmatprep.subr.bf16.mxu0 0
      %1571 = vmatpush1.bf16.msra.mxu0 0
      %1572 = vmatprep.subr.bf16.mxu0 0
      %1573 = vmatpush1.bf16.msra.mxu0 0
      %1574 = vmatprep.subr.bf16.mxu0 0
      %1575 = vmatpush1.bf16.msra.mxu0 0
      %1576 = vmatprep.mubr.bf16.mxu0 0
      %1577 = vmatmul.mubr.bf16.gmra.mrb[0].mxu0 %v1542
      %v1578 = vpop.f32.mrb[0].mxu0
      %v1579 = vadd.f32 %v1527, %v1578
      %v1580 = vpop.f32.mrb[0].mxu0
      %v1581 = vpop.f32.mrb[0].mxu0
      %v1582 = vadd.f32 %v1527, %v1581
      %v1583 = vpop.f32.mrb[0].mxu0
      %1584 = vdwg.mxu0
      %v1585 = vadd.f32 %v1455, %v1579
      %v1586 = vadd.f32 %v1456, %v1582
      %v1587 = vsel %vm956, %v1585, 0.0
      %1588 = vadd.xlane.f32.xlu0 %v1587
      %v1589 = vpop.xlane.xlu0 %1588
      %v1590 = vsel %vm956, %v1586, 0.0
      %1591 = vadd.xlane.f32.xlu0 %v1590
      %v1592 = vpop.xlane.xlu0 %1591
      %v1593 = vmul.f32 %v1589, %v1420
      %v1594 = vmul.f32 %v1592, %v1420
      %v1595 = vsub.f32 %v1585, %v1593
      %v1596 = vsub.f32 %v1586, %v1594
      %v1597 = vmul.f32 %v1595, %v1595
      %v1598 = vmul.f32 %v1596, %v1596
      %v1599 = vsel %vm956, %v1597, 0.0
      %1600 = vadd.xlane.f32.xlu0 %v1599
      %v1601 = vpop.xlane.xlu0 %1600
      %v1602 = vsel %vm956, %v1598, 0.0
      %1603 = vadd.xlane.f32.xlu0 %v1602
      %v1604 = vpop.xlane.xlu0 %1603
      %v1605 = vmul.f32 %v1601, %v1420
      %v1606 = vmul.f32 %v1604, %v1420
      %v1607 = vadd.f32 %v1605, 1e-05
      %v1608 = vadd.f32 %v1606, 1e-05
      %v1609 = vrsqrt.pop %v1607
      %v1610 = vrsqrt.pop %v1608
      %v1611 = vmul.f32 %v1595, %v1609
      %v1612 = vmul.f32 %v1596, %v1610
      %v1614 = vlaneseq
      %v1615 = vshrl.u32 %v1614, 7
      %v1616 = vsub.s32 0, %v1615
      %v1617 = vrot.slane %v935, %v1616
      %v1619 = vmul.f32 %v1611, %v1617
      %v1620 = vmul.f32 %v1612, %v1617
      %v1622 = vlaneseq
      %v1623 = vshrl.u32 %v1622, 7
      %v1624 = vsub.s32 0, %v1623
      %v1625 = vrot.slane %v936, %v1624
      %v1627 = vadd.f32 %v1619, %v1625
      %v1628 = vadd.f32 %v1620, %v1625
      %1629 = vst.msk [vmem:[%s862] sm:$0xff] %vm956, %v1627
      %1630 = vst.msk [vmem:[%s862 + $0x8] sm:$0xff] %vm956, %v1628
      %p1631 = scmp.lt.s32.totalorder %s30, 2
      %s1632 = scalar_select %p1631, %s30, 2
      %s1633 = smul.addr %s1632, 2
      %s1634 = smul.addr %s1633, 8
      %s1635 = scalar_lea.vmem %s19, %s1634
      // Predicated region
      $region97: #{multi_sequence_forward.2} parent=95 // pred_check
        %p1636 = pneg %p532
      $region98: #{multi_sequence_forward.2} parent=95 // pred_check_branch
        %1638 = sbr.rel (%p1636) target = $region100
      $region99: #{multi_sequence_forward.2} parent=95 // pred_region
        _
      $region100: #{multi_sequence_forward.2} parent=95 // pred_fallthru
        _
    $region96: #{multi_sequence_forward.2} parent=5 // pred_fallthru
      _
    %p1639 = scmp.le.s32.totalorder 2, %s25
    // Predicated region
    $region101: #{multi_sequence_forward.2} parent=5 // pred_check
      %p1640 = pneg %p1639
    $region102: #{multi_sequence_forward.2} parent=5 // pred_check_branch
      %1642 = sbr.rel (%p1640) target = $region104
    $region103: #{multi_sequence_forward.2} parent=5 // pred_region
      %s1643 = ssub.s32 %s25, 2
      // Predicated region
      $region105: #{multi_sequence_forward.2} parent=103 // pred_check
        %p1644 = pneg %p538
      $region106: #{multi_sequence_forward.2} parent=103 // pred_check_branch
        %1646 = sbr.rel (%p1644) target = $region108
      $region107: #{multi_sequence_forward.2} parent=103 // pred_region
        %p1647 = scmp.lt.s32.totalorder %s31, 2
        %s1648 = scalar_select %p1647, %s31, 2
        %s1649 = smul.addr %s1648, 2
        %s1650 = smul.addr %s1649, 8
        %s1651 = scalar_lea.vmem %s19, %s1650
      $region108: #{multi_sequence_forward.2} parent=103 // pred_fallthru
        _
    $region104: #{multi_sequence_forward.2} parent=5 // pred_fallthru
      _
  $region6: #{multi_sequence_forward.2} parent=0 // loop_footer
    %s29 = sadd.s32 1, %s25
  $region7: #{multi_sequence_forward.2} parent=0 // loop_footer_branch
    %24 = sbr.rel target = $region3
  $region8: #{multi_sequence_forward.2} parent=0 // loop_exit
    _

// kernel: multi_sequence_forward.3
$region0: #{multi_sequence_forward.3}
  #allocation0 [shape = 'u32[]', space=smem, size = 0x4, offset = 0x4, fixed_abs, tag = 'smem constant byte address 0x4 - core index']
  #allocation1 [shape = 'u32[144,128]{1,0:T(1,128)}', space=vmem, size = 0x12000, scoped, tag = 'internal scratch']
  #allocation2 [shape = 'bf16[2,32]{1,0:T(2,128)(2,1)}', space=vmem, size = 0x200, scoped, tag = 'scratch operand']
  %s0 = inlined_call_operand.vmem [shape: f32[2,8,96], index: 0, kind: input, shape index: {}]
  %s1 = inlined_call_operand.vmem [shape: f32[8,8], index: 1, kind: input, shape index: {}]
  %s2 = inlined_call_operand.vmem [shape: f32[2,8], index: 2, kind: input, shape index: {}]
  %s3 = inlined_call_operand.vmem [shape: bf16[96,96], index: 3, kind: input, shape index: {}]
  %s4 = inlined_call_operand.vmem [shape: bf16[96,96], index: 4, kind: input, shape index: {}]
  %s5 = inlined_call_operand.vmem [shape: bf16[96,96], index: 5, kind: input, shape index: {}]
  %s6 = inlined_call_operand.vmem [shape: f32[1,96], index: 6, kind: input, shape index: {}]
  %s7 = inlined_call_operand.vmem [shape: f32[1,96], index: 7, kind: input, shape index: {}]
  %s8 = inlined_call_operand.vmem [shape: f32[1,96], index: 8, kind: input, shape index: {}]
  %s9 = inlined_call_operand.vmem [shape: bf16[96,96], index: 9, kind: input, shape index: {}]
  %s10 = inlined_call_operand.vmem [shape: f32[1,96], index: 10, kind: input, shape index: {}]
  %s11 = inlined_call_operand.vmem [shape: f32[1,96], index: 11, kind: input, shape index: {}]
  %s12 = inlined_call_operand.vmem [shape: f32[1,96], index: 12, kind: input, shape index: {}]
  %s13 = inlined_call_operand.vmem [shape: bf16[96,96], index: 13, kind: input, shape index: {}]
  %s14 = inlined_call_operand.vmem [shape: f32[1,96], index: 14, kind: input, shape index: {}]
  %s15 = inlined_call_operand.vmem [shape: bf16[96,96], index: 15, kind: input, shape index: {}]
  %s16 = inlined_call_operand.vmem [shape: f32[1,96], index: 16, kind: input, shape index: {}]
  %s17 = inlined_call_operand.vmem [shape: f32[1,96], index: 17, kind: input, shape index: {}]
  %s18 = inlined_call_operand.vmem [shape: f32[1,96], index: 18, kind: input, shape index: {}]
  %s19 = inlined_call_operand.vmem [shape: bf16[96,32], index: 19, kind: input, shape index: {}]
  %s20 = inlined_call_operand.vmem [shape: f32[1,32], index: 20, kind: input, shape index: {}]
  %s21 = inlined_call_operand.vmem [shape: bf16[64,32], index: 21, kind: input, shape index: {}]
  %s22 = inlined_call_operand.hbm [shape: f32[2,64], index: 22, kind: output, shape index: {}]
  %s23 = sld [smem:[#allocation0]]
  $region102: #{multi_sequence_forward.3} parent=0
    _
  %s25 = ssub.s32 1, %s23
  %s26 = scalar_select 0, %s25, %s23
  $region1: #{multi_sequence_forward.3} parent=0
    #allocation3 [shape = 'u8[1024]{0}', space=vmem, size = 0x400, scoped, tag = 'output window, operand 0, single buffered']
    #allocation4 [shape = 's32[1]{0}', space=sflag, size = 0x4, scoped, tag = 'scoped memory for multi_sequence_forward.3']
    %27 = vsyncpa [#allocation4], 0
    // Predicated region
    $region2: #{multi_sequence_forward.3} parent=1 // pred_check
      _
    $region3: #{multi_sequence_forward.3} parent=1 // pred_check_branch
      %29 = sbr.rel (0) target = $region5
    $region4: #{multi_sequence_forward.3} parent=1 // pred_region
      _
    $region5: #{multi_sequence_forward.3} parent=1 // pred_fallthru
      _
    // Predicated region
    $region6: #{multi_sequence_forward.3} parent=1 // pred_check
      _
    $region7: #{multi_sequence_forward.3} parent=1 // pred_check_branch
      %31 = sbr.rel (0) target = $region9
    $region8: #{multi_sequence_forward.3} parent=1 // pred_region
      _
    $region9: #{multi_sequence_forward.3} parent=1 // pred_fallthru
      _
    // Predicated region
    $region10: #{multi_sequence_forward.3} parent=1 // pred_check
      _
    $region11: #{multi_sequence_forward.3} parent=1 // pred_check_branch
      %33 = sbr.rel (0) target = $region13
    $region12: #{multi_sequence_forward.3} parent=1 // pred_region
      _
    $region13: #{multi_sequence_forward.3} parent=1 // pred_fallthru
      _
    // Predicated region
    $region14: #{multi_sequence_forward.3} parent=1 // pred_check
      _
    $region15: #{multi_sequence_forward.3} parent=1 // pred_check_branch
      %35 = sbr.rel (0) target = $region17
    $region16: #{multi_sequence_forward.3} parent=1 // pred_region
      _
    $region17: #{multi_sequence_forward.3} parent=1 // pred_fallthru
      _
    // Predicated region
    $region18: #{multi_sequence_forward.3} parent=1 // pred_check
      _
    $region19: #{multi_sequence_forward.3} parent=1 // pred_check_branch
      %37 = sbr.rel (0) target = $region21
    $region20: #{multi_sequence_forward.3} parent=1 // pred_region
      _
    $region21: #{multi_sequence_forward.3} parent=1 // pred_fallthru
      _
    // Predicated region
    $region22: #{multi_sequence_forward.3} parent=1 // pred_check
      _
    $region23: #{multi_sequence_forward.3} parent=1 // pred_check_branch
      %39 = sbr.rel (0) target = $region25
    $region24: #{multi_sequence_forward.3} parent=1 // pred_region
      _
    $region25: #{multi_sequence_forward.3} parent=1 // pred_fallthru
      _
    // Predicated region
    $region26: #{multi_sequence_forward.3} parent=1 // pred_check
      _
    $region27: #{multi_sequence_forward.3} parent=1 // pred_check_branch
      %41 = sbr.rel (0) target = $region29
    $region28: #{multi_sequence_forward.3} parent=1 // pred_region
      _
    $region29: #{multi_sequence_forward.3} parent=1 // pred_fallthru
      _
    // Predicated region
    $region30: #{multi_sequence_forward.3} parent=1 // pred_check
      _
    $region31: #{multi_sequence_forward.3} parent=1 // pred_check_branch
      %43 = sbr.rel (0) target = $region33
    $region32: #{multi_sequence_forward.3} parent=1 // pred_region
      _
    $region33: #{multi_sequence_forward.3} parent=1 // pred_fallthru
      _
    // Predicated region
    $region34: #{multi_sequence_forward.3} parent=1 // pred_check
      _
    $region35: #{multi_sequence_forward.3} parent=1 // pred_check_branch
      %45 = sbr.rel (0) target = $region37
    $region36: #{multi_sequence_forward.3} parent=1 // pred_region
      _
    $region37: #{multi_sequence_forward.3} parent=1 // pred_fallthru
      _
    // Predicated region
    $region38: #{multi_sequence_forward.3} parent=1 // pred_check
      _
    $region39: #{multi_sequence_forward.3} parent=1 // pred_check_branch
      %47 = sbr.rel (0) target = $region41
    $region40: #{multi_sequence_forward.3} parent=1 // pred_region
      _
    $region41: #{multi_sequence_forward.3} parent=1 // pred_fallthru
      _
    // Predicated region
    $region42: #{multi_sequence_forward.3} parent=1 // pred_check
      _
    $region43: #{multi_sequence_forward.3} parent=1 // pred_check_branch
      %49 = sbr.rel (0) target = $region45
    $region44: #{multi_sequence_forward.3} parent=1 // pred_region
      _
    $region45: #{multi_sequence_forward.3} parent=1 // pred_fallthru
      _
    // Predicated region
    $region46: #{multi_sequence_forward.3} parent=1 // pred_check
      _
    $region47: #{multi_sequence_forward.3} parent=1 // pred_check_branch
      %51 = sbr.rel (0) target = $region49
    $region48: #{multi_sequence_forward.3} parent=1 // pred_region
      _
    $region49: #{multi_sequence_forward.3} parent=1 // pred_fallthru
      _
    // Predicated region
    $region50: #{multi_sequence_forward.3} parent=1 // pred_check
      _
    $region51: #{multi_sequence_forward.3} parent=1 // pred_check_branch
      %53 = sbr.rel (0) target = $region53
    $region52: #{multi_sequence_forward.3} parent=1 // pred_region
      _
    $region53: #{multi_sequence_forward.3} parent=1 // pred_fallthru
      _
    // Predicated region
    $region54: #{multi_sequence_forward.3} parent=1 // pred_check
      _
    $region55: #{multi_sequence_forward.3} parent=1 // pred_check_branch
      %55 = sbr.rel (0) target = $region57
    $region56: #{multi_sequence_forward.3} parent=1 // pred_region
      _
    $region57: #{multi_sequence_forward.3} parent=1 // pred_fallthru
      _
    // Predicated region
    $region58: #{multi_sequence_forward.3} parent=1 // pred_check
      _
    $region59: #{multi_sequence_forward.3} parent=1 // pred_check_branch
      %57 = sbr.rel (0) target = $region61
    $region60: #{multi_sequence_forward.3} parent=1 // pred_region
      _
    $region61: #{multi_sequence_forward.3} parent=1 // pred_fallthru
      _
    // Predicated region
    $region62: #{multi_sequence_forward.3} parent=1 // pred_check
      _
    $region63: #{multi_sequence_forward.3} parent=1 // pred_check_branch
      %59 = sbr.rel (0) target = $region65
    $region64: #{multi_sequence_forward.3} parent=1 // pred_region
      _
    $region65: #{multi_sequence_forward.3} parent=1 // pred_fallthru
      _
    // Predicated region
    $region66: #{multi_sequence_forward.3} parent=1 // pred_check
      _
    $region67: #{multi_sequence_forward.3} parent=1 // pred_check_branch
      %61 = sbr.rel (0) target = $region69
    $region68: #{multi_sequence_forward.3} parent=1 // pred_region
      _
    $region69: #{multi_sequence_forward.3} parent=1 // pred_fallthru
      _
    // Predicated region
    $region70: #{multi_sequence_forward.3} parent=1 // pred_check
      _
    $region71: #{multi_sequence_forward.3} parent=1 // pred_check_branch
      %63 = sbr.rel (0) target = $region73
    $region72: #{multi_sequence_forward.3} parent=1 // pred_region
      _
    $region73: #{multi_sequence_forward.3} parent=1 // pred_fallthru
      _
    // Predicated region
    $region74: #{multi_sequence_forward.3} parent=1 // pred_check
      _
    $region75: #{multi_sequence_forward.3} parent=1 // pred_check_branch
      %65 = sbr.rel (0) target = $region77
    $region76: #{multi_sequence_forward.3} parent=1 // pred_region
      _
    $region77: #{multi_sequence_forward.3} parent=1 // pred_fallthru
      _
    // Predicated region
    $region78: #{multi_sequence_forward.3} parent=1 // pred_check
      _
    $region79: #{multi_sequence_forward.3} parent=1 // pred_check_branch
      %67 = sbr.rel (0) target = $region81
    $region80: #{multi_sequence_forward.3} parent=1 // pred_region
      _
    $region81: #{multi_sequence_forward.3} parent=1 // pred_fallthru
      _
    // Predicated region
    $region82: #{multi_sequence_forward.3} parent=1 // pred_check
      _
    $region83: #{multi_sequence_forward.3} parent=1 // pred_check_branch
      %69 = sbr.rel (0) target = $region85
    $region84: #{multi_sequence_forward.3} parent=1 // pred_region
      _
    $region85: #{multi_sequence_forward.3} parent=1 // pred_fallthru
      _
    // Predicated region
    $region86: #{multi_sequence_forward.3} parent=1 // pred_check
      _
    $region87: #{multi_sequence_forward.3} parent=1 // pred_check_branch
      %71 = sbr.rel (0) target = $region89
    $region88: #{multi_sequence_forward.3} parent=1 // pred_region
      _
    $region89: #{multi_sequence_forward.3} parent=1 // pred_fallthru
      _
    %p73 = scmp.eq.s32.totalorder 0, 0
    // Predicated region
    $region90: #{multi_sequence_forward.3} parent=1 // pred_check
      %p74 = pneg %p73
    $region91: #{multi_sequence_forward.3} parent=1 // pred_check_branch
      %76 = sbr.rel (%p74) target = $region93
    $region92: #{multi_sequence_forward.3} parent=1 // pred_region
      %v77 = vld [vmem:[%s0] sm:$0xff]
      %v78 = vld [vmem:[%s0 + $0x8] sm:$0xff]
      %v79 = vpack.c.bf16 %v78, %v77
      %v80 = vpack.c.bf16 %v77, %v77
      %v81 = vpack.c.bf16 %v78, %v78
      %v82 = vld [vmem:[%s4] sm:$0xf]
      %v83 = vld [vmem:[%s4 + $0x4] sm:$0xf]
      %v84 = vld [vmem:[%s4 + $0x8] sm:$0xf]
      %v85 = vld [vmem:[%s4 + $0xc] sm:$0xf]
      %v86 = vld [vmem:[%s4 + $0x10] sm:$0xf]
      %v87 = vld [vmem:[%s4 + $0x14] sm:$0xf]
      %v88 = vld [vmem:[%s4 + $0x18] sm:$0xf]
      %v89 = vld [vmem:[%s4 + $0x1c] sm:$0xf]
      %v90 = vld [vmem:[%s4 + $0x20] sm:$0xf]
      %v91 = vld [vmem:[%s4 + $0x24] sm:$0xf]
      %v92 = vld [vmem:[%s4 + $0x28] sm:$0xf]
      %v93 = vld [vmem:[%s4 + $0x2c] sm:$0xf]
      %v94 = vld [vmem:[%s7] sm:$0x1]
      %v96 = vlaneseq
      %v97 = vshrl.u32 %v96, 7
      %v98 = vsub.s32 0, %v97
      %v99 = vrot.slane %v94, %v98
      %v113 = vunpack.c.l.b16 %v82
      %v114 = vunpack.c.l.b16 %v83
      %v115 = vunpack.c.l.b16 %v84
      %v116 = vunpack.c.l.b16 %v85
      %v117 = vunpack.c.l.b16 %v86
      %v118 = vunpack.c.l.b16 %v87
      %v119 = vunpack.c.l.b16 %v88
      %v120 = vunpack.c.l.b16 %v89
      %v121 = vunpack.c.l.b16 %v90
      %v122 = vunpack.c.l.b16 %v91
      %v123 = vunpack.c.l.b16 %v92
      %v124 = vunpack.c.l.b16 %v93
      %v125 = vpack.c.b16 %v114, %v113
      %v126 = vpack.c.b16 %v116, %v115
      %v127 = vpack.c.b16 %v118, %v117
      %v128 = vpack.c.b16 %v120, %v119
      %v129 = vpack.c.b16 %v122, %v121
      %v130 = vpack.c.b16 %v124, %v123
      %vm137 = vcmask 785408
      %v139 = vsel %vm137, %v79, 0
      %141 = vmatprep.subr.bf16.mxu0 0
      %142 = vmatpush1.bf16.msra.mxu0 %v125
      %143 = vmatprep.subr.bf16.mxu0 0
      %144 = vmatpush1.bf16.msra.mxu0 %v126
      %145 = vmatprep.subr.bf16.mxu0 0
      %146 = vmatpush1.bf16.msra.mxu0 %v127
      %147 = vmatprep.subr.bf16.mxu0 0
      %148 = vmatpush1.bf16.msra.mxu0 %v128
      %149 = vmatprep.subr.bf16.mxu0 0
      %150 = vmatpush1.bf16.msra.mxu0 %v129
      %151 = vmatprep.subr.bf16.mxu0 0
      %152 = vmatpush1.bf16.msra.mxu0 %v130
      %153 = vmatprep.subr.bf16.mxu0 0
      %154 = vmatpush1.bf16.msra.mxu0 0
      %155 = vmatprep.subr.bf16.mxu0 0
      %156 = vmatpush1.bf16.msra.mxu0 0
      %157 = vmatprep.subr.bf16.mxu0 0
      %158 = vmatpush1.bf16.msra.mxu0 0
      %159 = vmatprep.subr.bf16.mxu0 0
      %160 = vmatpush1.bf16.msra.mxu0 0
      %161 = vmatprep.subr.bf16.mxu0 0
      %162 = vmatpush1.bf16.msra.mxu0 0
      %163 = vmatprep.subr.bf16.mxu0 0
      %164 = vmatpush1.bf16.msra.mxu0 0
      %165 = vmatprep.subr.bf16.mxu0 0
      %166 = vmatpush1.bf16.msra.mxu0 0
      %167 = vmatprep.subr.bf16.mxu0 0
      %168 = vmatpush1.bf16.msra.mxu0 0
      %169 = vmatprep.subr.bf16.mxu0 0
      %170 = vmatpush1.bf16.msra.mxu0 0
      %171 = vmatprep.subr.bf16.mxu0 0
      %172 = vmatpush1.bf16.msra.mxu0 0
      %173 = vmatprep.mubr.bf16.mxu0 0
      %174 = vmatmul.mubr.bf16.gmra.mrb[0].mxu0 %v139
      %v175 = vpop.f32.mrb[0].mxu0
      %v176 = vadd.f32 %v99, %v175
      %v177 = vpop.f32.mrb[0].mxu0
      %v178 = vpop.f32.mrb[0].mxu0
      %v179 = vadd.f32 %v99, %v178
      %v180 = vpop.f32.mrb[0].mxu0
      %181 = vdwg.mxu0
      %v182 = vld [vmem:[%s5] sm:$0xf]
      %v183 = vld [vmem:[%s5 + $0x4] sm:$0xf]
      %v184 = vld [vmem:[%s5 + $0x8] sm:$0xf]
      %v185 = vld [vmem:[%s5 + $0xc] sm:$0xf]
      %v186 = vld [vmem:[%s5 + $0x10] sm:$0xf]
      %v187 = vld [vmem:[%s5 + $0x14] sm:$0xf]
      %v188 = vld [vmem:[%s5 + $0x18] sm:$0xf]
      %v189 = vld [vmem:[%s5 + $0x1c] sm:$0xf]
      %v190 = vld [vmem:[%s5 + $0x20] sm:$0xf]
      %v191 = vld [vmem:[%s5 + $0x24] sm:$0xf]
      %v192 = vld [vmem:[%s5 + $0x28] sm:$0xf]
      %v193 = vld [vmem:[%s5 + $0x2c] sm:$0xf]
      %v194 = vld [vmem:[%s8] sm:$0x1]
      %v196 = vlaneseq
      %v197 = vshrl.u32 %v196, 7
      %v198 = vsub.s32 0, %v197
      %v199 = vrot.slane %v194, %v198
      %v213 = vunpack.c.l.b16 %v182
      %v214 = vunpack.c.l.b16 %v183
      %v215 = vunpack.c.l.b16 %v184
      %v216 = vunpack.c.l.b16 %v185
      %v217 = vunpack.c.l.b16 %v186
      %v218 = vunpack.c.l.b16 %v187
      %v219 = vunpack.c.l.b16 %v188
      %v220 = vunpack.c.l.b16 %v189
      %v221 = vunpack.c.l.b16 %v190
      %v222 = vunpack.c.l.b16 %v191
      %v223 = vunpack.c.l.b16 %v192
      %v224 = vunpack.c.l.b16 %v193
      %v225 = vpack.c.b16 %v214, %v213
      %v226 = vpack.c.b16 %v216, %v215
      %v227 = vpack.c.b16 %v218, %v217
      %v228 = vpack.c.b16 %v220, %v219
      %v229 = vpack.c.b16 %v222, %v221
      %v230 = vpack.c.b16 %v224, %v223
      %237 = vmatprep.subr.bf16.mxu0 0
      %238 = vmatpush1.bf16.msra.mxu0 %v225
      %239 = vmatprep.subr.bf16.mxu0 0
      %240 = vmatpush1.bf16.msra.mxu0 %v226
      %241 = vmatprep.subr.bf16.mxu0 0
      %242 = vmatpush1.bf16.msra.mxu0 %v227
      %243 = vmatprep.subr.bf16.mxu0 0
      %244 = vmatpush1.bf16.msra.mxu0 %v228
      %245 = vmatprep.subr.bf16.mxu0 0
      %246 = vmatpush1.bf16.msra.mxu0 %v229
      %247 = vmatprep.subr.bf16.mxu0 0
      %248 = vmatpush1.bf16.msra.mxu0 %v230
      %249 = vmatprep.subr.bf16.mxu0 0
      %250 = vmatpush1.bf16.msra.mxu0 0
      %251 = vmatprep.subr.bf16.mxu0 0
      %252 = vmatpush1.bf16.msra.mxu0 0
      %253 = vmatprep.subr.bf16.mxu0 0
      %254 = vmatpush1.bf16.msra.mxu0 0
      %255 = vmatprep.subr.bf16.mxu0 0
      %256 = vmatpush1.bf16.msra.mxu0 0
      %257 = vmatprep.subr.bf16.mxu0 0
      %258 = vmatpush1.bf16.msra.mxu0 0
      %259 = vmatprep.subr.bf16.mxu0 0
      %260 = vmatpush1.bf16.msra.mxu0 0
      %261 = vmatprep.subr.bf16.mxu0 0
      %262 = vmatpush1.bf16.msra.mxu0 0
      %263 = vmatprep.subr.bf16.mxu0 0
      %264 = vmatpush1.bf16.msra.mxu0 0
      %265 = vmatprep.subr.bf16.mxu0 0
      %266 = vmatpush1.bf16.msra.mxu0 0
      %267 = vmatprep.subr.bf16.mxu0 0
      %268 = vmatpush1.bf16.msra.mxu0 0
      %269 = vmatprep.mubr.bf16.mxu0 0
      %270 = vmatmul.mubr.bf16.gmra.mrb[0].mxu0 %v139
      %v271 = vpop.f32.mrb[0].mxu0
      %v272 = vadd.f32 %v199, %v271
      %v273 = vpop.f32.mrb[0].mxu0
      %v274 = vpop.f32.mrb[0].mxu0
      %v275 = vadd.f32 %v199, %v274
      %v276 = vpop.f32.mrb[0].mxu0
      %277 = vdwg.mxu0
      %v278 = vld [vmem:[%s3] sm:$0xf]
      %v279 = vld [vmem:[%s3 + $0x4] sm:$0xf]
      %v280 = vld [vmem:[%s3 + $0x8] sm:$0xf]
      %v281 = vld [vmem:[%s3 + $0xc] sm:$0xf]
      %v282 = vld [vmem:[%s3 + $0x10] sm:$0xf]
      %v283 = vld [vmem:[%s3 + $0x14] sm:$0xf]
      %v284 = vld [vmem:[%s3 + $0x18] sm:$0xf]
      %v285 = vld [vmem:[%s3 + $0x1c] sm:$0xf]
      %v286 = vld [vmem:[%s3 + $0x20] sm:$0xf]
      %v287 = vld [vmem:[%s3 + $0x24] sm:$0xf]
      %v288 = vld [vmem:[%s3 + $0x28] sm:$0xf]
      %v289 = vld [vmem:[%s3 + $0x2c] sm:$0xf]
      %v290 = vld [vmem:[%s6] sm:$0x1]
      %v292 = vlaneseq
      %v293 = vshrl.u32 %v292, 7
      %v294 = vsub.s32 0, %v293
      %v295 = vrot.slane %v290, %v294
      %v299 = vunpack.c.l.b16 %v80
      %v300 = vunpack.c.l.b16 %v81
      %v301 = vrot.slane %v299, 7
      %v302 = vrot.slane %v300, 6
      %vm303 = vcmask 1041409
      %v304 = vsel %vm303, %v302, %v301
      %v305 = vpack.c.b16 %v304, %v304
      %v318 = vunpack.c.l.b16 %v278
      %v319 = vunpack.c.l.b16 %v279
      %v320 = vunpack.c.l.b16 %v280
      %v321 = vunpack.c.l.b16 %v281
      %v322 = vunpack.c.l.b16 %v282
      %v323 = vunpack.c.l.b16 %v283
      %v324 = vunpack.c.l.b16 %v284
      %v325 = vunpack.c.l.b16 %v285
      %v326 = vunpack.c.l.b16 %v286
      %v327 = vunpack.c.l.b16 %v287
      %v328 = vunpack.c.l.b16 %v288
      %v329 = vunpack.c.l.b16 %v289
      %v330 = vpack.c.b16 %v319, %v318
      %v331 = vpack.c.b16 %v321, %v320
      %v332 = vpack.c.b16 %v323, %v322
      %v333 = vpack.c.b16 %v325, %v324
      %v334 = vpack.c.b16 %v327, %v326
      %v335 = vpack.c.b16 %v329, %v328
      %v343 = vsel %vm137, %v305, 0
      %345 = vmatprep.subr.bf16.mxu0 0
      %346 = vmatpush1.bf16.msra.mxu0 %v330
      %347 = vmatprep.subr.bf16.mxu0 0
      %348 = vmatpush1.bf16.msra.mxu0 %v331
      %349 = vmatprep.subr.bf16.mxu0 0
      %350 = vmatpush1.bf16.msra.mxu0 %v332
      %351 = vmatprep.subr.bf16.mxu0 0
      %352 = vmatpush1.bf16.msra.mxu0 %v333
      %353 = vmatprep.subr.bf16.mxu0 0
      %354 = vmatpush1.bf16.msra.mxu0 %v334
      %355 = vmatprep.subr.bf16.mxu0 0
      %356 = vmatpush1.bf16.msra.mxu0 %v335
      %357 = vmatprep.subr.bf16.mxu0 0
      %358 = vmatpush1.bf16.msra.mxu0 0
      %359 = vmatprep.subr.bf16.mxu0 0
      %360 = vmatpush1.bf16.msra.mxu0 0
      %361 = vmatprep.subr.bf16.mxu0 0
      %362 = vmatpush1.bf16.msra.mxu0 0
      %363 = vmatprep.subr.bf16.mxu0 0
      %364 = vmatpush1.bf16.msra.mxu0 0
      %365 = vmatprep.subr.bf16.mxu0 0
      %366 = vmatpush1.bf16.msra.mxu0 0
      %367 = vmatprep.subr.bf16.mxu0 0
      %368 = vmatpush1.bf16.msra.mxu0 0
      %369 = vmatprep.subr.bf16.mxu0 0
      %370 = vmatpush1.bf16.msra.mxu0 0
      %371 = vmatprep.subr.bf16.mxu0 0
      %372 = vmatpush1.bf16.msra.mxu0 0
      %373 = vmatprep.subr.bf16.mxu0 0
      %374 = vmatpush1.bf16.msra.mxu0 0
      %375 = vmatprep.subr.bf16.mxu0 0
      %376 = vmatpush1.bf16.msra.mxu0 0
      %377 = vmatprep.mubr.bf16.mxu0 0
      %378 = vmatmul.mubr.bf16.gmra.mrb[0].mxu0 %v343
      %v379 = vpop.f32.mrb[0].mxu0
      %v380 = vadd.f32 %v295, %v379
      %v381 = vpop.f32.mrb[0].mxu0
      %v382 = vpop.f32.mrb[0].mxu0
      %v383 = vpop.f32.mrb[0].mxu0
      %384 = vdwg.mxu0
      %v385 = vmul.f32 %v380, 0.10206208
      %v386 = vld [vmem:[%s1 + $0x7] sm:$0x1]
      %v387 = vld [vmem:[%s2] sm:$0x3]
      %v388 = vlaneseq
      %v389 = vshrl.u32 %v388, 7
      %v390 = vsub.s32 0, %v389
      %v391 = vrot.slane %v386, %v390
      %v392 = vadd.f32 %v391, %v387
      %v395 = vunpack.c.l.s4 1966171168
      %v396 = vunpack.c.0.s8 %v395
      %v397 = vlaneseq
      %v398 = vshrl.u32 %v397, 7
      %v399 = vsub.s32 %v396, %v398
      %v400 = vrot.slane %v385, %v399
      %v401 = vcombine.high %v400, %v400
      %v403 = vunpack.c.l.s4 1966171168
      %v404 = vunpack.c.0.s8 %v403
      %v405 = vlaneseq
      %v406 = vshrl.u32 %v405, 7
      %v407 = vsub.s32 %v404, %v406
      %v408 = vrot.slane %v400, %v407
      %v410 = vunpack.c.l.s4 1966171168
      %v411 = vunpack.c.0.s8 %v410
      %v412 = vlaneseq
      %v413 = vshrl.u32 %v412, 7
      %v414 = vsub.s32 %v411, %v413
      %v415 = vrot.slane %v401, %v414
      %v416 = vlaneseq
      %v417 = vshrl.u32 %v416, 7
      %v418 = vsub.s32 0, %v417
      %v419 = vrot.slane %v408, %v418
      %v420 = vlaneseq
      %v421 = vshrl.u32 %v420, 7
      %v422 = vsub.s32 0, %v421
      %v423 = vrot.slane %v415, %v422
      %v426 = vmul.f32 %v419, %v176
      %v427 = vmul.f32 %v423, %v179
      %v428 = vsel %vm137, %v426, 0.0
      %429 = vadd.xlane.f32.xlu0 %v428
      %v430 = vpop.xlane.xlu0 %429
      %v431 = vsel %vm137, %v427, 0.0
      %432 = vadd.xlane.f32.xlu0 %v431
      %v433 = vpop.xlane.xlu0 %432
      %v435 = vlaneseq
      %v436 = vshrl.u32 %v435, 7
      %v437 = vsub.s32 0, %v436
      %v438 = vrot.slane %v392, %v437
      %440 = vbcast.lane.b32.xlu0 %v438, 256
      %v441 = vpop.permute.xlu0 %440
      %v442 = vlaneseq
      %v443 = vshrl.u32 %v442, 7
      %v444 = vsub.s32 1, %v443
      %v445 = vrot.slane %v392, %v444
      %447 = vbcast.lane.b32.xlu0 %v445, 256
      %v448 = vpop.permute.xlu0 %447
      %v451 = vadd.f32 %v430, %v441
      %v452 = vadd.f32 %v433, %v448
      %455 = vset.pattern.permute.xlu0 0
      %456 = vperm.xlu0 %455, %v451
      %v457 = vpop.permute.xlu0 %456
      %458 = vset.pattern.permute.xlu0 0
      %459 = vperm.xlu0 %458, %v452
      %v460 = vpop.permute.xlu0 %459
      %v461 = vlaneseq
      %v462 = vand.u32 %v461, 127
      %v463 = vlaneseq
      %v464 = vshrl.u32 %v463, 7
      %v465 = vsub.s32 %v462, %v464
      %v466 = vrot.slane %v457, %v465
      %v467 = vlaneseq
      %v468 = vshrl.u32 %v467, 7
      %v469 = vsub.s32 %v462, %v468
      %v470 = vrot.slane %v460, %v469
      %v471 = vsel %vm303, %v470, %v466
      %vm473 = vcmask 58368
      %v474 = vsel %vm473, %v471, -inf
      %475 = vmax.xlane.f32.xlu0 %v474
      %v476 = vpop.xlane.xlu0 %475
      %v478 = vlaneseq
      %v479 = vshrl.u32 %v478, 7
      %v480 = vsub.s32 0, %v479
      %v481 = vrot.slane %v476, %v480
      %v482 = vlaneseq
      %v483 = vshrl.u32 %v482, 7
      %v484 = vsub.s32 1, %v483
      %v485 = vrot.slane %v476, %v484
      %v488 = vsub.f32 %v451, %v481
      %v489 = vsub.f32 %v452, %v485
      %v490 = vmul.f32 %v488, 1.442695
      %v491 = vpow.pop %v490
      %v492 = vmul.f32 %v489, 1.442695
      %v493 = vpow.pop %v492
      %496 = vset.pattern.permute.xlu0 0
      %497 = vperm.xlu0 %496, %v491
      %v498 = vpop.permute.xlu0 %497
      %499 = vset.pattern.permute.xlu0 0
      %500 = vperm.xlu0 %499, %v493
      %v501 = vpop.permute.xlu0 %500
      %v502 = vlaneseq
      %v503 = vshrl.u32 %v502, 7
      %v504 = vsub.s32 %v462, %v503
      %v505 = vrot.slane %v498, %v504
      %v506 = vlaneseq
      %v507 = vshrl.u32 %v506, 7
      %v508 = vsub.s32 %v462, %v507
      %v509 = vrot.slane %v501, %v508
      %v510 = vsel %vm303, %v509, %v505
      %v512 = vsel %vm473, %v510, 0.0
      %513 = vadd.xlane.f32.xlu0 %v512
      %v514 = vpop.xlane.xlu0 %513
      %v515 = vrcp.pop %v514
      %v517 = vlaneseq
      %v518 = vshrl.u32 %v517, 7
      %v519 = vsub.s32 0, %v518
      %v520 = vrot.slane %v515, %v519
      %v521 = vlaneseq
      %v522 = vshrl.u32 %v521, 7
      %v523 = vsub.s32 1, %v522
      %v524 = vrot.slane %v515, %v523
      %v527 = vmul.f32 %v491, %v520
      %v528 = vmul.f32 %v493, %v524
      %530 = vset.pattern.permute.xlu0 0
      %531 = vperm.xlu0 %530, %v527
      %v532 = vpop.permute.xlu0 %531
      %535 = vset.pattern.permute.xlu0 0
      %536 = vperm.xlu0 %535, %v528
      %v537 = vpop.permute.xlu0 %536
      %v539 = vmul.f32 %v532, %v272
      %v540 = vmul.f32 %v537, %v275
      %v541 = vsel %vm137, %v539, 0.0
      %v542 = vrot.slane %v541, 4
      %v543 = vadd.f32 %v541, %v542
      %v544 = vrot.slane %v543, 2
      %v545 = vadd.f32 %v543, %v544
      %v546 = vrot.slane %v545, 1
      %v547 = vadd.f32 %v545, %v546
      %v548 = vsel %vm137, %v540, 0.0
      %v549 = vrot.slane %v548, 4
      %v550 = vadd.f32 %v548, %v549
      %v551 = vrot.slane %v550, 2
      %v552 = vadd.f32 %v550, %v551
      %v553 = vrot.slane %v552, 1
      %v554 = vadd.f32 %v552, %v553
      %v555 = vpack.c.bf16 %v547, %v547
      %v556 = vpack.c.bf16 %v554, %v554
      %v557 = vld [vmem:[%s9] sm:$0xf]
      %v558 = vld [vmem:[%s9 + $0x4] sm:$0xf]
      %v559 = vld [vmem:[%s9 + $0x8] sm:$0xf]
      %v560 = vld [vmem:[%s9 + $0xc] sm:$0xf]
      %v561 = vld [vmem:[%s9 + $0x10] sm:$0xf]
      %v562 = vld [vmem:[%s9 + $0x14] sm:$0xf]
      %v563 = vld [vmem:[%s9 + $0x18] sm:$0xf]
      %v564 = vld [vmem:[%s9 + $0x1c] sm:$0xf]
      %v565 = vld [vmem:[%s9 + $0x20] sm:$0xf]
      %v566 = vld [vmem:[%s9 + $0x24] sm:$0xf]
      %v567 = vld [vmem:[%s9 + $0x28] sm:$0xf]
      %v568 = vld [vmem:[%s9 + $0x2c] sm:$0xf]
      %v569 = vld [vmem:[%s10] sm:$0x1]
      %v571 = vlaneseq
      %v572 = vshrl.u32 %v571, 7
      %v573 = vsub.s32 0, %v572
      %v574 = vrot.slane %v569, %v573
      %v578 = vunpack.c.l.b16 %v555
      %v579 = vunpack.c.l.b16 %v556
      %v580 = vsel %vm303, %v579, %v578
      %v581 = vpack.c.b16 %v580, %v580
      %v594 = vunpack.c.l.b16 %v557
      %v595 = vunpack.c.l.b16 %v558
      %v596 = vunpack.c.l.b16 %v559
      %v597 = vunpack.c.l.b16 %v560
      %v598 = vunpack.c.l.b16 %v561
      %v599 = vunpack.c.l.b16 %v562
      %v600 = vunpack.c.l.b16 %v563
      %v601 = vunpack.c.l.b16 %v564
      %v602 = vunpack.c.l.b16 %v565
      %v603 = vunpack.c.l.b16 %v566
      %v604 = vunpack.c.l.b16 %v567
      %v605 = vunpack.c.l.b16 %v568
      %v606 = vpack.c.b16 %v595, %v594
      %v607 = vpack.c.b16 %v597, %v596
      %v608 = vpack.c.b16 %v599, %v598
      %v609 = vpack.c.b16 %v601, %v600
      %v610 = vpack.c.b16 %v603, %v602
      %v611 = vpack.c.b16 %v605, %v604
      %v619 = vsel %vm137, %v581, 0
      %621 = vmatprep.subr.bf16.mxu0 0
      %622 = vmatpush1.bf16.msra.mxu0 %v606
      %623 = vmatprep.subr.bf16.mxu0 0
      %624 = vmatpush1.bf16.msra.mxu0 %v607
      %625 = vmatprep.subr.bf16.mxu0 0
      %626 = vmatpush1.bf16.msra.mxu0 %v608
      %627 = vmatprep.subr.bf16.mxu0 0
      %628 = vmatpush1.bf16.msra.mxu0 %v609
      %629 = vmatprep.subr.bf16.mxu0 0
      %630 = vmatpush1.bf16.msra.mxu0 %v610
      %631 = vmatprep.subr.bf16.mxu0 0
      %632 = vmatpush1.bf16.msra.mxu0 %v611
      %633 = vmatprep.subr.bf16.mxu0 0
      %634 = vmatpush1.bf16.msra.mxu0 0
      %635 = vmatprep.subr.bf16.mxu0 0
      %636 = vmatpush1.bf16.msra.mxu0 0
      %637 = vmatprep.subr.bf16.mxu0 0
      %638 = vmatpush1.bf16.msra.mxu0 0
      %639 = vmatprep.subr.bf16.mxu0 0
      %640 = vmatpush1.bf16.msra.mxu0 0
      %641 = vmatprep.subr.bf16.mxu0 0
      %642 = vmatpush1.bf16.msra.mxu0 0
      %643 = vmatprep.subr.bf16.mxu0 0
      %644 = vmatpush1.bf16.msra.mxu0 0
      %645 = vmatprep.subr.bf16.mxu0 0
      %646 = vmatpush1.bf16.msra.mxu0 0
      %647 = vmatprep.subr.bf16.mxu0 0
      %648 = vmatpush1.bf16.msra.mxu0 0
      %649 = vmatprep.subr.bf16.mxu0 0
      %650 = vmatpush1.bf16.msra.mxu0 0
      %651 = vmatprep.subr.bf16.mxu0 0
      %652 = vmatpush1.bf16.msra.mxu0 0
      %653 = vmatprep.mubr.bf16.mxu0 0
      %654 = vmatmul.mubr.bf16.gmra.mrb[0].mxu0 %v619
      %v655 = vpop.f32.mrb[0].mxu0
      %v656 = vadd.f32 %v574, %v655
      %v657 = vpop.f32.mrb[0].mxu0
      %v658 = vpop.f32.mrb[0].mxu0
      %v659 = vpop.f32.mrb[0].mxu0
      %660 = vdwg.mxu0
      %v662 = vrot.slane %v656, 1
      %v663 = vrot.slane %v656, 2
      %v666 = vadd.f32 %v77, %v662
      %v667 = vadd.f32 %v78, %v663
      %v670 = vrot.slane %v667, 7
      %vm673 = vcmask 785415
      %v674 = vsel %vm673, %v666, 0.0
      %675 = vadd.xlane.f32.xlu0 %v674
      %v676 = vpop.xlane.xlu0 %675
      %vm677 = vcmask 778240
      %v678 = vsel %vm677, %v670, 0.0
      %679 = vadd.xlane.f32.xlu0 %v678
      %v680 = vpop.xlane.xlu0 %679
      %v681 = vrcp.pop 96.0
      %v682 = vmul.f32 %v676, %v681
      %v683 = vmul.f32 %v680, %v681
      %v686 = vrot.slane %v683, 1
      %v689 = vsub.f32 %v666, %v682
      %v690 = vsub.f32 %v667, %v686
      %v691 = vmul.f32 %v689, %v689
      %v692 = vmul.f32 %v690, %v690
      %v695 = vrot.slane %v692, 7
      %v698 = vsel %vm673, %v691, 0.0
      %699 = vadd.xlane.f32.xlu0 %v698
      %v700 = vpop.xlane.xlu0 %699
      %v701 = vsel %vm677, %v695, 0.0
      %702 = vadd.xlane.f32.xlu0 %v701
      %v703 = vpop.xlane.xlu0 %702
      %v704 = vmul.f32 %v700, %v681
      %v705 = vmul.f32 %v703, %v681
      %v706 = vadd.f32 %v704, 1e-05
      %v707 = vadd.f32 %v705, 1e-05
      %v708 = vrsqrt.pop %v706
      %v709 = vrsqrt.pop %v707
      %v712 = vrot.slane %v709, 1
      %v715 = vmul.f32 %v689, %v708
      %v716 = vmul.f32 %v690, %v712
      %v717 = vld [vmem:[%s11] sm:$0x1]
      %v719 = vlaneseq
      %v720 = vshrl.u32 %v719, 7
      %v721 = vsub.s32 0, %v720
      %v722 = vrot.slane %v717, %v721
      %v724 = vmul.f32 %v715, %v722
      %v725 = vmul.f32 %v716, %v722
      %v726 = vld [vmem:[%s12] sm:$0x1]
      %v728 = vlaneseq
      %v729 = vshrl.u32 %v728, 7
      %v730 = vsub.s32 0, %v729
      %v731 = vrot.slane %v726, %v730
      %v733 = vadd.f32 %v724, %v731
      %v734 = vadd.f32 %v725, %v731
      %v735 = vpack.c.bf16 %v733, %v733
      %v736 = vpack.c.bf16 %v734, %v734
      %v737 = vld [vmem:[%s13] sm:$0xf]
      %v738 = vld [vmem:[%s13 + $0x4] sm:$0xf]
      %v739 = vld [vmem:[%s13 + $0x8] sm:$0xf]
      %v740 = vld [vmem:[%s13 + $0xc] sm:$0xf]
      %v741 = vld [vmem:[%s13 + $0x10] sm:$0xf]
      %v742 = vld [vmem:[%s13 + $0x14] sm:$0xf]
      %v743 = vld [vmem:[%s13 + $0x18] sm:$0xf]
      %v744 = vld [vmem:[%s13 + $0x1c] sm:$0xf]
      %v745 = vld [vmem:[%s13 + $0x20] sm:$0xf]
      %v746 = vld [vmem:[%s13 + $0x24] sm:$0xf]
      %v747 = vld [vmem:[%s13 + $0x28] sm:$0xf]
      %v748 = vld [vmem:[%s13 + $0x2c] sm:$0xf]
      %v749 = vld [vmem:[%s14] sm:$0x1]
      %v751 = vlaneseq
      %v752 = vshrl.u32 %v751, 7
      %v753 = vsub.s32 0, %v752
      %v754 = vrot.slane %v749, %v753
      %v758 = vunpack.c.l.b16 %v735
      %v759 = vunpack.c.l.b16 %v736
      %v760 = vrot.slane %v758, 7
      %v761 = vrot.slane %v759, 6
      %v762 = vsel %vm303, %v761, %v760
      %v763 = vpack.c.b16 %v762, %v762
      %v776 = vunpack.c.l.b16 %v737
      %v777 = vunpack.c.l.b16 %v738
      %v778 = vunpack.c.l.b16 %v739
      %v779 = vunpack.c.l.b16 %v740
      %v780 = vunpack.c.l.b16 %v741
      %v781 = vunpack.c.l.b16 %v742
      %v782 = vunpack.c.l.b16 %v743
      %v783 = vunpack.c.l.b16 %v744
      %v784 = vunpack.c.l.b16 %v745
      %v785 = vunpack.c.l.b16 %v746
      %v786 = vunpack.c.l.b16 %v747
      %v787 = vunpack.c.l.b16 %v748
      %v788 = vpack.c.b16 %v777, %v776
      %v789 = vpack.c.b16 %v779, %v778
      %v790 = vpack.c.b16 %v781, %v780
      %v791 = vpack.c.b16 %v783, %v782
      %v792 = vpack.c.b16 %v785, %v784
      %v793 = vpack.c.b16 %v787, %v786
      %v801 = vsel %vm137, %v763, 0
      %803 = vmatprep.subr.bf16.mxu0 0
      %804 = vmatpush1.bf16.msra.mxu0 %v788
      %805 = vmatprep.subr.bf16.mxu0 0
      %806 = vmatpush1.bf16.msra.mxu0 %v789
      %807 = vmatprep.subr.bf16.mxu0 0
      %808 = vmatpush1.bf16.msra.mxu0 %v790
      %809 = vmatprep.subr.bf16.mxu0 0
      %810 = vmatpush1.bf16.msra.mxu0 %v791
      %811 = vmatprep.subr.bf16.mxu0 0
      %812 = vmatpush1.bf16.msra.mxu0 %v792
      %813 = vmatprep.subr.bf16.mxu0 0
      %814 = vmatpush1.bf16.msra.mxu0 %v793
      %815 = vmatprep.subr.bf16.mxu0 0
      %816 = vmatpush1.bf16.msra.mxu0 0
      %817 = vmatprep.subr.bf16.mxu0 0
      %818 = vmatpush1.bf16.msra.mxu0 0
      %819 = vmatprep.subr.bf16.mxu0 0
      %820 = vmatpush1.bf16.msra.mxu0 0
      %821 = vmatprep.subr.bf16.mxu0 0
      %822 = vmatpush1.bf16.msra.mxu0 0
      %823 = vmatprep.subr.bf16.mxu0 0
      %824 = vmatpush1.bf16.msra.mxu0 0
      %825 = vmatprep.subr.bf16.mxu0 0
      %826 = vmatpush1.bf16.msra.mxu0 0
      %827 = vmatprep.subr.bf16.mxu0 0
      %828 = vmatpush1.bf16.msra.mxu0 0
      %829 = vmatprep.subr.bf16.mxu0 0
      %830 = vmatpush1.bf16.msra.mxu0 0
      %831 = vmatprep.subr.bf16.mxu0 0
      %832 = vmatpush1.bf16.msra.mxu0 0
      %833 = vmatprep.subr.bf16.mxu0 0
      %834 = vmatpush1.bf16.msra.mxu0 0
      %835 = vmatprep.mubr.bf16.mxu0 0
      %836 = vmatmul.mubr.bf16.gmra.mrb[0].mxu0 %v801
      %v837 = vpop.f32.mrb[0].mxu0
      %v838 = vadd.f32 %v754, %v837
      %v839 = vpop.f32.mrb[0].mxu0
      %v840 = vpop.f32.mrb[0].mxu0
      %v841 = vpop.f32.mrb[0].mxu0
      %842 = vdwg.mxu0
      %v843 = vmax.f32 %v838, 0.0
      %v844 = vpack.c.bf16 %v843, %v843
      %v845 = vld [vmem:[%s15] sm:$0xf]
      %v846 = vld [vmem:[%s15 + $0x4] sm:$0xf]
      %v847 = vld [vmem:[%s15 + $0x8] sm:$0xf]
      %v848 = vld [vmem:[%s15 + $0xc] sm:$0xf]
      %v849 = vld [vmem:[%s15 + $0x10] sm:$0xf]
      %v850 = vld [vmem:[%s15 + $0x14] sm:$0xf]
      %v851 = vld [vmem:[%s15 + $0x18] sm:$0xf]
      %v852 = vld [vmem:[%s15 + $0x1c] sm:$0xf]
      %v853 = vld [vmem:[%s15 + $0x20] sm:$0xf]
      %v854 = vld [vmem:[%s15 + $0x24] sm:$0xf]
      %v855 = vld [vmem:[%s15 + $0x28] sm:$0xf]
      %v856 = vld [vmem:[%s15 + $0x2c] sm:$0xf]
      %v857 = vld [vmem:[%s16] sm:$0x1]
      %v859 = vlaneseq
      %v860 = vshrl.u32 %v859, 7
      %v861 = vsub.s32 0, %v860
      %v862 = vrot.slane %v857, %v861
      %v876 = vunpack.c.l.b16 %v845
      %v877 = vunpack.c.l.b16 %v846
      %v878 = vunpack.c.l.b16 %v847
      %v879 = vunpack.c.l.b16 %v848
      %v880 = vunpack.c.l.b16 %v849
      %v881 = vunpack.c.l.b16 %v850
      %v882 = vunpack.c.l.b16 %v851
      %v883 = vunpack.c.l.b16 %v852
      %v884 = vunpack.c.l.b16 %v853
      %v885 = vunpack.c.l.b16 %v854
      %v886 = vunpack.c.l.b16 %v855
      %v887 = vunpack.c.l.b16 %v856
      %v888 = vpack.c.b16 %v877, %v876
      %v889 = vpack.c.b16 %v879, %v878
      %v890 = vpack.c.b16 %v881, %v880
      %v891 = vpack.c.b16 %v883, %v882
      %v892 = vpack.c.b16 %v885, %v884
      %v893 = vpack.c.b16 %v887, %v886
      %v901 = vsel %vm137, %v844, 0
      %903 = vmatprep.subr.bf16.mxu0 0
      %904 = vmatpush1.bf16.msra.mxu0 %v888
      %905 = vmatprep.subr.bf16.mxu0 0
      %906 = vmatpush1.bf16.msra.mxu0 %v889
      %907 = vmatprep.subr.bf16.mxu0 0
      %908 = vmatpush1.bf16.msra.mxu0 %v890
      %909 = vmatprep.subr.bf16.mxu0 0
      %910 = vmatpush1.bf16.msra.mxu0 %v891
      %911 = vmatprep.subr.bf16.mxu0 0
      %912 = vmatpush1.bf16.msra.mxu0 %v892
      %913 = vmatprep.subr.bf16.mxu0 0
      %914 = vmatpush1.bf16.msra.mxu0 %v893
      %915 = vmatprep.subr.bf16.mxu0 0
      %916 = vmatpush1.bf16.msra.mxu0 0
      %917 = vmatprep.subr.bf16.mxu0 0
      %918 = vmatpush1.bf16.msra.mxu0 0
      %919 = vmatprep.subr.bf16.mxu0 0
      %920 = vmatpush1.bf16.msra.mxu0 0
      %921 = vmatprep.subr.bf16.mxu0 0
      %922 = vmatpush1.bf16.msra.mxu0 0
      %923 = vmatprep.subr.bf16.mxu0 0
      %924 = vmatpush1.bf16.msra.mxu0 0
      %925 = vmatprep.subr.bf16.mxu0 0
      %926 = vmatpush1.bf16.msra.mxu0 0
      %927 = vmatprep.subr.bf16.mxu0 0
      %928 = vmatpush1.bf16.msra.mxu0 0
      %929 = vmatprep.subr.bf16.mxu0 0
      %930 = vmatpush1.bf16.msra.mxu0 0
      %931 = vmatprep.subr.bf16.mxu0 0
      %932 = vmatpush1.bf16.msra.mxu0 0
      %933 = vmatprep.subr.bf16.mxu0 0
      %934 = vmatpush1.bf16.msra.mxu0 0
      %935 = vmatprep.mubr.bf16.mxu0 0
      %936 = vmatmul.mubr.bf16.gmra.mrb[0].mxu0 %v901
      %v937 = vpop.f32.mrb[0].mxu0
      %v938 = vadd.f32 %v862, %v937
      %v939 = vpop.f32.mrb[0].mxu0
      %v940 = vpop.f32.mrb[0].mxu0
      %v941 = vpop.f32.mrb[0].mxu0
      %942 = vdwg.mxu0
      %v944 = vrot.slane %v938, 1
      %v945 = vrot.slane %v938, 2
      %v948 = vadd.f32 %v733, %v944
      %v949 = vadd.f32 %v734, %v945
      %v952 = vrot.slane %v949, 7
      %v955 = vsel %vm673, %v948, 0.0
      %956 = vadd.xlane.f32.xlu0 %v955
      %v957 = vpop.xlane.xlu0 %956
      %v958 = vsel %vm677, %v952, 0.0
      %959 = vadd.xlane.f32.xlu0 %v958
      %v960 = vpop.xlane.xlu0 %959
      %v961 = vmul.f32 %v957, %v681
      %v962 = vmul.f32 %v960, %v681
      %v965 = vrot.slane %v962, 1
      %v968 = vsub.f32 %v948, %v961
      %v969 = vsub.f32 %v949, %v965
      %v970 = vmul.f32 %v968, %v968
      %v971 = vmul.f32 %v969, %v969
      %v974 = vrot.slane %v971, 7
      %v977 = vsel %vm673, %v970, 0.0
      %978 = vadd.xlane.f32.xlu0 %v977
      %v979 = vpop.xlane.xlu0 %978
      %v980 = vsel %vm677, %v974, 0.0
      %981 = vadd.xlane.f32.xlu0 %v980
      %v982 = vpop.xlane.xlu0 %981
      %v983 = vmul.f32 %v979, %v681
      %v984 = vmul.f32 %v982, %v681
      %v985 = vadd.f32 %v983, 1e-05
      %v986 = vadd.f32 %v984, 1e-05
      %v987 = vrsqrt.pop %v985
      %v988 = vrsqrt.pop %v986
      %v991 = vrot.slane %v988, 1
      %v994 = vmul.f32 %v968, %v987
      %v995 = vmul.f32 %v969, %v991
      %v996 = vld [vmem:[%s17] sm:$0x1]
      %v998 = vlaneseq
      %v999 = vshrl.u32 %v998, 7
      %v1000 = vsub.s32 0, %v999
      %v1001 = vrot.slane %v996, %v1000
      %v1003 = vmul.f32 %v994, %v1001
      %v1004 = vmul.f32 %v995, %v1001
      %v1005 = vld [vmem:[%s18] sm:$0x1]
      %v1007 = vlaneseq
      %v1008 = vshrl.u32 %v1007, 7
      %v1009 = vsub.s32 0, %v1008
      %v1010 = vrot.slane %v1005, %v1009
      %v1012 = vadd.f32 %v1003, %v1010
      %v1013 = vadd.f32 %v1004, %v1010
      %v1014 = vpack.c.bf16 %v1012, %v1012
      %v1015 = vpack.c.bf16 %v1013, %v1013
      %v1016 = vld [vmem:[%s19] sm:$0xf]
      %v1017 = vld [vmem:[%s19 + $0x4] sm:$0xf]
      %v1018 = vld [vmem:[%s19 + $0x8] sm:$0xf]
      %v1019 = vld [vmem:[%s19 + $0xc] sm:$0xf]
      %v1020 = vld [vmem:[%s19 + $0x10] sm:$0xf]
      %v1021 = vld [vmem:[%s19 + $0x14] sm:$0xf]
      %v1022 = vld [vmem:[%s19 + $0x18] sm:$0xf]
      %v1023 = vld [vmem:[%s19 + $0x1c] sm:$0xf]
      %v1024 = vld [vmem:[%s19 + $0x20] sm:$0xf]
      %v1025 = vld [vmem:[%s19 + $0x24] sm:$0xf]
      %v1026 = vld [vmem:[%s19 + $0x28] sm:$0xf]
      %v1027 = vld [vmem:[%s19 + $0x2c] sm:$0xf]
      %v1028 = vld [vmem:[%s20] sm:$0x1]
      %v1030 = vlaneseq
      %v1031 = vshrl.u32 %v1030, 7
      %v1032 = vsub.s32 0, %v1031
      %v1033 = vrot.slane %v1028, %v1032
      %v1037 = vunpack.c.l.b16 %v1014
      %v1038 = vunpack.c.l.b16 %v1015
      %v1039 = vrot.slane %v1037, 7
      %v1040 = vrot.slane %v1038, 6
      %v1041 = vsel %vm303, %v1040, %v1039
      %v1042 = vpack.c.b16 %v1041, %v1041
      %v1055 = vunpack.c.l.b16 %v1016
      %v1056 = vunpack.c.l.b16 %v1017
      %v1057 = vunpack.c.l.b16 %v1018
      %v1058 = vunpack.c.l.b16 %v1019
      %v1059 = vunpack.c.l.b16 %v1020
      %v1060 = vunpack.c.l.b16 %v1021
      %v1061 = vunpack.c.l.b16 %v1022
      %v1062 = vunpack.c.l.b16 %v1023
      %v1063 = vunpack.c.l.b16 %v1024
      %v1064 = vunpack.c.l.b16 %v1025
      %v1065 = vunpack.c.l.b16 %v1026
      %v1066 = vunpack.c.l.b16 %v1027
      %v1067 = vpack.c.b16 %v1056, %v1055
      %v1068 = vpack.c.b16 %v1058, %v1057
      %v1069 = vpack.c.b16 %v1060, %v1059
      %v1070 = vpack.c.b16 %v1062, %v1061
      %v1071 = vpack.c.b16 %v1064, %v1063
      %v1072 = vpack.c.b16 %v1066, %v1065
      %v1080 = vsel %vm137, %v1042, 0
      %1082 = vmatprep.subr.bf16.mxu0 0
      %1083 = vmatpush1.bf16.msra.mxu0 %v1067
      %1084 = vmatprep.subr.bf16.mxu0 0
      %1085 = vmatpush1.bf16.msra.mxu0 %v1068
      %1086 = vmatprep.subr.bf16.mxu0 0
      %1087 = vmatpush1.bf16.msra.mxu0 %v1069
      %1088 = vmatprep.subr.bf16.mxu0 0
      %1089 = vmatpush1.bf16.msra.mxu0 %v1070
      %1090 = vmatprep.subr.bf16.mxu0 0
      %1091 = vmatpush1.bf16.msra.mxu0 %v1071
      %1092 = vmatprep.subr.bf16.mxu0 0
      %1093 = vmatpush1.bf16.msra.mxu0 %v1072
      %1094 = vmatprep.subr.bf16.mxu0 0
      %1095 = vmatpush1.bf16.msra.mxu0 0
      %1096 = vmatprep.subr.bf16.mxu0 0
      %1097 = vmatpush1.bf16.msra.mxu0 0
      %1098 = vmatprep.subr.bf16.mxu0 0
      %1099 = vmatpush1.bf16.msra.mxu0 0
      %1100 = vmatprep.subr.bf16.mxu0 0
      %1101 = vmatpush1.bf16.msra.mxu0 0
      %1102 = vmatprep.subr.bf16.mxu0 0
      %1103 = vmatpush1.bf16.msra.mxu0 0
      %1104 = vmatprep.subr.bf16.mxu0 0
      %1105 = vmatpush1.bf16.msra.mxu0 0
      %1106 = vmatprep.subr.bf16.mxu0 0
      %1107 = vmatpush1.bf16.msra.mxu0 0
      %1108 = vmatprep.subr.bf16.mxu0 0
      %1109 = vmatpush1.bf16.msra.mxu0 0
      %1110 = vmatprep.subr.bf16.mxu0 0
      %1111 = vmatpush1.bf16.msra.mxu0 0
      %1112 = vmatprep.subr.bf16.mxu0 0
      %1113 = vmatpush1.bf16.msra.mxu0 0
      %1114 = vmatprep.mubr.bf16.mxu0 0
      %1115 = vmatmul.mubr.bf16.gmra.mrb[0].mxu0 %v1080
      %v1116 = vpop.f32.mrb[0].mxu0
      %v1117 = vadd.f32 %v1033, %v1116
      %v1118 = vpop.f32.mrb[0].mxu0
      %v1119 = vpop.f32.mrb[0].mxu0
      %v1120 = vpop.f32.mrb[0].mxu0
      %1121 = vdwg.mxu0
      %v1122 = vpack.c.bf16 %v1117, %v1117
      %vm1123 = vcmask 253952
      %1124 = vst.msk [vmem:[#allocation2] sm:$0x1] %vm1123, %v1122
    $region93: #{multi_sequence_forward.3} parent=1 // pred_fallthru
      _
    %v1125 = vld [vmem:[#allocation2] sm:$0x1]
    %v1126 = vld [vmem:[%s21] sm:$0xf]
    %v1127 = vld [vmem:[%s21 + $0x4] sm:$0xf]
    %v1128 = vld [vmem:[%s21 + $0x8] sm:$0xf]
    %v1129 = vld [vmem:[%s21 + $0xc] sm:$0xf]
    %v1130 = vld [vmem:[%s21 + $0x10] sm:$0xf]
    %v1131 = vld [vmem:[%s21 + $0x14] sm:$0xf]
    %v1132 = vld [vmem:[%s21 + $0x18] sm:$0xf]
    %v1133 = vld [vmem:[%s21 + $0x1c] sm:$0xf]
    %v1142 = vunpack.c.l.b16 %v1126
    %v1143 = vunpack.c.l.b16 %v1127
    %v1144 = vunpack.c.l.b16 %v1128
    %v1145 = vunpack.c.l.b16 %v1129
    %v1146 = vunpack.c.l.b16 %v1130
    %v1147 = vunpack.c.l.b16 %v1131
    %v1148 = vunpack.c.l.b16 %v1132
    %v1149 = vunpack.c.l.b16 %v1133
    %v1150 = vpack.c.b16 %v1143, %v1142
    %v1151 = vpack.c.b16 %v1145, %v1144
    %v1152 = vpack.c.b16 %v1147, %v1146
    %v1153 = vpack.c.b16 %v1149, %v1148
    %vm1154 = vcmask 261120
    %v1156 = vsel %vm1154, %v1125, 0
    %v1159 = vsel %vm1154, %v1150, 0
    %v1162 = vsel %vm1154, %v1151, 0
    %v1165 = vsel %vm1154, %v1152, 0
    %v1168 = vsel %vm1154, %v1153, 0
    %1170 = vmatprep.subr.bf16.mxu0 0
    %1171 = vmatpush1.bf16.xpose.msra.mxu0 %v1159
    %1172 = vmatprep.subr.bf16.mxu0 0
    %1173 = vmatpush1.bf16.xpose.msra.mxu0 %v1162
    %1174 = vmatprep.subr.bf16.mxu0 0
    %1175 = vmatpush1.bf16.xpose.msra.mxu0 %v1165
    %1176 = vmatprep.subr.bf16.mxu0 0
    %1177 = vmatpush1.bf16.xpose.msra.mxu0 %v1168
    %1178 = vmatprep.subr.bf16.mxu0 0
    %1179 = vmatpush1.bf16.xpose.msra.mxu0 0
    %1180 = vmatprep.subr.bf16.mxu0 0
    %1181 = vmatpush1.bf16.xpose.msra.mxu0 0
    %1182 = vmatprep.subr.bf16.mxu0 0
    %1183 = vmatpush1.bf16.xpose.msra.mxu0 0
    %1184 = vmatprep.subr.bf16.mxu0 0
    %1185 = vmatpush1.bf16.xpose.msra.mxu0 0
    %1186 = vmatprep.subr.bf16.mxu0 0
    %1187 = vmatpush1.bf16.xpose.msra.mxu0 0
    %1188 = vmatprep.subr.bf16.mxu0 0
    %1189 = vmatpush1.bf16.xpose.msra.mxu0 0
    %1190 = vmatprep.subr.bf16.mxu0 0
    %1191 = vmatpush1.bf16.xpose.msra.mxu0 0
    %1192 = vmatprep.subr.bf16.mxu0 0
    %1193 = vmatpush1.bf16.xpose.msra.mxu0 0
    %1194 = vmatprep.subr.bf16.mxu0 0
    %1195 = vmatpush1.bf16.xpose.msra.mxu0 0
    %1196 = vmatprep.subr.bf16.mxu0 0
    %1197 = vmatpush1.bf16.xpose.msra.mxu0 0
    %1198 = vmatprep.subr.bf16.mxu0 0
    %1199 = vmatpush1.bf16.xpose.msra.mxu0 0
    %1200 = vmatprep.subr.bf16.mxu0 0
    %1201 = vmatpush1.bf16.xpose.msra.mxu0 0
    %1202 = vmatprep.mubr.bf16.mxu0 0
    %1203 = vmatmul.mubr.bf16.gmra.mrb[0].mxu0 %v1156
    %v1204 = vpop.f32.mrb[0].mxu0
    %v1205 = vadd.f32 0.0, %v1204
    %v1206 = vpop.f32.mrb[0].mxu0
    %v1207 = vpop.f32.mrb[0].mxu0
    %v1208 = vpop.f32.mrb[0].mxu0
    %1209 = vdwg.mxu0
    %vm1210 = vcmask 517120
    %1211 = vst.msk [vmem:[#allocation3] sm:$0x3] %vm1210, %v1205
    // Predicated region
    $region94: #{multi_sequence_forward.3} parent=1 // pred_check
      _
    $region95: #{multi_sequence_forward.3} parent=1 // pred_check_branch
      %1213 = sbr.rel (0) target = $region97
    $region96: #{multi_sequence_forward.3} parent=1 // pred_region
      %s1215 = ssub.s32 32, 32
      %1216 = vsyncadd [#allocation4], %s1215
      %s1218 = sshll.u32 [#allocation3], 4
      %s1219 = int_to_ptr.vmem [resolvable:$true] %s1218
      %1221 = dma.vmem_to_hbm [thread:$0]  %s1219, 32, %s22, [#allocation4]
    $region97: #{multi_sequence_forward.3} parent=1 // pred_fallthru
      _
    // Predicated region
    $region98: #{multi_sequence_forward.3} parent=1 // pred_check
      _
    $region99: #{multi_sequence_forward.3} parent=1 // pred_check_branch
      %1223 = sbr.rel (0) target = $region101
    $region100: #{multi_sequence_forward.3} parent=1 // pred_region
      %1224 = dma.done [#allocation4], 32
    $region101: #{multi_sequence_forward.3} parent=1 // pred_fallthru
      _
    %1225 = vsyncpa [#allocation4], 1

</llo_original>
